<compile_context>
chip_gen: v6e
topology: v6e:2x2x1
jax: 0.10.0
libtpu: 0.0.40
codegen_flags: <defaults>
</compile_context>

<pallas_src>
import functools
import math

import jax
import jax.numpy as jnp
from jax.experimental import pallas as pl
from jax.experimental.pallas import tpu as pltpu

BIGNET_DIM = 128          # hidden dim (lane-axis friendly, small test size)
LORA_DIM = 32
LORA_ALPHA = 0.0937
GROUP_SIZE = 16           # 4-bit quantization group size along in_features
LN_EPS = 1e-5
N_BLOCKS = 6
LAYERS_PER_BLOCK = 3
N_LN = 5                  # LayerNorms interleave blocks 0..4


# ----------------------------------------------------------------------------
# Fused Pallas kernel: 6 blocks (3 linears + ReLUs + residual) + 5 LayerNorms
# ----------------------------------------------------------------------------
def qlora_bignet_fused_kernel(x_ref, w_ref, b_ref, g_ref, beta_ref, o_ref, *, d):
    """x_ref: (TN, D) fp32 activations.
    w_ref: (18, D, D) bf16 effective weights (base + alpha*lora_a@lora_b), (in,out).
    b_ref: (18, 1, D) fp32 biases.
    g_ref/beta_ref: (5, 1, D) fp32 LayerNorm affine params.
    All layer indices are static Python ints -> fully unrolled, static slices.
    """
    inv_d = 1.0 / d
    h = x_ref[...]                                   # fp32 (TN, D)
    for blk in range(N_BLOCKS):
        x0 = h
        for layer in range(LAYERS_PER_BLOCK):
            li = blk * LAYERS_PER_BLOCK + layer
            # bf16 operands feed the MXU; accumulate in fp32.
            z = jnp.dot(h.astype(jnp.bfloat16), w_ref[li],
                        preferred_element_type=jnp.float32) + b_ref[li]
            h = jnp.maximum(z, 0.0) if layer < LAYERS_PER_BLOCK - 1 else z
        h = h + x0                                   # residual (fp32)
        if blk < N_LN:
            # Fused LayerNorm epilogue: one-pass sum / sum-of-squares.
            s1 = jnp.sum(h, axis=-1, keepdims=True)
            s2 = jnp.sum(h * h, axis=-1, keepdims=True)
            mu = s1 * inv_d
            var = s2 * inv_d - mu * mu
            inv = jax.lax.rsqrt(var + LN_EPS)
            h = (h - mu) * inv * g_ref[blk] + beta_ref[blk]
    o_ref[...] = h.astype(o_ref.dtype)


def qlora_bignet_forward(x, w_eff, bias, ln_gamma, ln_beta, *, tn=128):
    """Single pallas_call for the whole forward. Grid tiles only the rows."""
    n, d = x.shape
    tn = min(tn, n)
    nl = w_eff.shape[0]
    grid = (pl.cdiv(n, tn),)
    kern = functools.partial(qlora_bignet_fused_kernel, d=d)
    return pl.pallas_call(
        kern,
        out_shape=jax.ShapeDtypeStruct((n, d), jnp.float32),
        grid_spec=pltpu.PrefetchScalarGridSpec(
            num_scalar_prefetch=0,
            grid=grid,
            in_specs=[
                pl.BlockSpec((tn, d), lambda i: (i, 0)),          # activations
                pl.BlockSpec((nl, d, d), lambda i: (0, 0, 0)),    # bf16 weights
                pl.BlockSpec((nl, 1, d), lambda i: (0, 0, 0)),    # biases
                pl.BlockSpec((N_LN, 1, d), lambda i: (0, 0, 0)),  # LN gamma
                pl.BlockSpec((N_LN, 1, d), lambda i: (0, 0, 0)),  # LN beta
            ],
            out_specs=pl.BlockSpec((tn, d), lambda i: (i, 0)),
        ),
        compiler_params=pltpu.CompilerParams(
            dimension_semantics=("parallel",),        # rows split across TCs (v7x)
            vmem_limit_bytes=32 * 1024 * 1024,        # explicit; tiny usage anyway
        ),
    )(x, w_eff, bias, ln_gamma, ln_beta)


# ----------------------------------------------------------------------------
# Parameter construction (deterministic, synthetic) + glue-side preprocessing
# ----------------------------------------------------------------------------
def quant_dequant_4bit(w, group_size=GROUP_SIZE):
    """Simulate Linear4Bit: group-wise symmetric 4-bit absmax quant + dequant.
    Done once in glue — parameter preprocessing, not the hot path."""
    out_f, in_f = w.shape
    wg = w.reshape(out_f, in_f // group_size, group_size)
    absmax = jnp.max(jnp.abs(wg), axis=-1, keepdims=True)
    scale = absmax / 7.0
    safe = jnp.where(scale == 0, 1.0, scale)
    q = jnp.clip(jnp.round(wg / safe), -8, 7)
    scale16 = scale.astype(jnp.float16).astype(jnp.float32)
    return (q * scale16).reshape(out_f, in_f).astype(jnp.float32)


def kaiming_uniform(key, shape, fan_in, a=math.sqrt(5)):
    gain = math.sqrt(2.0 / (1.0 + a * a))
    bound = gain * math.sqrt(3.0 / fan_in)
    return jax.random.uniform(key, shape, jnp.float32, -bound, bound)


def init_lora_linear(key, d, r):
    """Returns (w_dequant (in,out), bias (1,out), lora_a (in,r), lora_b (r,out))."""
    kw, kb, ka, kbb = jax.random.split(key, 4)
    w = kaiming_uniform(kw, (d, d), fan_in=d)       # (out, in), torch-Linear init
    w = quant_dequant_4bit(w)                       # frozen 4-bit base weight
    bound = 1.0 / math.sqrt(d)
    bias = jax.random.uniform(kb, (1, d), jnp.float32, -bound, bound)
    lora_a = kaiming_uniform(ka, (r, d), fan_in=d)  # (r, in)
    # Torch zero-inits lora_b, which makes the LoRA branch identically zero; use
    # small random values (a "trained adapter" state) so the test actually
    # exercises the LoRA contribution.  Forward-pass formula is unchanged.
    lora_b = 0.02 * jax.random.normal(kbb, (d, r), jnp.float32)  # (out, r)
    return w.T, bias, lora_a.T, lora_b.T            # (in,out),(1,out),(in,r),(r,out)


def init_block(key, d, r):
    keys = jax.random.split(key, LAYERS_PER_BLOCK)
    ws, bs, las, lbs = [], [], [], []
    for k in keys:
        w, b, la, lb = init_lora_linear(k, d, r)
        ws.append(w); bs.append(b); las.append(la); lbs.append(lb)
    return jnp.stack(ws), jnp.stack(bs), jnp.stack(las), jnp.stack(lbs)


def init_model(key, d=BIGNET_DIM, r=LORA_DIM):
    keys = jax.random.split(key, N_BLOCKS)
    blocks = [init_block(k, d, r) for k in keys]
    lns = [(jnp.ones((1, d), jnp.float32), jnp.zeros((1, d), jnp.float32))
           for _ in range(N_LN)]
    return blocks, lns


def fold_and_pack(blocks, lns):
    """Glue-side: fold LoRA into the base weight (forward/inference only),
    cast matmul weights to bf16, and pack everything for the fused kernel."""
    ws, bs = [], []
    for (w, b, la, lb) in blocks:
        # (in,out) layout:  x @ (W + alpha * A @ B)  ==  x@W + alpha*(x@A)@B
        w_eff = w + LORA_ALPHA * jnp.einsum("lir,lro->lio", la, lb)
        ws.append(w_eff)
        bs.append(b)
    w_all = jnp.concatenate(ws, axis=0).astype(jnp.bfloat16)   # (18, D, D) bf16
    b_all = jnp.concatenate(bs, axis=0)                        # (18, 1, D) fp32
    g_all = jnp.stack([g for g, _ in lns], axis=0)             # (5, 1, D) fp32
    beta_all = jnp.stack([bt for _, bt in lns], axis=0)        # (5, 1, D) fp32
    return w_all, b_all, g_all, beta_all


# ----------------------------------------------------------------------------
# Pure-JAX references
# ----------------------------------------------------------------------------
def reference_fp32(x, blocks, lns):
    """Full-fp32, un-folded (base + alpha * lora) reference, as in the module."""
    def ln(x, g, bt):
        mu = jnp.mean(x, axis=-1, keepdims=True)
        var = jnp.mean((x - mu) ** 2, axis=-1, keepdims=True)
        return (x - mu) * jax.lax.rsqrt(var + LN_EPS) * g + bt

    for i, (w, b, la, lb) in enumerate(blocks):
        h = x
        for l in range(LAYERS_PER_BLOCK):
            base = h @ w[l] + b[l]
            lora = (h @ la[l]) @ lb[l]
            h = base + LORA_ALPHA * lora
            if l < LAYERS_PER_BLOCK - 1:
                h = jnp.maximum(h, 0.0)
        x = h + x
        if i < len(lns):
            x = ln(x, *lns[i])
    return x


def reference_mixed(x, w_all, b_all, g_all, beta_all):
    """Mimics the kernel numerics: folded bf16 weights, bf16 matmul inputs,
    fp32 accumulation / bias / residual / LayerNorm."""
    h = x
    for blk in range(N_BLOCKS):
        x0 = h
        for l in range(LAYERS_PER_BLOCK):
            li = blk * LAYERS_PER_BLOCK + l
            z = jnp.dot(h.astype(jnp.bfloat16), w_all[li],
                        preferred_element_type=jnp.float32) + b_all[li]
            h = jnp.maximum(z, 0.0) if l < LAYERS_PER_BLOCK - 1 else z
        h = h + x0
        if blk < N_LN:
            mu = jnp.mean(h, axis=-1, keepdims=True)
            var = jnp.mean((h - mu) ** 2, axis=-1, keepdims=True)
            h = (h - mu) * jax.lax.rsqrt(var + LN_EPS) * g_all[blk] + beta_all[blk]
    return h


# ----------------------------------------------------------------------------
if __name__ == "__main__":
    key = jax.random.PRNGKey(0)
    kx, kp = jax.random.split(key)

    N = 256                                   # 2 row tiles of 128 -> 2 parallel grid steps
    x = jax.random.normal(kx, (N, BIGNET_DIM), jnp.float32)

    blocks, lns = init_model(kp)
    w_all, b_all, g_all, beta_all = fold_and_pack(blocks, lns)

    fwd = jax.jit(qlora_bignet_forward)
    out = jax.block_until_ready(fwd(x, w_all, b_all, g_all, beta_all))

    assert out.shape == (N, BIGNET_DIM) and out.dtype == jnp.float32

    # Tight check vs a reference that mimics the kernel's mixed precision.
    ref_mixed = reference_mixed(x, w_all, b_all, g_all, beta_all)
    assert jnp.allclose(out, ref_mixed, atol=2e-3, rtol=2e-3), \
        "mismatch vs bf16-matmul reference"

    # Loose check vs the full-fp32 un-folded reference (bounds bf16/fold noise).
    ref_fp32 = reference_fp32(x, blocks, lns)
    assert jnp.allclose(out, ref_fp32, atol=1e-1, rtol=1e-1), \
        "mismatch vs fp32 reference beyond expected bf16 noise"

    print("KERNEL_OK")
</pallas_src>

<mosaic_0001>
module attributes {stable_mosaic.version = 11 : i64} {
  func.func @qlora_bignet_fused_kernel(%arg0: i32, %arg1: memref<128x128xf32, #tpu.memory_space<vmem>>, %arg2: memref<18x128x128xbf16, #tpu.memory_space<vmem>>, %arg3: memref<18x1x128xf32, #tpu.memory_space<vmem>>, %arg4: memref<5x1x128xf32, #tpu.memory_space<vmem>>, %arg5: memref<5x1x128xf32, #tpu.memory_space<vmem>>, %arg6: memref<128x128xf32, #tpu.memory_space<vmem>>) attributes {dimension_semantics = [#tpu.dimension_semantics<parallel>], iteration_bounds = array<i64: 2>, scalar_prefetch = 0 : i64, scratch_operands = 0 : i64, tpu.core_type = #tpu.core_type<tc>, window_params = [{transform_indices = @transform_0, window_bounds = array<i64: 128, 128>}, {pipeline_mode = #tpu.pipeline_mode<synchronous>, transform_indices = @transform_1, window_bounds = array<i64: 18, 128, 128>}, {pipeline_mode = #tpu.pipeline_mode<synchronous>, transform_indices = @transform_2, window_bounds = array<i64: 18, 1, 128>}, {pipeline_mode = #tpu.pipeline_mode<synchronous>, transform_indices = @transform_3, window_bounds = array<i64: 5, 1, 128>}, {pipeline_mode = #tpu.pipeline_mode<synchronous>, transform_indices = @transform_4, window_bounds = array<i64: 5, 1, 128>}, {transform_indices = @transform_5, window_bounds = array<i64: 128, 128>}]} {
    %c0 = arith.constant 0 : index
    %c0_0 = arith.constant 0 : index
    %0 = vector.load %arg1[%c0, %c0_0] : memref<128x128xf32, #tpu.memory_space<vmem>>, vector<128x128xf32>
    %1 = arith.truncf %0 : vector<128x128xf32> to vector<128x128xbf16>
    %c0_1 = arith.constant 0 : index
    %c0_2 = arith.constant 0 : index
    %c0_3 = arith.constant 0 : index
    %2 = vector.load %arg2[%c0_1, %c0_2, %c0_3] : memref<18x128x128xbf16, #tpu.memory_space<vmem>>, vector<1x128x128xbf16>
    %3 = vector.shape_cast %2 : vector<1x128x128xbf16> to vector<128x128xbf16>
    %cst = arith.constant dense<0.000000e+00> : vector<128x128xf32>
    %4 = tpu.matmul %1, %3, %cst {dimension_numbers = #tpu.dot_dimension_numbers<[1], [0], [0], [1], [0, 0, 1, 1], [], []>} : vector<128x128xbf16>, vector<128x128xbf16>, vector<128x128xf32> -> vector<128x128xf32>
    %c0_4 = arith.constant 0 : index
    %c0_5 = arith.constant 0 : index
    %c0_6 = arith.constant 0 : index
    %5 = vector.load %arg3[%c0_4, %c0_5, %c0_6] : memref<18x1x128xf32, #tpu.memory_space<vmem>>, vector<1x1x128xf32>
    %6 = vector.shape_cast %5 : vector<1x1x128xf32> to vector<1x128xf32>
    %7 = vector.broadcast %6 : vector<1x128xf32> to vector<128x128xf32>
    %8 = arith.addf %4, %7 : vector<128x128xf32>
    %cst_7 = arith.constant 0.000000e+00 : f32
    %9 = vector.broadcast %cst_7 : f32 to vector<128x128xf32>
    %10 = arith.maximumf %8, %9 : vector<128x128xf32>
    %11 = arith.truncf %10 : vector<128x128xf32> to vector<128x128xbf16>
    %c1 = arith.constant 1 : index
    %c0_8 = arith.constant 0 : index
    %c0_9 = arith.constant 0 : index
    %12 = vector.load %arg2[%c1, %c0_8, %c0_9] : memref<18x128x128xbf16, #tpu.memory_space<vmem>>, vector<1x128x128xbf16>
    %13 = vector.shape_cast %12 : vector<1x128x128xbf16> to vector<128x128xbf16>
    %cst_10 = arith.constant dense<0.000000e+00> : vector<128x128xf32>
    %14 = tpu.matmul %11, %13, %cst_10 {dimension_numbers = #tpu.dot_dimension_numbers<[1], [0], [0], [1], [0, 0, 1, 1], [], []>} : vector<128x128xbf16>, vector<128x128xbf16>, vector<128x128xf32> -> vector<128x128xf32>
    %c1_11 = arith.constant 1 : index
    %c0_12 = arith.constant 0 : index
    %c0_13 = arith.constant 0 : index
    %15 = vector.load %arg3[%c1_11, %c0_12, %c0_13] : memref<18x1x128xf32, #tpu.memory_space<vmem>>, vector<1x1x128xf32>
    %16 = vector.shape_cast %15 : vector<1x1x128xf32> to vector<1x128xf32>
    %17 = vector.broadcast %16 : vector<1x128xf32> to vector<128x128xf32>
    %18 = arith.addf %14, %17 : vector<128x128xf32>
    %cst_14 = arith.constant 0.000000e+00 : f32
    %19 = vector.broadcast %cst_14 : f32 to vector<128x128xf32>
    %20 = arith.maximumf %18, %19 : vector<128x128xf32>
    %21 = arith.truncf %20 : vector<128x128xf32> to vector<128x128xbf16>
    %c2 = arith.constant 2 : index
    %c0_15 = arith.constant 0 : index
    %c0_16 = arith.constant 0 : index
    %22 = vector.load %arg2[%c2, %c0_15, %c0_16] : memref<18x128x128xbf16, #tpu.memory_space<vmem>>, vector<1x128x128xbf16>
    %23 = vector.shape_cast %22 : vector<1x128x128xbf16> to vector<128x128xbf16>
    %cst_17 = arith.constant dense<0.000000e+00> : vector<128x128xf32>
    %24 = tpu.matmul %21, %23, %cst_17 {dimension_numbers = #tpu.dot_dimension_numbers<[1], [0], [0], [1], [0, 0, 1, 1], [], []>} : vector<128x128xbf16>, vector<128x128xbf16>, vector<128x128xf32> -> vector<128x128xf32>
    %c2_18 = arith.constant 2 : index
    %c0_19 = arith.constant 0 : index
    %c0_20 = arith.constant 0 : index
    %25 = vector.load %arg3[%c2_18, %c0_19, %c0_20] : memref<18x1x128xf32, #tpu.memory_space<vmem>>, vector<1x1x128xf32>
    %26 = vector.shape_cast %25 : vector<1x1x128xf32> to vector<1x128xf32>
    %27 = vector.broadcast %26 : vector<1x128xf32> to vector<128x128xf32>
    %28 = arith.addf %24, %27 : vector<128x128xf32>
    %29 = arith.addf %28, %0 : vector<128x128xf32>
    %cst_21 = arith.constant dense<0.000000e+00> : vector<128xf32>
    %30 = vector.multi_reduction <add>, %29, %cst_21 [1] : vector<128x128xf32> to vector<128xf32>
    %31 = vector.shape_cast %30 : vector<128xf32> to vector<128x1xf32>
    %32 = arith.mulf %29, %29 : vector<128x128xf32>
    %cst_22 = arith.constant dense<0.000000e+00> : vector<128xf32>
    %33 = vector.multi_reduction <add>, %32, %cst_22 [1] : vector<128x128xf32> to vector<128xf32>
    %34 = vector.shape_cast %33 : vector<128xf32> to vector<128x1xf32>
    %cst_23 = arith.constant 7.812500e-03 : f32
    %35 = vector.broadcast %cst_23 : f32 to vector<128x1xf32>
    %36 = arith.mulf %31, %35 : vector<128x1xf32>
    %cst_24 = arith.constant 7.812500e-03 : f32
    %37 = vector.broadcast %cst_24 : f32 to vector<128x1xf32>
    %38 = arith.mulf %34, %37 : vector<128x1xf32>
    %39 = arith.mulf %36, %36 : vector<128x1xf32>
    %40 = arith.subf %38, %39 : vector<128x1xf32>
    %cst_25 = arith.constant 9.99999974E-6 : f32
    %41 = vector.broadcast %cst_25 : f32 to vector<128x1xf32>
    %42 = arith.addf %40, %41 : vector<128x1xf32>
    %43 = math.rsqrt %42 : vector<128x1xf32>
    %44 = vector.broadcast %36 : vector<128x1xf32> to vector<128x128xf32>
    %45 = arith.subf %29, %44 : vector<128x128xf32>
    %46 = vector.broadcast %43 : vector<128x1xf32> to vector<128x128xf32>
    %47 = arith.mulf %45, %46 : vector<128x128xf32>
    %c0_26 = arith.constant 0 : index
    %c0_27 = arith.constant 0 : index
    %c0_28 = arith.constant 0 : index
    %48 = vector.load %arg4[%c0_26, %c0_27, %c0_28] : memref<5x1x128xf32, #tpu.memory_space<vmem>>, vector<1x1x128xf32>
    %49 = vector.shape_cast %48 : vector<1x1x128xf32> to vector<1x128xf32>
    %50 = vector.broadcast %49 : vector<1x128xf32> to vector<128x128xf32>
    %51 = arith.mulf %47, %50 : vector<128x128xf32>
    %c0_29 = arith.constant 0 : index
    %c0_30 = arith.constant 0 : index
    %c0_31 = arith.constant 0 : index
    %52 = vector.load %arg5[%c0_29, %c0_30, %c0_31] : memref<5x1x128xf32, #tpu.memory_space<vmem>>, vector<1x1x128xf32>
    %53 = vector.shape_cast %52 : vector<1x1x128xf32> to vector<1x128xf32>
    %54 = vector.broadcast %53 : vector<1x128xf32> to vector<128x128xf32>
    %55 = arith.addf %51, %54 : vector<128x128xf32>
    %56 = arith.truncf %55 : vector<128x128xf32> to vector<128x128xbf16>
    %c3 = arith.constant 3 : index
    %c0_32 = arith.constant 0 : index
    %c0_33 = arith.constant 0 : index
    %57 = vector.load %arg2[%c3, %c0_32, %c0_33] : memref<18x128x128xbf16, #tpu.memory_space<vmem>>, vector<1x128x128xbf16>
    %58 = vector.shape_cast %57 : vector<1x128x128xbf16> to vector<128x128xbf16>
    %cst_34 = arith.constant dense<0.000000e+00> : vector<128x128xf32>
    %59 = tpu.matmul %56, %58, %cst_34 {dimension_numbers = #tpu.dot_dimension_numbers<[1], [0], [0], [1], [0, 0, 1, 1], [], []>} : vector<128x128xbf16>, vector<128x128xbf16>, vector<128x128xf32> -> vector<128x128xf32>
    %c3_35 = arith.constant 3 : index
    %c0_36 = arith.constant 0 : index
    %c0_37 = arith.constant 0 : index
    %60 = vector.load %arg3[%c3_35, %c0_36, %c0_37] : memref<18x1x128xf32, #tpu.memory_space<vmem>>, vector<1x1x128xf32>
    %61 = vector.shape_cast %60 : vector<1x1x128xf32> to vector<1x128xf32>
    %62 = vector.broadcast %61 : vector<1x128xf32> to vector<128x128xf32>
    %63 = arith.addf %59, %62 : vector<128x128xf32>
    %cst_38 = arith.constant 0.000000e+00 : f32
    %64 = vector.broadcast %cst_38 : f32 to vector<128x128xf32>
    %65 = arith.maximumf %63, %64 : vector<128x128xf32>
    %66 = arith.truncf %65 : vector<128x128xf32> to vector<128x128xbf16>
    %c4 = arith.constant 4 : index
    %c0_39 = arith.constant 0 : index
    %c0_40 = arith.constant 0 : index
    %67 = vector.load %arg2[%c4, %c0_39, %c0_40] : memref<18x128x128xbf16, #tpu.memory_space<vmem>>, vector<1x128x128xbf16>
    %68 = vector.shape_cast %67 : vector<1x128x128xbf16> to vector<128x128xbf16>
    %cst_41 = arith.constant dense<0.000000e+00> : vector<128x128xf32>
    %69 = tpu.matmul %66, %68, %cst_41 {dimension_numbers = #tpu.dot_dimension_numbers<[1], [0], [0], [1], [0, 0, 1, 1], [], []>} : vector<128x128xbf16>, vector<128x128xbf16>, vector<128x128xf32> -> vector<128x128xf32>
    %c4_42 = arith.constant 4 : index
    %c0_43 = arith.constant 0 : index
    %c0_44 = arith.constant 0 : index
    %70 = vector.load %arg3[%c4_42, %c0_43, %c0_44] : memref<18x1x128xf32, #tpu.memory_space<vmem>>, vector<1x1x128xf32>
    %71 = vector.shape_cast %70 : vector<1x1x128xf32> to vector<1x128xf32>
    %72 = vector.broadcast %71 : vector<1x128xf32> to vector<128x128xf32>
    %73 = arith.addf %69, %72 : vector<128x128xf32>
    %cst_45 = arith.constant 0.000000e+00 : f32
    %74 = vector.broadcast %cst_45 : f32 to vector<128x128xf32>
    %75 = arith.maximumf %73, %74 : vector<128x128xf32>
    %76 = arith.truncf %75 : vector<128x128xf32> to vector<128x128xbf16>
    %c5 = arith.constant 5 : index
    %c0_46 = arith.constant 0 : index
    %c0_47 = arith.constant 0 : index
    %77 = vector.load %arg2[%c5, %c0_46, %c0_47] : memref<18x128x128xbf16, #tpu.memory_space<vmem>>, vector<1x128x128xbf16>
    %78 = vector.shape_cast %77 : vector<1x128x128xbf16> to vector<128x128xbf16>
    %cst_48 = arith.constant dense<0.000000e+00> : vector<128x128xf32>
    %79 = tpu.matmul %76, %78, %cst_48 {dimension_numbers = #tpu.dot_dimension_numbers<[1], [0], [0], [1], [0, 0, 1, 1], [], []>} : vector<128x128xbf16>, vector<128x128xbf16>, vector<128x128xf32> -> vector<128x128xf32>
    %c5_49 = arith.constant 5 : index
    %c0_50 = arith.constant 0 : index
    %c0_51 = arith.constant 0 : index
    %80 = vector.load %arg3[%c5_49, %c0_50, %c0_51] : memref<18x1x128xf32, #tpu.memory_space<vmem>>, vector<1x1x128xf32>
    %81 = vector.shape_cast %80 : vector<1x1x128xf32> to vector<1x128xf32>
    %82 = vector.broadcast %81 : vector<1x128xf32> to vector<128x128xf32>
    %83 = arith.addf %79, %82 : vector<128x128xf32>
    %84 = arith.addf %83, %55 : vector<128x128xf32>
    %cst_52 = arith.constant dense<0.000000e+00> : vector<128xf32>
    %85 = vector.multi_reduction <add>, %84, %cst_52 [1] : vector<128x128xf32> to vector<128xf32>
    %86 = vector.shape_cast %85 : vector<128xf32> to vector<128x1xf32>
    %87 = arith.mulf %84, %84 : vector<128x128xf32>
    %cst_53 = arith.constant dense<0.000000e+00> : vector<128xf32>
    %88 = vector.multi_reduction <add>, %87, %cst_53 [1] : vector<128x128xf32> to vector<128xf32>
    %89 = vector.shape_cast %88 : vector<128xf32> to vector<128x1xf32>
    %cst_54 = arith.constant 7.812500e-03 : f32
    %90 = vector.broadcast %cst_54 : f32 to vector<128x1xf32>
    %91 = arith.mulf %86, %90 : vector<128x1xf32>
    %cst_55 = arith.constant 7.812500e-03 : f32
    %92 = vector.broadcast %cst_55 : f32 to vector<128x1xf32>
    %93 = arith.mulf %89, %92 : vector<128x1xf32>
    %94 = arith.mulf %91, %91 : vector<128x1xf32>
    %95 = arith.subf %93, %94 : vector<128x1xf32>
    %cst_56 = arith.constant 9.99999974E-6 : f32
    %96 = vector.broadcast %cst_56 : f32 to vector<128x1xf32>
    %97 = arith.addf %95, %96 : vector<128x1xf32>
    %98 = math.rsqrt %97 : vector<128x1xf32>
    %99 = vector.broadcast %91 : vector<128x1xf32> to vector<128x128xf32>
    %100 = arith.subf %84, %99 : vector<128x128xf32>
    %101 = vector.broadcast %98 : vector<128x1xf32> to vector<128x128xf32>
    %102 = arith.mulf %100, %101 : vector<128x128xf32>
    %c1_57 = arith.constant 1 : index
    %c0_58 = arith.constant 0 : index
    %c0_59 = arith.constant 0 : index
    %103 = vector.load %arg4[%c1_57, %c0_58, %c0_59] : memref<5x1x128xf32, #tpu.memory_space<vmem>>, vector<1x1x128xf32>
    %104 = vector.shape_cast %103 : vector<1x1x128xf32> to vector<1x128xf32>
    %105 = vector.broadcast %104 : vector<1x128xf32> to vector<128x128xf32>
    %106 = arith.mulf %102, %105 : vector<128x128xf32>
    %c1_60 = arith.constant 1 : index
    %c0_61 = arith.constant 0 : index
    %c0_62 = arith.constant 0 : index
    %107 = vector.load %arg5[%c1_60, %c0_61, %c0_62] : memref<5x1x128xf32, #tpu.memory_space<vmem>>, vector<1x1x128xf32>
    %108 = vector.shape_cast %107 : vector<1x1x128xf32> to vector<1x128xf32>
    %109 = vector.broadcast %108 : vector<1x128xf32> to vector<128x128xf32>
    %110 = arith.addf %106, %109 : vector<128x128xf32>
    %111 = arith.truncf %110 : vector<128x128xf32> to vector<128x128xbf16>
    %c6 = arith.constant 6 : index
    %c0_63 = arith.constant 0 : index
    %c0_64 = arith.constant 0 : index
    %112 = vector.load %arg2[%c6, %c0_63, %c0_64] : memref<18x128x128xbf16, #tpu.memory_space<vmem>>, vector<1x128x128xbf16>
    %113 = vector.shape_cast %112 : vector<1x128x128xbf16> to vector<128x128xbf16>
    %cst_65 = arith.constant dense<0.000000e+00> : vector<128x128xf32>
    %114 = tpu.matmul %111, %113, %cst_65 {dimension_numbers = #tpu.dot_dimension_numbers<[1], [0], [0], [1], [0, 0, 1, 1], [], []>} : vector<128x128xbf16>, vector<128x128xbf16>, vector<128x128xf32> -> vector<128x128xf32>
    %c6_66 = arith.constant 6 : index
    %c0_67 = arith.constant 0 : index
    %c0_68 = arith.constant 0 : index
    %115 = vector.load %arg3[%c6_66, %c0_67, %c0_68] : memref<18x1x128xf32, #tpu.memory_space<vmem>>, vector<1x1x128xf32>
    %116 = vector.shape_cast %115 : vector<1x1x128xf32> to vector<1x128xf32>
    %117 = vector.broadcast %116 : vector<1x128xf32> to vector<128x128xf32>
    %118 = arith.addf %114, %117 : vector<128x128xf32>
    %cst_69 = arith.constant 0.000000e+00 : f32
    %119 = vector.broadcast %cst_69 : f32 to vector<128x128xf32>
    %120 = arith.maximumf %118, %119 : vector<128x128xf32>
    %121 = arith.truncf %120 : vector<128x128xf32> to vector<128x128xbf16>
    %c7 = arith.constant 7 : index
    %c0_70 = arith.constant 0 : index
    %c0_71 = arith.constant 0 : index
    %122 = vector.load %arg2[%c7, %c0_70, %c0_71] : memref<18x128x128xbf16, #tpu.memory_space<vmem>>, vector<1x128x128xbf16>
    %123 = vector.shape_cast %122 : vector<1x128x128xbf16> to vector<128x128xbf16>
    %cst_72 = arith.constant dense<0.000000e+00> : vector<128x128xf32>
    %124 = tpu.matmul %121, %123, %cst_72 {dimension_numbers = #tpu.dot_dimension_numbers<[1], [0], [0], [1], [0, 0, 1, 1], [], []>} : vector<128x128xbf16>, vector<128x128xbf16>, vector<128x128xf32> -> vector<128x128xf32>
    %c7_73 = arith.constant 7 : index
    %c0_74 = arith.constant 0 : index
    %c0_75 = arith.constant 0 : index
    %125 = vector.load %arg3[%c7_73, %c0_74, %c0_75] : memref<18x1x128xf32, #tpu.memory_space<vmem>>, vector<1x1x128xf32>
    %126 = vector.shape_cast %125 : vector<1x1x128xf32> to vector<1x128xf32>
    %127 = vector.broadcast %126 : vector<1x128xf32> to vector<128x128xf32>
    %128 = arith.addf %124, %127 : vector<128x128xf32>
    %cst_76 = arith.constant 0.000000e+00 : f32
    %129 = vector.broadcast %cst_76 : f32 to vector<128x128xf32>
    %130 = arith.maximumf %128, %129 : vector<128x128xf32>
    %131 = arith.truncf %130 : vector<128x128xf32> to vector<128x128xbf16>
    %c8 = arith.constant 8 : index
    %c0_77 = arith.constant 0 : index
    %c0_78 = arith.constant 0 : index
    %132 = vector.load %arg2[%c8, %c0_77, %c0_78] : memref<18x128x128xbf16, #tpu.memory_space<vmem>>, vector<1x128x128xbf16>
    %133 = vector.shape_cast %132 : vector<1x128x128xbf16> to vector<128x128xbf16>
    %cst_79 = arith.constant dense<0.000000e+00> : vector<128x128xf32>
    %134 = tpu.matmul %131, %133, %cst_79 {dimension_numbers = #tpu.dot_dimension_numbers<[1], [0], [0], [1], [0, 0, 1, 1], [], []>} : vector<128x128xbf16>, vector<128x128xbf16>, vector<128x128xf32> -> vector<128x128xf32>
    %c8_80 = arith.constant 8 : index
    %c0_81 = arith.constant 0 : index
    %c0_82 = arith.constant 0 : index
    %135 = vector.load %arg3[%c8_80, %c0_81, %c0_82] : memref<18x1x128xf32, #tpu.memory_space<vmem>>, vector<1x1x128xf32>
    %136 = vector.shape_cast %135 : vector<1x1x128xf32> to vector<1x128xf32>
    %137 = vector.broadcast %136 : vector<1x128xf32> to vector<128x128xf32>
    %138 = arith.addf %134, %137 : vector<128x128xf32>
    %139 = arith.addf %138, %110 : vector<128x128xf32>
    %cst_83 = arith.constant dense<0.000000e+00> : vector<128xf32>
    %140 = vector.multi_reduction <add>, %139, %cst_83 [1] : vector<128x128xf32> to vector<128xf32>
    %141 = vector.shape_cast %140 : vector<128xf32> to vector<128x1xf32>
    %142 = arith.mulf %139, %139 : vector<128x128xf32>
    %cst_84 = arith.constant dense<0.000000e+00> : vector<128xf32>
    %143 = vector.multi_reduction <add>, %142, %cst_84 [1] : vector<128x128xf32> to vector<128xf32>
    %144 = vector.shape_cast %143 : vector<128xf32> to vector<128x1xf32>
    %cst_85 = arith.constant 7.812500e-03 : f32
    %145 = vector.broadcast %cst_85 : f32 to vector<128x1xf32>
    %146 = arith.mulf %141, %145 : vector<128x1xf32>
    %cst_86 = arith.constant 7.812500e-03 : f32
    %147 = vector.broadcast %cst_86 : f32 to vector<128x1xf32>
    %148 = arith.mulf %144, %147 : vector<128x1xf32>
    %149 = arith.mulf %146, %146 : vector<128x1xf32>
    %150 = arith.subf %148, %149 : vector<128x1xf32>
    %cst_87 = arith.constant 9.99999974E-6 : f32
    %151 = vector.broadcast %cst_87 : f32 to vector<128x1xf32>
    %152 = arith.addf %150, %151 : vector<128x1xf32>
    %153 = math.rsqrt %152 : vector<128x1xf32>
    %154 = vector.broadcast %146 : vector<128x1xf32> to vector<128x128xf32>
    %155 = arith.subf %139, %154 : vector<128x128xf32>
    %156 = vector.broadcast %153 : vector<128x1xf32> to vector<128x128xf32>
    %157 = arith.mulf %155, %156 : vector<128x128xf32>
    %c2_88 = arith.constant 2 : index
    %c0_89 = arith.constant 0 : index
    %c0_90 = arith.constant 0 : index
    %158 = vector.load %arg4[%c2_88, %c0_89, %c0_90] : memref<5x1x128xf32, #tpu.memory_space<vmem>>, vector<1x1x128xf32>
    %159 = vector.shape_cast %158 : vector<1x1x128xf32> to vector<1x128xf32>
    %160 = vector.broadcast %159 : vector<1x128xf32> to vector<128x128xf32>
    %161 = arith.mulf %157, %160 : vector<128x128xf32>
    %c2_91 = arith.constant 2 : index
    %c0_92 = arith.constant 0 : index
    %c0_93 = arith.constant 0 : index
    %162 = vector.load %arg5[%c2_91, %c0_92, %c0_93] : memref<5x1x128xf32, #tpu.memory_space<vmem>>, vector<1x1x128xf32>
    %163 = vector.shape_cast %162 : vector<1x1x128xf32> to vector<1x128xf32>
    %164 = vector.broadcast %163 : vector<1x128xf32> to vector<128x128xf32>
    %165 = arith.addf %161, %164 : vector<128x128xf32>
    %166 = arith.truncf %165 : vector<128x128xf32> to vector<128x128xbf16>
    %c9 = arith.constant 9 : index
    %c0_94 = arith.constant 0 : index
    %c0_95 = arith.constant 0 : index
    %167 = vector.load %arg2[%c9, %c0_94, %c0_95] : memref<18x128x128xbf16, #tpu.memory_space<vmem>>, vector<1x128x128xbf16>
    %168 = vector.shape_cast %167 : vector<1x128x128xbf16> to vector<128x128xbf16>
    %cst_96 = arith.constant dense<0.000000e+00> : vector<128x128xf32>
    %169 = tpu.matmul %166, %168, %cst_96 {dimension_numbers = #tpu.dot_dimension_numbers<[1], [0], [0], [1], [0, 0, 1, 1], [], []>} : vector<128x128xbf16>, vector<128x128xbf16>, vector<128x128xf32> -> vector<128x128xf32>
    %c9_97 = arith.constant 9 : index
    %c0_98 = arith.constant 0 : index
    %c0_99 = arith.constant 0 : index
    %170 = vector.load %arg3[%c9_97, %c0_98, %c0_99] : memref<18x1x128xf32, #tpu.memory_space<vmem>>, vector<1x1x128xf32>
    %171 = vector.shape_cast %170 : vector<1x1x128xf32> to vector<1x128xf32>
    %172 = vector.broadcast %171 : vector<1x128xf32> to vector<128x128xf32>
    %173 = arith.addf %169, %172 : vector<128x128xf32>
    %cst_100 = arith.constant 0.000000e+00 : f32
    %174 = vector.broadcast %cst_100 : f32 to vector<128x128xf32>
    %175 = arith.maximumf %173, %174 : vector<128x128xf32>
    %176 = arith.truncf %175 : vector<128x128xf32> to vector<128x128xbf16>
    %c10 = arith.constant 10 : index
    %c0_101 = arith.constant 0 : index
    %c0_102 = arith.constant 0 : index
    %177 = vector.load %arg2[%c10, %c0_101, %c0_102] : memref<18x128x128xbf16, #tpu.memory_space<vmem>>, vector<1x128x128xbf16>
    %178 = vector.shape_cast %177 : vector<1x128x128xbf16> to vector<128x128xbf16>
    %cst_103 = arith.constant dense<0.000000e+00> : vector<128x128xf32>
    %179 = tpu.matmul %176, %178, %cst_103 {dimension_numbers = #tpu.dot_dimension_numbers<[1], [0], [0], [1], [0, 0, 1, 1], [], []>} : vector<128x128xbf16>, vector<128x128xbf16>, vector<128x128xf32> -> vector<128x128xf32>
    %c10_104 = arith.constant 10 : index
    %c0_105 = arith.constant 0 : index
    %c0_106 = arith.constant 0 : index
    %180 = vector.load %arg3[%c10_104, %c0_105, %c0_106] : memref<18x1x128xf32, #tpu.memory_space<vmem>>, vector<1x1x128xf32>
    %181 = vector.shape_cast %180 : vector<1x1x128xf32> to vector<1x128xf32>
    %182 = vector.broadcast %181 : vector<1x128xf32> to vector<128x128xf32>
    %183 = arith.addf %179, %182 : vector<128x128xf32>
    %cst_107 = arith.constant 0.000000e+00 : f32
    %184 = vector.broadcast %cst_107 : f32 to vector<128x128xf32>
    %185 = arith.maximumf %183, %184 : vector<128x128xf32>
    %186 = arith.truncf %185 : vector<128x128xf32> to vector<128x128xbf16>
    %c11 = arith.constant 11 : index
    %c0_108 = arith.constant 0 : index
    %c0_109 = arith.constant 0 : index
    %187 = vector.load %arg2[%c11, %c0_108, %c0_109] : memref<18x128x128xbf16, #tpu.memory_space<vmem>>, vector<1x128x128xbf16>
    %188 = vector.shape_cast %187 : vector<1x128x128xbf16> to vector<128x128xbf16>
    %cst_110 = arith.constant dense<0.000000e+00> : vector<128x128xf32>
    %189 = tpu.matmul %186, %188, %cst_110 {dimension_numbers = #tpu.dot_dimension_numbers<[1], [0], [0], [1], [0, 0, 1, 1], [], []>} : vector<128x128xbf16>, vector<128x128xbf16>, vector<128x128xf32> -> vector<128x128xf32>
    %c11_111 = arith.constant 11 : index
    %c0_112 = arith.constant 0 : index
    %c0_113 = arith.constant 0 : index
    %190 = vector.load %arg3[%c11_111, %c0_112, %c0_113] : memref<18x1x128xf32, #tpu.memory_space<vmem>>, vector<1x1x128xf32>
    %191 = vector.shape_cast %190 : vector<1x1x128xf32> to vector<1x128xf32>
    %192 = vector.broadcast %191 : vector<1x128xf32> to vector<128x128xf32>
    %193 = arith.addf %189, %192 : vector<128x128xf32>
    %194 = arith.addf %193, %165 : vector<128x128xf32>
    %cst_114 = arith.constant dense<0.000000e+00> : vector<128xf32>
    %195 = vector.multi_reduction <add>, %194, %cst_114 [1] : vector<128x128xf32> to vector<128xf32>
    %196 = vector.shape_cast %195 : vector<128xf32> to vector<128x1xf32>
    %197 = arith.mulf %194, %194 : vector<128x128xf32>
    %cst_115 = arith.constant dense<0.000000e+00> : vector<128xf32>
    %198 = vector.multi_reduction <add>, %197, %cst_115 [1] : vector<128x128xf32> to vector<128xf32>
    %199 = vector.shape_cast %198 : vector<128xf32> to vector<128x1xf32>
    %cst_116 = arith.constant 7.812500e-03 : f32
    %200 = vector.broadcast %cst_116 : f32 to vector<128x1xf32>
    %201 = arith.mulf %196, %200 : vector<128x1xf32>
    %cst_117 = arith.constant 7.812500e-03 : f32
    %202 = vector.broadcast %cst_117 : f32 to vector<128x1xf32>
    %203 = arith.mulf %199, %202 : vector<128x1xf32>
    %204 = arith.mulf %201, %201 : vector<128x1xf32>
    %205 = arith.subf %203, %204 : vector<128x1xf32>
    %cst_118 = arith.constant 9.99999974E-6 : f32
    %206 = vector.broadcast %cst_118 : f32 to vector<128x1xf32>
    %207 = arith.addf %205, %206 : vector<128x1xf32>
    %208 = math.rsqrt %207 : vector<128x1xf32>
    %209 = vector.broadcast %201 : vector<128x1xf32> to vector<128x128xf32>
    %210 = arith.subf %194, %209 : vector<128x128xf32>
    %211 = vector.broadcast %208 : vector<128x1xf32> to vector<128x128xf32>
    %212 = arith.mulf %210, %211 : vector<128x128xf32>
    %c3_119 = arith.constant 3 : index
    %c0_120 = arith.constant 0 : index
    %c0_121 = arith.constant 0 : index
    %213 = vector.load %arg4[%c3_119, %c0_120, %c0_121] : memref<5x1x128xf32, #tpu.memory_space<vmem>>, vector<1x1x128xf32>
    %214 = vector.shape_cast %213 : vector<1x1x128xf32> to vector<1x128xf32>
    %215 = vector.broadcast %214 : vector<1x128xf32> to vector<128x128xf32>
    %216 = arith.mulf %212, %215 : vector<128x128xf32>
    %c3_122 = arith.constant 3 : index
    %c0_123 = arith.constant 0 : index
    %c0_124 = arith.constant 0 : index
    %217 = vector.load %arg5[%c3_122, %c0_123, %c0_124] : memref<5x1x128xf32, #tpu.memory_space<vmem>>, vector<1x1x128xf32>
    %218 = vector.shape_cast %217 : vector<1x1x128xf32> to vector<1x128xf32>
    %219 = vector.broadcast %218 : vector<1x128xf32> to vector<128x128xf32>
    %220 = arith.addf %216, %219 : vector<128x128xf32>
    %221 = arith.truncf %220 : vector<128x128xf32> to vector<128x128xbf16>
    %c12 = arith.constant 12 : index
    %c0_125 = arith.constant 0 : index
    %c0_126 = arith.constant 0 : index
    %222 = vector.load %arg2[%c12, %c0_125, %c0_126] : memref<18x128x128xbf16, #tpu.memory_space<vmem>>, vector<1x128x128xbf16>
    %223 = vector.shape_cast %222 : vector<1x128x128xbf16> to vector<128x128xbf16>
    %cst_127 = arith.constant dense<0.000000e+00> : vector<128x128xf32>
    %224 = tpu.matmul %221, %223, %cst_127 {dimension_numbers = #tpu.dot_dimension_numbers<[1], [0], [0], [1], [0, 0, 1, 1], [], []>} : vector<128x128xbf16>, vector<128x128xbf16>, vector<128x128xf32> -> vector<128x128xf32>
    %c12_128 = arith.constant 12 : index
    %c0_129 = arith.constant 0 : index
    %c0_130 = arith.constant 0 : index
    %225 = vector.load %arg3[%c12_128, %c0_129, %c0_130] : memref<18x1x128xf32, #tpu.memory_space<vmem>>, vector<1x1x128xf32>
    %226 = vector.shape_cast %225 : vector<1x1x128xf32> to vector<1x128xf32>
    %227 = vector.broadcast %226 : vector<1x128xf32> to vector<128x128xf32>
    %228 = arith.addf %224, %227 : vector<128x128xf32>
    %cst_131 = arith.constant 0.000000e+00 : f32
    %229 = vector.broadcast %cst_131 : f32 to vector<128x128xf32>
    %230 = arith.maximumf %228, %229 : vector<128x128xf32>
    %231 = arith.truncf %230 : vector<128x128xf32> to vector<128x128xbf16>
    %c13 = arith.constant 13 : index
    %c0_132 = arith.constant 0 : index
    %c0_133 = arith.constant 0 : index
    %232 = vector.load %arg2[%c13, %c0_132, %c0_133] : memref<18x128x128xbf16, #tpu.memory_space<vmem>>, vector<1x128x128xbf16>
    %233 = vector.shape_cast %232 : vector<1x128x128xbf16> to vector<128x128xbf16>
    %cst_134 = arith.constant dense<0.000000e+00> : vector<128x128xf32>
    %234 = tpu.matmul %231, %233, %cst_134 {dimension_numbers = #tpu.dot_dimension_numbers<[1], [0], [0], [1], [0, 0, 1, 1], [], []>} : vector<128x128xbf16>, vector<128x128xbf16>, vector<128x128xf32> -> vector<128x128xf32>
    %c13_135 = arith.constant 13 : index
    %c0_136 = arith.constant 0 : index
    %c0_137 = arith.constant 0 : index
    %235 = vector.load %arg3[%c13_135, %c0_136, %c0_137] : memref<18x1x128xf32, #tpu.memory_space<vmem>>, vector<1x1x128xf32>
    %236 = vector.shape_cast %235 : vector<1x1x128xf32> to vector<1x128xf32>
    %237 = vector.broadcast %236 : vector<1x128xf32> to vector<128x128xf32>
    %238 = arith.addf %234, %237 : vector<128x128xf32>
    %cst_138 = arith.constant 0.000000e+00 : f32
    %239 = vector.broadcast %cst_138 : f32 to vector<128x128xf32>
    %240 = arith.maximumf %238, %239 : vector<128x128xf32>
    %241 = arith.truncf %240 : vector<128x128xf32> to vector<128x128xbf16>
    %c14 = arith.constant 14 : index
    %c0_139 = arith.constant 0 : index
    %c0_140 = arith.constant 0 : index
    %242 = vector.load %arg2[%c14, %c0_139, %c0_140] : memref<18x128x128xbf16, #tpu.memory_space<vmem>>, vector<1x128x128xbf16>
    %243 = vector.shape_cast %242 : vector<1x128x128xbf16> to vector<128x128xbf16>
    %cst_141 = arith.constant dense<0.000000e+00> : vector<128x128xf32>
    %244 = tpu.matmul %241, %243, %cst_141 {dimension_numbers = #tpu.dot_dimension_numbers<[1], [0], [0], [1], [0, 0, 1, 1], [], []>} : vector<128x128xbf16>, vector<128x128xbf16>, vector<128x128xf32> -> vector<128x128xf32>
    %c14_142 = arith.constant 14 : index
    %c0_143 = arith.constant 0 : index
    %c0_144 = arith.constant 0 : index
    %245 = vector.load %arg3[%c14_142, %c0_143, %c0_144] : memref<18x1x128xf32, #tpu.memory_space<vmem>>, vector<1x1x128xf32>
    %246 = vector.shape_cast %245 : vector<1x1x128xf32> to vector<1x128xf32>
    %247 = vector.broadcast %246 : vector<1x128xf32> to vector<128x128xf32>
    %248 = arith.addf %244, %247 : vector<128x128xf32>
    %249 = arith.addf %248, %220 : vector<128x128xf32>
    %cst_145 = arith.constant dense<0.000000e+00> : vector<128xf32>
    %250 = vector.multi_reduction <add>, %249, %cst_145 [1] : vector<128x128xf32> to vector<128xf32>
    %251 = vector.shape_cast %250 : vector<128xf32> to vector<128x1xf32>
    %252 = arith.mulf %249, %249 : vector<128x128xf32>
    %cst_146 = arith.constant dense<0.000000e+00> : vector<128xf32>
    %253 = vector.multi_reduction <add>, %252, %cst_146 [1] : vector<128x128xf32> to vector<128xf32>
    %254 = vector.shape_cast %253 : vector<128xf32> to vector<128x1xf32>
    %cst_147 = arith.constant 7.812500e-03 : f32
    %255 = vector.broadcast %cst_147 : f32 to vector<128x1xf32>
    %256 = arith.mulf %251, %255 : vector<128x1xf32>
    %cst_148 = arith.constant 7.812500e-03 : f32
    %257 = vector.broadcast %cst_148 : f32 to vector<128x1xf32>
    %258 = arith.mulf %254, %257 : vector<128x1xf32>
    %259 = arith.mulf %256, %256 : vector<128x1xf32>
    %260 = arith.subf %258, %259 : vector<128x1xf32>
    %cst_149 = arith.constant 9.99999974E-6 : f32
    %261 = vector.broadcast %cst_149 : f32 to vector<128x1xf32>
    %262 = arith.addf %260, %261 : vector<128x1xf32>
    %263 = math.rsqrt %262 : vector<128x1xf32>
    %264 = vector.broadcast %256 : vector<128x1xf32> to vector<128x128xf32>
    %265 = arith.subf %249, %264 : vector<128x128xf32>
    %266 = vector.broadcast %263 : vector<128x1xf32> to vector<128x128xf32>
    %267 = arith.mulf %265, %266 : vector<128x128xf32>
    %c4_150 = arith.constant 4 : index
    %c0_151 = arith.constant 0 : index
    %c0_152 = arith.constant 0 : index
    %268 = vector.load %arg4[%c4_150, %c0_151, %c0_152] : memref<5x1x128xf32, #tpu.memory_space<vmem>>, vector<1x1x128xf32>
    %269 = vector.shape_cast %268 : vector<1x1x128xf32> to vector<1x128xf32>
    %270 = vector.broadcast %269 : vector<1x128xf32> to vector<128x128xf32>
    %271 = arith.mulf %267, %270 : vector<128x128xf32>
    %c4_153 = arith.constant 4 : index
    %c0_154 = arith.constant 0 : index
    %c0_155 = arith.constant 0 : index
    %272 = vector.load %arg5[%c4_153, %c0_154, %c0_155] : memref<5x1x128xf32, #tpu.memory_space<vmem>>, vector<1x1x128xf32>
    %273 = vector.shape_cast %272 : vector<1x1x128xf32> to vector<1x128xf32>
    %274 = vector.broadcast %273 : vector<1x128xf32> to vector<128x128xf32>
    %275 = arith.addf %271, %274 : vector<128x128xf32>
    %276 = arith.truncf %275 : vector<128x128xf32> to vector<128x128xbf16>
    %c15 = arith.constant 15 : index
    %c0_156 = arith.constant 0 : index
    %c0_157 = arith.constant 0 : index
    %277 = vector.load %arg2[%c15, %c0_156, %c0_157] : memref<18x128x128xbf16, #tpu.memory_space<vmem>>, vector<1x128x128xbf16>
    %278 = vector.shape_cast %277 : vector<1x128x128xbf16> to vector<128x128xbf16>
    %cst_158 = arith.constant dense<0.000000e+00> : vector<128x128xf32>
    %279 = tpu.matmul %276, %278, %cst_158 {dimension_numbers = #tpu.dot_dimension_numbers<[1], [0], [0], [1], [0, 0, 1, 1], [], []>} : vector<128x128xbf16>, vector<128x128xbf16>, vector<128x128xf32> -> vector<128x128xf32>
    %c15_159 = arith.constant 15 : index
    %c0_160 = arith.constant 0 : index
    %c0_161 = arith.constant 0 : index
    %280 = vector.load %arg3[%c15_159, %c0_160, %c0_161] : memref<18x1x128xf32, #tpu.memory_space<vmem>>, vector<1x1x128xf32>
    %281 = vector.shape_cast %280 : vector<1x1x128xf32> to vector<1x128xf32>
    %282 = vector.broadcast %281 : vector<1x128xf32> to vector<128x128xf32>
    %283 = arith.addf %279, %282 : vector<128x128xf32>
    %cst_162 = arith.constant 0.000000e+00 : f32
    %284 = vector.broadcast %cst_162 : f32 to vector<128x128xf32>
    %285 = arith.maximumf %283, %284 : vector<128x128xf32>
    %286 = arith.truncf %285 : vector<128x128xf32> to vector<128x128xbf16>
    %c16 = arith.constant 16 : index
    %c0_163 = arith.constant 0 : index
    %c0_164 = arith.constant 0 : index
    %287 = vector.load %arg2[%c16, %c0_163, %c0_164] : memref<18x128x128xbf16, #tpu.memory_space<vmem>>, vector<1x128x128xbf16>
    %288 = vector.shape_cast %287 : vector<1x128x128xbf16> to vector<128x128xbf16>
    %cst_165 = arith.constant dense<0.000000e+00> : vector<128x128xf32>
    %289 = tpu.matmul %286, %288, %cst_165 {dimension_numbers = #tpu.dot_dimension_numbers<[1], [0], [0], [1], [0, 0, 1, 1], [], []>} : vector<128x128xbf16>, vector<128x128xbf16>, vector<128x128xf32> -> vector<128x128xf32>
    %c16_166 = arith.constant 16 : index
    %c0_167 = arith.constant 0 : index
    %c0_168 = arith.constant 0 : index
    %290 = vector.load %arg3[%c16_166, %c0_167, %c0_168] : memref<18x1x128xf32, #tpu.memory_space<vmem>>, vector<1x1x128xf32>
    %291 = vector.shape_cast %290 : vector<1x1x128xf32> to vector<1x128xf32>
    %292 = vector.broadcast %291 : vector<1x128xf32> to vector<128x128xf32>
    %293 = arith.addf %289, %292 : vector<128x128xf32>
    %cst_169 = arith.constant 0.000000e+00 : f32
    %294 = vector.broadcast %cst_169 : f32 to vector<128x128xf32>
    %295 = arith.maximumf %293, %294 : vector<128x128xf32>
    %296 = arith.truncf %295 : vector<128x128xf32> to vector<128x128xbf16>
    %c17 = arith.constant 17 : index
    %c0_170 = arith.constant 0 : index
    %c0_171 = arith.constant 0 : index
    %297 = vector.load %arg2[%c17, %c0_170, %c0_171] : memref<18x128x128xbf16, #tpu.memory_space<vmem>>, vector<1x128x128xbf16>
    %298 = vector.shape_cast %297 : vector<1x128x128xbf16> to vector<128x128xbf16>
    %cst_172 = arith.constant dense<0.000000e+00> : vector<128x128xf32>
    %299 = tpu.matmul %296, %298, %cst_172 {dimension_numbers = #tpu.dot_dimension_numbers<[1], [0], [0], [1], [0, 0, 1, 1], [], []>} : vector<128x128xbf16>, vector<128x128xbf16>, vector<128x128xf32> -> vector<128x128xf32>
    %c17_173 = arith.constant 17 : index
    %c0_174 = arith.constant 0 : index
    %c0_175 = arith.constant 0 : index
    %300 = vector.load %arg3[%c17_173, %c0_174, %c0_175] : memref<18x1x128xf32, #tpu.memory_space<vmem>>, vector<1x1x128xf32>
    %301 = vector.shape_cast %300 : vector<1x1x128xf32> to vector<1x128xf32>
    %302 = vector.broadcast %301 : vector<1x128xf32> to vector<128x128xf32>
    %303 = arith.addf %299, %302 : vector<128x128xf32>
    %304 = arith.addf %303, %275 : vector<128x128xf32>
    %c0_176 = arith.constant 0 : index
    %c0_177 = arith.constant 0 : index
    %305 = vector.load %arg6[%c0_176, %c0_177] : memref<128x128xf32, #tpu.memory_space<vmem>>, vector<128x128xf32>
    tpu.vector_store %arg6[%c0_176, %c0_177], %304 {strides = array<i32>} : memref<128x128xf32, #tpu.memory_space<vmem>>, vector<128x128xf32>,
    return
  }
  func.func @transform_0(%arg0: i32) -> (i32, i32) {
    %c0_i32 = arith.constant 0 : i32
    %c0_i32_0 = arith.constant 0 : i32
    return %arg0, %c0_i32 : i32, i32
  }
  func.func @transform_1(%arg0: i32) -> (i32, i32, i32) {
    %c0_i32 = arith.constant 0 : i32
    %c0_i32_0 = arith.constant 0 : i32
    %c0_i32_1 = arith.constant 0 : i32
    %c0_i32_2 = arith.constant 0 : i32
    return %c0_i32, %c0_i32_0, %c0_i32_1 : i32, i32, i32
  }
  func.func @transform_2(%arg0: i32) -> (i32, i32, i32) {
    %c0_i32 = arith.constant 0 : i32
    %c0_i32_0 = arith.constant 0 : i32
    %c0_i32_1 = arith.constant 0 : i32
    %c0_i32_2 = arith.constant 0 : i32
    return %c0_i32, %c0_i32_0, %c0_i32_1 : i32, i32, i32
  }
  func.func @transform_3(%arg0: i32) -> (i32, i32, i32) {
    %c0_i32 = arith.constant 0 : i32
    %c0_i32_0 = arith.constant 0 : i32
    %c0_i32_1 = arith.constant 0 : i32
    %c0_i32_2 = arith.constant 0 : i32
    return %c0_i32, %c0_i32_0, %c0_i32_1 : i32, i32, i32
  }
  func.func @transform_4(%arg0: i32) -> (i32, i32, i32) {
    %c0_i32 = arith.constant 0 : i32
    %c0_i32_0 = arith.constant 0 : i32
    %c0_i32_1 = arith.constant 0 : i32
    %c0_i32_2 = arith.constant 0 : i32
    return %c0_i32, %c0_i32_0, %c0_i32_1 : i32, i32, i32
  }
  func.func @transform_5(%arg0: i32) -> (i32, i32) {
    %c0_i32 = arith.constant 0 : i32
    %c0_i32_0 = arith.constant 0 : i32
    return %arg0, %c0_i32 : i32, i32
  }
}

</mosaic_0001>

<llo_original>
// kernel: qlora_bignet_forward.1
$region0: #{qlora_bignet_forward.1}
  #allocation0 [shape = 'u32[]', space=smem, size = 0x4, offset = 0x4, fixed_abs, tag = 'smem constant byte address 0x4 - core index']
  #allocation1 [shape = 'u32[144,128]{1,0:T(1,128)}', space=vmem, size = 0x12000, scoped, tag = 'internal scratch']
  %s0 = inlined_call_operand.hbm [shape: f32[256,128], index: 0, kind: input, shape index: {}]
  %s1 = inlined_call_operand.hbm [shape: bf16[18,128,128], index: 1, kind: input, shape index: {}]
  %s2 = inlined_call_operand.hbm [shape: f32[18,1,128], index: 2, kind: input, shape index: {}]
  %s3 = inlined_call_operand.vmem [shape: f32[5,1,128], index: 3, kind: input, shape index: {}]
  %s4 = inlined_call_operand.hbm [shape: f32[5,1,128], index: 4, kind: input, shape index: {}]
  %s5 = inlined_call_operand.hbm [shape: f32[256,128], index: 5, kind: output, shape index: {}]
  %s6 = sld [smem:[#allocation0]]
  $region69: #{qlora_bignet_forward.1} parent=0
    _
  %s8 = ssub.s32 1, %s6
  %s9 = scalar_select 0, %s8, %s6
  $region1: #{qlora_bignet_forward.1} parent=0
    #allocation2 [shape = 'u8[131072]{0}', space=vmem, size = 0x20000, scoped, tag = 'input window, operand 0']
    #allocation3 [shape = 's32[2]{0}', space=sflag, size = 0x8, scoped, tag = 'scoped memory for qlora_bignet_forward.1']
    #allocation4 [shape = 's32[2]{0}', space=sflag, size = 0x8, scoped, tag = 'scoped memory for qlora_bignet_forward.1']
    #allocation5 [shape = 'u8[589824]{0}', space=vmem, size = 0x90000, scoped, tag = 'input window, operand 1, single buffered']
    #allocation6 [shape = 's32[1]{0}', space=sflag, size = 0x4, scoped, tag = 'scoped memory for qlora_bignet_forward.1']
    #allocation7 [shape = 'u8[9216]{0}', space=vmem, size = 0x2400, scoped, tag = 'input window, operand 2, single buffered']
    #allocation8 [shape = 'u8[2560]{0}', space=vmem, size = 0xc00, scoped, tag = 'input window, operand 4, single buffered']
    #allocation9 [shape = 's32[1]{0}', space=sflag, size = 0x4, scoped, tag = 'scoped memory for qlora_bignet_forward.1']
    #allocation10 [shape = 'u8[131072]{0}', space=vmem, size = 0x20000, scoped, tag = 'output window, operand 0']
    %10 = vsyncpa [#allocation3], 0
    %s11 = scalar_lea.sflag [#allocation3], 1
    %12 = vsyncpa %s11, 0
    %13 = vsyncpa [#allocation6], 0
    %14 = vsyncpa [#allocation9], 0
    %15 = vsyncpa [#allocation4], 0
    %s16 = scalar_lea.sflag [#allocation4], 1
    %17 = vsyncpa %s16, 0
    loop: start=0, step=1, limit=4
    $region2: #{qlora_bignet_forward.1} parent=1 // loop_pre_header
      _
    $region3: #{qlora_bignet_forward.1} parent=1 // loop_header
      %s19 = sphi 0, %s23
      %p20 = scmp.ge.s32.totalorder %s19, 4
      %s29 = sphi 0, %s31
      %s32 = sphi 0, %s29
      %s33 = sphi 0, %s32
      %s49 = sphi 0, %s33
      %s53 = sphi 0, %s53
      %s55 = sphi 0, %s53
      %s56 = sphi 0, %s55
      %s70 = sphi 0, %s56
      %s74 = sphi 0, %s74
      %s76 = sphi 0, %s74
      %s77 = sphi 0, %s76
      %s91 = sphi 0, %s77
      %s95 = sphi 0, %s95
      %s97 = sphi 0, %s95
      %s98 = sphi 0, %s97
      %s112 = sphi 0, %s98
      %s116 = sphi 0, %s116
      %s118 = sphi 0, %s116
      %s119 = sphi 0, %s118
      %s133 = sphi 0, %s119
      %s139 = sphi 0, %s141
      %s142 = sphi 0, %s139
      %s143 = sphi 0, %s142
      %s159 = sphi 0, %s143
    $region4: #{qlora_bignet_forward.1} parent=1 // loop_header_branch
      %22 = sbr.rel (%p20) target = $region8
    $region5: #{qlora_bignet_forward.1} parent=1 // loop_body
      %s24 = ssub.s32 %s19, 1
      %s25 = ssub.s32 %s19, 2
      %s26 = sadd.s32 %s19, 1
      %s27 = ssub.s32 %s19, %s26
      %p28 = scmp.eq.s32.totalorder %s27, 0
      %s30 = sadd.s32 %s29, 1
      %s31 = scalar_select %p28, %s29, %s30
      %p34 = pneg %p28
      %p35 = scmp.eq.s32.totalorder %s19, 1
      %p36 = por %p34, %p35
      %p37 = scmp.ne.s32.totalorder %s29, %s32
      %p38 = scmp.eq.s32.totalorder %s19, 0
      %p39 = por %p37, %p38
      %p40 = scmp.ne.s32.totalorder %s29, %s32
      %p41 = scmp.eq.s32.totalorder %s24, 1
      %p42 = por %p40, %p41
      %p43 = scmp.ne.s32.totalorder %s32, %s33
      %p44 = scmp.eq.s32.totalorder %s24, 0
      %p45 = por %p43, %p44
      %p46 = scmp.ne.s32.totalorder %s32, %s33
      %p47 = scmp.eq.s32.totalorder %s25, 1
      %p48 = por %p46, %p47
      %p50 = scmp.ne.s32.totalorder %s33, %s49
      %p51 = scmp.eq.s32.totalorder %s25, 0
      %p52 = por %p50, %p51
      %s54 = sadd.s32 %s53, 1
      %p57 = scmp.eq.s32.totalorder %s19, 1
      %p58 = scmp.ne.s32.totalorder %s53, %s55
      %p59 = scmp.eq.s32.totalorder %s19, 0
      %p60 = por %p58, %p59
      %p61 = scmp.ne.s32.totalorder %s53, %s55
      %p62 = scmp.eq.s32.totalorder %s24, 1
      %p63 = por %p61, %p62
      %p64 = scmp.ne.s32.totalorder %s55, %s56
      %p65 = scmp.eq.s32.totalorder %s24, 0
      %p66 = por %p64, %p65
      %p67 = scmp.ne.s32.totalorder %s55, %s56
      %p68 = scmp.eq.s32.totalorder %s25, 1
      %p69 = por %p67, %p68
      %p71 = scmp.ne.s32.totalorder %s56, %s70
      %p72 = scmp.eq.s32.totalorder %s25, 0
      %p73 = por %p71, %p72
      %s75 = sadd.s32 %s74, 1
      %p78 = scmp.eq.s32.totalorder %s19, 1
      %p79 = scmp.ne.s32.totalorder %s74, %s76
      %p80 = scmp.eq.s32.totalorder %s19, 0
      %p81 = por %p79, %p80
      %p82 = scmp.ne.s32.totalorder %s74, %s76
      %p83 = scmp.eq.s32.totalorder %s24, 1
      %p84 = por %p82, %p83
      %p85 = scmp.ne.s32.totalorder %s76, %s77
      %p86 = scmp.eq.s32.totalorder %s24, 0
      %p87 = por %p85, %p86
      %p88 = scmp.ne.s32.totalorder %s76, %s77
      %p89 = scmp.eq.s32.totalorder %s25, 1
      %p90 = por %p88, %p89
      %p92 = scmp.ne.s32.totalorder %s77, %s91
      %p93 = scmp.eq.s32.totalorder %s25, 0
      %p94 = por %p92, %p93
      %s96 = sadd.s32 %s95, 1
      %p99 = scmp.eq.s32.totalorder %s19, 1
      %p100 = scmp.ne.s32.totalorder %s95, %s97
      %p101 = scmp.eq.s32.totalorder %s19, 0
      %p102 = por %p100, %p101
      %p103 = scmp.ne.s32.totalorder %s95, %s97
      %p104 = scmp.eq.s32.totalorder %s24, 1
      %p105 = por %p103, %p104
      %p106 = scmp.ne.s32.totalorder %s97, %s98
      %p107 = scmp.eq.s32.totalorder %s24, 0
      %p108 = por %p106, %p107
      %p109 = scmp.ne.s32.totalorder %s97, %s98
      %p110 = scmp.eq.s32.totalorder %s25, 1
      %p111 = por %p109, %p110
      %p113 = scmp.ne.s32.totalorder %s98, %s112
      %p114 = scmp.eq.s32.totalorder %s25, 0
      %p115 = por %p113, %p114
      %s117 = sadd.s32 %s116, 1
      %p120 = scmp.eq.s32.totalorder %s19, 1
      %p121 = scmp.ne.s32.totalorder %s116, %s118
      %p122 = scmp.eq.s32.totalorder %s19, 0
      %p123 = por %p121, %p122
      %p124 = scmp.ne.s32.totalorder %s116, %s118
      %p125 = scmp.eq.s32.totalorder %s24, 1
      %p126 = por %p124, %p125
      %p127 = scmp.ne.s32.totalorder %s118, %s119
      %p128 = scmp.eq.s32.totalorder %s24, 0
      %p129 = por %p127, %p128
      %p130 = scmp.ne.s32.totalorder %s118, %s119
      %p131 = scmp.eq.s32.totalorder %s25, 1
      %p132 = por %p130, %p131
      %p134 = scmp.ne.s32.totalorder %s119, %s133
      %p135 = scmp.eq.s32.totalorder %s25, 0
      %p136 = por %p134, %p135
      %s137 = ssub.s32 %s19, %s26
      %p138 = scmp.eq.s32.totalorder %s137, 0
      %s140 = sadd.s32 %s139, 1
      %s141 = scalar_select %p138, %s139, %s140
      %p144 = pneg %p138
      %p145 = scmp.eq.s32.totalorder %s19, 1
      %p146 = por %p144, %p145
      %p147 = scmp.ne.s32.totalorder %s139, %s142
      %p148 = scmp.eq.s32.totalorder %s19, 0
      %p149 = por %p147, %p148
      %p150 = scmp.ne.s32.totalorder %s139, %s142
      %p151 = scmp.eq.s32.totalorder %s24, 1
      %p152 = por %p150, %p151
      %p153 = scmp.ne.s32.totalorder %s142, %s143
      %p154 = scmp.eq.s32.totalorder %s24, 0
      %p155 = por %p153, %p154
      %p156 = scmp.ne.s32.totalorder %s142, %s143
      %p157 = scmp.eq.s32.totalorder %s25, 1
      %p158 = por %p156, %p157
      %p160 = scmp.ne.s32.totalorder %s143, %s159
      %p161 = scmp.eq.s32.totalorder %s25, 0
      %p162 = por %p160, %p161
      %p163 = scmp.le.s32.totalorder 1, %s19
      %p164 = scmp.lt.s32.totalorder %s19, 3
      %p165 = pnand %p163, %p164
      %p166 = pneg %p165
      // Predicated region
      $region9: #{qlora_bignet_forward.1} parent=5 // pred_check
        _
      $region10: #{qlora_bignet_forward.1} parent=5 // pred_check_branch
        %168 = sbr.rel (%p165) target = $region12
      $region11: #{qlora_bignet_forward.1} parent=5 // pred_region
        %s169 = ssub.s32 %s19, 1
        // Predicated region
        $region13: #{qlora_bignet_forward.1} parent=11 // pred_check
          %p170 = pneg %p66
        $region14: #{qlora_bignet_forward.1} parent=11 // pred_check_branch
          %172 = sbr.rel (%p170) target = $region16
        $region15: #{qlora_bignet_forward.1} parent=11 // pred_region
          %s174 = ssub.s32 18432, 18432
          %175 = vsyncadd [#allocation6], %s174
          %s176 = sshll.u32 [#allocation5], 4
          %s177 = int_to_ptr.vmem [resolvable:$true] %s176
          %182 = dma.hbm_to_vmem [thread:$0]  %s1, 18432, %s177, [#allocation6], 64, 64, 4
        $region16: #{qlora_bignet_forward.1} parent=11 // pred_fallthru
          _
        // Predicated region
        $region17: #{qlora_bignet_forward.1} parent=11 // pred_check
          %p183 = pneg %p87
        $region18: #{qlora_bignet_forward.1} parent=11 // pred_check_branch
          %185 = sbr.rel (%p183) target = $region20
        $region19: #{qlora_bignet_forward.1} parent=11 // pred_region
          %s187 = ssub.s32 288, 288
          %188 = vsyncadd [#allocation6], %s187
          %s189 = sshll.u32 [#allocation7], 4
          %s190 = int_to_ptr.vmem [resolvable:$true] %s189
          %195 = dma.hbm_to_vmem [thread:$0]  %s2, 288, %s190, [#allocation6], 16, 16, 1
        $region20: #{qlora_bignet_forward.1} parent=11 // pred_fallthru
          _
        // Predicated region
        $region21: #{qlora_bignet_forward.1} parent=11 // pred_check
          %p196 = pneg %p108
        $region22: #{qlora_bignet_forward.1} parent=11 // pred_check_branch
          %198 = sbr.rel (%p196) target = $region24
        $region23: #{qlora_bignet_forward.1} parent=11 // pred_region
          _
        $region24: #{qlora_bignet_forward.1} parent=11 // pred_fallthru
          _
        // Predicated region
        $region25: #{qlora_bignet_forward.1} parent=11 // pred_check
          %p199 = pneg %p129
        $region26: #{qlora_bignet_forward.1} parent=11 // pred_check_branch
          %201 = sbr.rel (%p199) target = $region28
        $region27: #{qlora_bignet_forward.1} parent=11 // pred_region
          %s203 = ssub.s32 80, 80
          %204 = vsyncadd [#allocation9], %s203
          %s205 = sshll.u32 [#allocation8], 4
          %s206 = int_to_ptr.vmem [resolvable:$true] %s205
          %211 = dma.hbm_to_vmem [thread:$0]  %s4, 80, %s206, [#allocation9], 16, 16, 1
        $region28: #{qlora_bignet_forward.1} parent=11 // pred_fallthru
          _
      $region12: #{qlora_bignet_forward.1} parent=5 // pred_fallthru
        _
      %p212 = scmp.lt.s32.totalorder %s19, 2
      // Predicated region
      $region29: #{qlora_bignet_forward.1} parent=5 // pred_check
        %p213 = pneg %p212
      $region30: #{qlora_bignet_forward.1} parent=5 // pred_check_branch
        %215 = sbr.rel (%p213) target = $region32
      $region31: #{qlora_bignet_forward.1} parent=5 // pred_region
        // Predicated region
        $region33: #{qlora_bignet_forward.1} parent=31 // pred_check
          %p216 = pneg %p39
        $region34: #{qlora_bignet_forward.1} parent=31 // pred_check_branch
          %218 = sbr.rel (%p216) target = $region36
        $region35: #{qlora_bignet_forward.1} parent=31 // pred_region
          %s219 = sand.u32 %s29, 1
          %s220 = scalar_lea.sflag [#allocation3], %s219
          %s221 = sand.u32 %s29, 1
          %s222 = smul.addr %s221, 128
          %s223 = scalar_lea.vmem [#allocation2], %s222
          %s224 = smul.u32 16, %s19
          %s226 = ssub.s32 2048, 2048
          %227 = vsyncadd %s220, %s226
          %s228 = smul.addr %s224, 128
          %s229 = scalar_lea.hbm %s0, %s228
          %s230 = sshll.u32 %s223, 4
          %s231 = int_to_ptr.vmem [resolvable:$true] %s230
          %236 = dma.hbm_to_vmem [thread:$0]  %s229, 2048, %s231, %s220, 128, 128, 8
        $region36: #{qlora_bignet_forward.1} parent=31 // pred_fallthru
          _
      $region32: #{qlora_bignet_forward.1} parent=5 // pred_fallthru
        _
      %p237 = scmp.le.s32.totalorder 1, %s19
      %p238 = scmp.lt.s32.totalorder %s19, 3
      %p239 = pnand %p237, %p238
      %p240 = pneg %p239
      // Predicated region
      $region37: #{qlora_bignet_forward.1} parent=5 // pred_check
        _
      $region38: #{qlora_bignet_forward.1} parent=5 // pred_check_branch
        %242 = sbr.rel (%p239) target = $region40
      $region39: #{qlora_bignet_forward.1} parent=5 // pred_region
        %s243 = ssub.s32 %s19, 1
        %s244 = sand.u32 %s32, 1
        %s245 = scalar_lea.sflag [#allocation3], %s244
        %s246 = sand.u32 %s32, 1
        %s247 = smul.addr %s246, 128
        %s248 = scalar_lea.vmem [#allocation2], %s247
        // Predicated region
        $region41: #{qlora_bignet_forward.1} parent=39 // pred_check
          %p249 = pneg %p45
        $region42: #{qlora_bignet_forward.1} parent=39 // pred_check_branch
          %251 = sbr.rel (%p249) target = $region44
        $region43: #{qlora_bignet_forward.1} parent=39 // pred_region
          %252 = dma.done %s245, 2048
        $region44: #{qlora_bignet_forward.1} parent=39 // pred_fallthru
          _
        // Predicated region
        $region45: #{qlora_bignet_forward.1} parent=39 // pred_check
          %p253 = pneg %p66
        $region46: #{qlora_bignet_forward.1} parent=39 // pred_check_branch
          %255 = sbr.rel (%p253) target = $region48
        $region47: #{qlora_bignet_forward.1} parent=39 // pred_region
          %256 = dma.done [#allocation6], 18432
        $region48: #{qlora_bignet_forward.1} parent=39 // pred_fallthru
          _
        // Predicated region
        $region49: #{qlora_bignet_forward.1} parent=39 // pred_check
          %p257 = pneg %p87
        $region50: #{qlora_bignet_forward.1} parent=39 // pred_check_branch
          %259 = sbr.rel (%p257) target = $region52
        $region51: #{qlora_bignet_forward.1} parent=39 // pred_region
          %260 = dma.done [#allocation6], 288
        $region52: #{qlora_bignet_forward.1} parent=39 // pred_fallthru
          _
        // Predicated region
        $region53: #{qlora_bignet_forward.1} parent=39 // pred_check
          %p261 = pneg %p129
        $region54: #{qlora_bignet_forward.1} parent=39 // pred_check_branch
          %263 = sbr.rel (%p261) target = $region56
        $region55: #{qlora_bignet_forward.1} parent=39 // pred_region
          %264 = dma.done [#allocation9], 80
        $region56: #{qlora_bignet_forward.1} parent=39 // pred_fallthru
          _
        %s265 = sand.u32 %s32, 1
        %s266 = scalar_lea.sflag [#allocation3], %s265
        %s267 = sand.u32 %s32, 1
        %s268 = smul.addr %s267, 128
        %s269 = scalar_lea.vmem [#allocation2], %s268
        %p270 = pneg %p45
        %p271 = pneg %p42
        %p272 = pneg %p66
        %p273 = pneg %p63
        %p274 = pneg %p87
        %p275 = pneg %p84
        %p276 = pneg %p108
        %p277 = pneg %p105
        %p278 = pneg %p129
        %p279 = pneg %p126
        %p280 = pneg %p155
        %p281 = pneg %p152
        %s282 = sand.u32 %s142, 1
        %s283 = scalar_lea.sflag [#allocation4], %s282
        %s284 = sand.u32 %s142, 1
        %s285 = smul.addr %s284, 128
        %s286 = scalar_lea.vmem [#allocation10], %s285
        %s287 = smul.u32 16, %s24
        %s288 = smul.u32 16, %s24
        %v290 = vld [vmem:[%s248] sm:$0xff]
        %v291 = vld [vmem:[%s248 + $0x8] sm:$0xff]
        %v292 = vld [vmem:[%s248 + $0x10] sm:$0xff]
        %v293 = vld [vmem:[%s248 + $0x18] sm:$0xff]
        %v294 = vld [vmem:[%s248 + $0x20] sm:$0xff]
        %v295 = vld [vmem:[%s248 + $0x28] sm:$0xff]
        %v296 = vld [vmem:[%s248 + $0x30] sm:$0xff]
        %v297 = vld [vmem:[%s248 + $0x38] sm:$0xff]
        %v298 = vld [vmem:[%s248 + $0x40] sm:$0xff]
        %v299 = vld [vmem:[%s248 + $0x48] sm:$0xff]
        %v300 = vld [vmem:[%s248 + $0x50] sm:$0xff]
        %v301 = vld [vmem:[%s248 + $0x58] sm:$0xff]
        %v302 = vld [vmem:[%s248 + $0x60] sm:$0xff]
        %v303 = vld [vmem:[%s248 + $0x68] sm:$0xff]
        %v304 = vld [vmem:[%s248 + $0x70] sm:$0xff]
        %v305 = vld [vmem:[%s248 + $0x78] sm:$0xff]
        %v306 = vpack.c.bf16 %v291, %v290
        %v307 = vpack.c.bf16 %v293, %v292
        %v308 = vpack.c.bf16 %v295, %v294
        %v309 = vpack.c.bf16 %v297, %v296
        %v310 = vpack.c.bf16 %v299, %v298
        %v311 = vpack.c.bf16 %v301, %v300
        %v312 = vpack.c.bf16 %v303, %v302
        %v313 = vpack.c.bf16 %v305, %v304
        %v314 = vld [vmem:[#allocation5] sm:$0xf]
        %v315 = vld [vmem:[#allocation5 + $0x4] sm:$0xf]
        %v316 = vld [vmem:[#allocation5 + $0x8] sm:$0xf]
        %v317 = vld [vmem:[#allocation5 + $0xc] sm:$0xf]
        %v318 = vld [vmem:[#allocation5 + $0x10] sm:$0xf]
        %v319 = vld [vmem:[#allocation5 + $0x14] sm:$0xf]
        %v320 = vld [vmem:[#allocation5 + $0x18] sm:$0xf]
        %v321 = vld [vmem:[#allocation5 + $0x1c] sm:$0xf]
        %v322 = vld [vmem:[#allocation5 + $0x20] sm:$0xf]
        %v323 = vld [vmem:[#allocation5 + $0x24] sm:$0xf]
        %v324 = vld [vmem:[#allocation5 + $0x28] sm:$0xf]
        %v325 = vld [vmem:[#allocation5 + $0x2c] sm:$0xf]
        %v326 = vld [vmem:[#allocation5 + $0x30] sm:$0xf]
        %v327 = vld [vmem:[#allocation5 + $0x34] sm:$0xf]
        %v328 = vld [vmem:[#allocation5 + $0x38] sm:$0xf]
        %v329 = vld [vmem:[#allocation5 + $0x3c] sm:$0xf]
        %v330 = vld [vmem:[#allocation7] sm:$0x1]
        %v332 = vlaneseq
        %v333 = vshrl.u32 %v332, 7
        %v334 = vsub.s32 0, %v333
        %v335 = vrot.slane %v330, %v334
        %v353 = vunpack.c.l.b16 %v314
        %v354 = vunpack.c.l.b16 %v315
        %v355 = vunpack.c.l.b16 %v316
        %v356 = vunpack.c.l.b16 %v317
        %v357 = vunpack.c.l.b16 %v318
        %v358 = vunpack.c.l.b16 %v319
        %v359 = vunpack.c.l.b16 %v320
        %v360 = vunpack.c.l.b16 %v321
        %v361 = vunpack.c.l.b16 %v322
        %v362 = vunpack.c.l.b16 %v323
        %v363 = vunpack.c.l.b16 %v324
        %v364 = vunpack.c.l.b16 %v325
        %v365 = vunpack.c.l.b16 %v326
        %v366 = vunpack.c.l.b16 %v327
        %v367 = vunpack.c.l.b16 %v328
        %v368 = vunpack.c.l.b16 %v329
        %v369 = vpack.c.b16 %v354, %v353
        %v370 = vpack.c.b16 %v356, %v355
        %v371 = vpack.c.b16 %v358, %v357
        %v372 = vpack.c.b16 %v360, %v359
        %v373 = vpack.c.b16 %v362, %v361
        %v374 = vpack.c.b16 %v364, %v363
        %v375 = vpack.c.b16 %v366, %v365
        %v376 = vpack.c.b16 %v368, %v367
        %385 = vmatprep.subr.bf16.mxu0 0
        %386 = vmatpush1.bf16.msra.mxu0 %v376
        %387 = vmatprep.subr.bf16.mxu0 0
        %388 = vmatpush1.bf16.msra.mxu0 %v375
        %389 = vmatprep.subr.bf16.mxu0 0
        %390 = vmatpush1.bf16.msra.mxu0 %v374
        %391 = vmatprep.subr.bf16.mxu0 0
        %392 = vmatpush1.bf16.msra.mxu0 %v373
        %393 = vmatprep.subr.bf16.mxu0 0
        %394 = vmatpush1.bf16.msra.mxu0 %v372
        %395 = vmatprep.subr.bf16.mxu0 0
        %396 = vmatpush1.bf16.msra.mxu0 %v371
        %397 = vmatprep.subr.bf16.mxu0 0
        %398 = vmatpush1.bf16.msra.mxu0 %v370
        %399 = vmatprep.subr.bf16.mxu0 0
        %400 = vmatpush1.bf16.msra.mxu0 %v369
        %401 = vmatprep.subr.bf16.mxu0 0
        %402 = vmatpush2.bf16.msra.mxu0 0
        %403 = vmatprep.subr.bf16.mxu0 0
        %404 = vmatpush2.bf16.msra.mxu0 0
        %405 = vmatprep.subr.bf16.mxu0 0
        %406 = vmatpush2.bf16.msra.mxu0 0
        %407 = vmatprep.subr.bf16.mxu0 0
        %408 = vmatpush2.bf16.msra.mxu0 0
        %409 = vmatprep.subr.bf16.mxu0 0
        %410 = vmatpush2.bf16.msra.mxu0 0
        %411 = vmatprep.subr.bf16.mxu0 0
        %412 = vmatpush2.bf16.msra.mxu0 0
        %413 = vmatprep.subr.bf16.mxu0 0
        %414 = vmatpush2.bf16.msra.mxu0 0
        %415 = vmatprep.subr.bf16.mxu0 0
        %416 = vmatpush2.bf16.msra.mxu0 0
        %417 = vmatprep.mubr.bf16.mxu0 0
        %418 = vmatmul.mubr.bf16.gmra.mxu0 %v306
        %v419 = vpop.f32.mrf.mxu0
        %v420 = vadd.f32 %v335, %v419
        %v421 = vpop.f32.mrf.mxu0
        %v422 = vpop.f32.mrf.mxu0
        %v423 = vadd.f32 %v335, %v422
        %v424 = vpop.f32.mrf.mxu0
        %425 = vmatprep.mubr.bf16.mxu0 0
        %426 = vmatmul.mubr.bf16.gmra.mxu0 %v307
        %v427 = vpop.f32.mrf.mxu0
        %v428 = vadd.f32 %v335, %v427
        %v429 = vpop.f32.mrf.mxu0
        %v430 = vpop.f32.mrf.mxu0
        %v431 = vadd.f32 %v335, %v430
        %v432 = vpop.f32.mrf.mxu0
        %433 = vmatprep.mubr.bf16.mxu0 0
        %434 = vmatmul.mubr.bf16.gmra.mxu0 %v308
        %v435 = vpop.f32.mrf.mxu0
        %v436 = vadd.f32 %v335, %v435
        %v437 = vpop.f32.mrf.mxu0
        %v438 = vpop.f32.mrf.mxu0
        %v439 = vadd.f32 %v335, %v438
        %v440 = vpop.f32.mrf.mxu0
        %441 = vmatprep.mubr.bf16.mxu0 0
        %442 = vmatmul.mubr.bf16.gmra.mxu0 %v309
        %v443 = vpop.f32.mrf.mxu0
        %v444 = vadd.f32 %v335, %v443
        %v445 = vpop.f32.mrf.mxu0
        %v446 = vpop.f32.mrf.mxu0
        %v447 = vadd.f32 %v335, %v446
        %v448 = vpop.f32.mrf.mxu0
        %449 = vmatprep.mubr.bf16.mxu0 0
        %450 = vmatmul.mubr.bf16.gmra.mxu0 %v310
        %v451 = vpop.f32.mrf.mxu0
        %v452 = vadd.f32 %v335, %v451
        %v453 = vpop.f32.mrf.mxu0
        %v454 = vpop.f32.mrf.mxu0
        %v455 = vadd.f32 %v335, %v454
        %v456 = vpop.f32.mrf.mxu0
        %457 = vmatprep.mubr.bf16.mxu0 0
        %458 = vmatmul.mubr.bf16.gmra.mxu0 %v311
        %v459 = vpop.f32.mrf.mxu0
        %v460 = vadd.f32 %v335, %v459
        %v461 = vpop.f32.mrf.mxu0
        %v462 = vpop.f32.mrf.mxu0
        %v463 = vadd.f32 %v335, %v462
        %v464 = vpop.f32.mrf.mxu0
        %465 = vmatprep.mubr.bf16.mxu0 0
        %466 = vmatmul.mubr.bf16.gmra.mxu0 %v312
        %v467 = vpop.f32.mrf.mxu0
        %v468 = vadd.f32 %v335, %v467
        %v469 = vpop.f32.mrf.mxu0
        %v470 = vpop.f32.mrf.mxu0
        %v471 = vadd.f32 %v335, %v470
        %v472 = vpop.f32.mrf.mxu0
        %473 = vmatprep.mubr.bf16.mxu0 0
        %474 = vmatmul.mubr.bf16.gmra.mxu0 %v313
        %v475 = vpop.f32.mrf.mxu0
        %v476 = vadd.f32 %v335, %v475
        %v477 = vpop.f32.mrf.mxu0
        %v478 = vpop.f32.mrf.mxu0
        %v479 = vadd.f32 %v335, %v478
        %v480 = vpop.f32.mrf.mxu0
        %481 = vdwg.mxu0
        %v482 = vmax.f32 %v420, 0.0
        %v483 = vmax.f32 %v423, 0.0
        %v484 = vmax.f32 %v428, 0.0
        %v485 = vmax.f32 %v431, 0.0
        %v486 = vmax.f32 %v436, 0.0
        %v487 = vmax.f32 %v439, 0.0
        %v488 = vmax.f32 %v444, 0.0
        %v489 = vmax.f32 %v447, 0.0
        %v490 = vmax.f32 %v452, 0.0
        %v491 = vmax.f32 %v455, 0.0
        %v492 = vmax.f32 %v460, 0.0
        %v493 = vmax.f32 %v463, 0.0
        %v494 = vmax.f32 %v468, 0.0
        %v495 = vmax.f32 %v471, 0.0
        %v496 = vmax.f32 %v476, 0.0
        %v497 = vmax.f32 %v479, 0.0
        %v498 = vpack.c.bf16 %v483, %v482
        %v499 = vpack.c.bf16 %v485, %v484
        %v500 = vpack.c.bf16 %v487, %v486
        %v501 = vpack.c.bf16 %v489, %v488
        %v502 = vpack.c.bf16 %v491, %v490
        %v503 = vpack.c.bf16 %v493, %v492
        %v504 = vpack.c.bf16 %v495, %v494
        %v505 = vpack.c.bf16 %v497, %v496
        %s506 = scalar_lea.vmem [#allocation5], 64
        %v507 = vld [vmem:[%s506] sm:$0xf]
        %v508 = vld [vmem:[%s506 + $0x4] sm:$0xf]
        %v509 = vld [vmem:[%s506 + $0x8] sm:$0xf]
        %v510 = vld [vmem:[%s506 + $0xc] sm:$0xf]
        %v511 = vld [vmem:[%s506 + $0x10] sm:$0xf]
        %v512 = vld [vmem:[%s506 + $0x14] sm:$0xf]
        %v513 = vld [vmem:[%s506 + $0x18] sm:$0xf]
        %v514 = vld [vmem:[%s506 + $0x1c] sm:$0xf]
        %v515 = vld [vmem:[%s506 + $0x20] sm:$0xf]
        %v516 = vld [vmem:[%s506 + $0x24] sm:$0xf]
        %v517 = vld [vmem:[%s506 + $0x28] sm:$0xf]
        %v518 = vld [vmem:[%s506 + $0x2c] sm:$0xf]
        %v519 = vld [vmem:[%s506 + $0x30] sm:$0xf]
        %v520 = vld [vmem:[%s506 + $0x34] sm:$0xf]
        %v521 = vld [vmem:[%s506 + $0x38] sm:$0xf]
        %v522 = vld [vmem:[%s506 + $0x3c] sm:$0xf]
        %s523 = scalar_lea.vmem [#allocation7], 1
        %v524 = vld [vmem:[%s523] sm:$0x1]
        %v526 = vlaneseq
        %v527 = vshrl.u32 %v526, 7
        %v528 = vsub.s32 0, %v527
        %v529 = vrot.slane %v524, %v528
        %v547 = vunpack.c.l.b16 %v507
        %v548 = vunpack.c.l.b16 %v508
        %v549 = vunpack.c.l.b16 %v509
        %v550 = vunpack.c.l.b16 %v510
        %v551 = vunpack.c.l.b16 %v511
        %v552 = vunpack.c.l.b16 %v512
        %v553 = vunpack.c.l.b16 %v513
        %v554 = vunpack.c.l.b16 %v514
        %v555 = vunpack.c.l.b16 %v515
        %v556 = vunpack.c.l.b16 %v516
        %v557 = vunpack.c.l.b16 %v517
        %v558 = vunpack.c.l.b16 %v518
        %v559 = vunpack.c.l.b16 %v519
        %v560 = vunpack.c.l.b16 %v520
        %v561 = vunpack.c.l.b16 %v521
        %v562 = vunpack.c.l.b16 %v522
        %v563 = vpack.c.b16 %v548, %v547
        %v564 = vpack.c.b16 %v550, %v549
        %v565 = vpack.c.b16 %v552, %v551
        %v566 = vpack.c.b16 %v554, %v553
        %v567 = vpack.c.b16 %v556, %v555
        %v568 = vpack.c.b16 %v558, %v557
        %v569 = vpack.c.b16 %v560, %v559
        %v570 = vpack.c.b16 %v562, %v561
        %579 = vmatprep.subr.bf16.mxu0 0
        %580 = vmatpush1.bf16.msra.mxu0 %v570
        %581 = vmatprep.subr.bf16.mxu0 0
        %582 = vmatpush1.bf16.msra.mxu0 %v569
        %583 = vmatprep.subr.bf16.mxu0 0
        %584 = vmatpush1.bf16.msra.mxu0 %v568
        %585 = vmatprep.subr.bf16.mxu0 0
        %586 = vmatpush1.bf16.msra.mxu0 %v567
        %587 = vmatprep.subr.bf16.mxu0 0
        %588 = vmatpush1.bf16.msra.mxu0 %v566
        %589 = vmatprep.subr.bf16.mxu0 0
        %590 = vmatpush1.bf16.msra.mxu0 %v565
        %591 = vmatprep.subr.bf16.mxu0 0
        %592 = vmatpush1.bf16.msra.mxu0 %v564
        %593 = vmatprep.subr.bf16.mxu0 0
        %594 = vmatpush1.bf16.msra.mxu0 %v563
        %595 = vmatprep.subr.bf16.mxu0 0
        %596 = vmatpush2.bf16.msra.mxu0 0
        %597 = vmatprep.subr.bf16.mxu0 0
        %598 = vmatpush2.bf16.msra.mxu0 0
        %599 = vmatprep.subr.bf16.mxu0 0
        %600 = vmatpush2.bf16.msra.mxu0 0
        %601 = vmatprep.subr.bf16.mxu0 0
        %602 = vmatpush2.bf16.msra.mxu0 0
        %603 = vmatprep.subr.bf16.mxu0 0
        %604 = vmatpush2.bf16.msra.mxu0 0
        %605 = vmatprep.subr.bf16.mxu0 0
        %606 = vmatpush2.bf16.msra.mxu0 0
        %607 = vmatprep.subr.bf16.mxu0 0
        %608 = vmatpush2.bf16.msra.mxu0 0
        %609 = vmatprep.subr.bf16.mxu0 0
        %610 = vmatpush2.bf16.msra.mxu0 0
        %611 = vmatprep.mubr.bf16.mxu0 0
        %612 = vmatmul.mubr.bf16.gmra.mxu0 %v498
        %v613 = vpop.f32.mrf.mxu0
        %v614 = vadd.f32 %v529, %v613
        %v615 = vpop.f32.mrf.mxu0
        %v616 = vpop.f32.mrf.mxu0
        %v617 = vadd.f32 %v529, %v616
        %v618 = vpop.f32.mrf.mxu0
        %619 = vmatprep.mubr.bf16.mxu0 0
        %620 = vmatmul.mubr.bf16.gmra.mxu0 %v499
        %v621 = vpop.f32.mrf.mxu0
        %v622 = vadd.f32 %v529, %v621
        %v623 = vpop.f32.mrf.mxu0
        %v624 = vpop.f32.mrf.mxu0
        %v625 = vadd.f32 %v529, %v624
        %v626 = vpop.f32.mrf.mxu0
        %627 = vmatprep.mubr.bf16.mxu0 0
        %628 = vmatmul.mubr.bf16.gmra.mxu0 %v500
        %v629 = vpop.f32.mrf.mxu0
        %v630 = vadd.f32 %v529, %v629
        %v631 = vpop.f32.mrf.mxu0
        %v632 = vpop.f32.mrf.mxu0
        %v633 = vadd.f32 %v529, %v632
        %v634 = vpop.f32.mrf.mxu0
        %635 = vmatprep.mubr.bf16.mxu0 0
        %636 = vmatmul.mubr.bf16.gmra.mxu0 %v501
        %v637 = vpop.f32.mrf.mxu0
        %v638 = vadd.f32 %v529, %v637
        %v639 = vpop.f32.mrf.mxu0
        %v640 = vpop.f32.mrf.mxu0
        %v641 = vadd.f32 %v529, %v640
        %v642 = vpop.f32.mrf.mxu0
        %643 = vmatprep.mubr.bf16.mxu0 0
        %644 = vmatmul.mubr.bf16.gmra.mxu0 %v502
        %v645 = vpop.f32.mrf.mxu0
        %v646 = vadd.f32 %v529, %v645
        %v647 = vpop.f32.mrf.mxu0
        %v648 = vpop.f32.mrf.mxu0
        %v649 = vadd.f32 %v529, %v648
        %v650 = vpop.f32.mrf.mxu0
        %651 = vmatprep.mubr.bf16.mxu0 0
        %652 = vmatmul.mubr.bf16.gmra.mxu0 %v503
        %v653 = vpop.f32.mrf.mxu0
        %v654 = vadd.f32 %v529, %v653
        %v655 = vpop.f32.mrf.mxu0
        %v656 = vpop.f32.mrf.mxu0
        %v657 = vadd.f32 %v529, %v656
        %v658 = vpop.f32.mrf.mxu0
        %659 = vmatprep.mubr.bf16.mxu0 0
        %660 = vmatmul.mubr.bf16.gmra.mxu0 %v504
        %v661 = vpop.f32.mrf.mxu0
        %v662 = vadd.f32 %v529, %v661
        %v663 = vpop.f32.mrf.mxu0
        %v664 = vpop.f32.mrf.mxu0
        %v665 = vadd.f32 %v529, %v664
        %v666 = vpop.f32.mrf.mxu0
        %667 = vmatprep.mubr.bf16.mxu0 0
        %668 = vmatmul.mubr.bf16.gmra.mxu0 %v505
        %v669 = vpop.f32.mrf.mxu0
        %v670 = vadd.f32 %v529, %v669
        %v671 = vpop.f32.mrf.mxu0
        %v672 = vpop.f32.mrf.mxu0
        %v673 = vadd.f32 %v529, %v672
        %v674 = vpop.f32.mrf.mxu0
        %675 = vdwg.mxu0
        %v676 = vmax.f32 %v614, 0.0
        %v677 = vmax.f32 %v617, 0.0
        %v678 = vmax.f32 %v622, 0.0
        %v679 = vmax.f32 %v625, 0.0
        %v680 = vmax.f32 %v630, 0.0
        %v681 = vmax.f32 %v633, 0.0
        %v682 = vmax.f32 %v638, 0.0
        %v683 = vmax.f32 %v641, 0.0
        %v684 = vmax.f32 %v646, 0.0
        %v685 = vmax.f32 %v649, 0.0
        %v686 = vmax.f32 %v654, 0.0
        %v687 = vmax.f32 %v657, 0.0
        %v688 = vmax.f32 %v662, 0.0
        %v689 = vmax.f32 %v665, 0.0
        %v690 = vmax.f32 %v670, 0.0
        %v691 = vmax.f32 %v673, 0.0
        %v692 = vpack.c.bf16 %v677, %v676
        %v693 = vpack.c.bf16 %v679, %v678
        %v694 = vpack.c.bf16 %v681, %v680
        %v695 = vpack.c.bf16 %v683, %v682
        %v696 = vpack.c.bf16 %v685, %v684
        %v697 = vpack.c.bf16 %v687, %v686
        %v698 = vpack.c.bf16 %v689, %v688
        %v699 = vpack.c.bf16 %v691, %v690
        %s700 = scalar_lea.vmem [#allocation5], 128
        %v701 = vld [vmem:[%s700] sm:$0xf]
        %v702 = vld [vmem:[%s700 + $0x4] sm:$0xf]
        %v703 = vld [vmem:[%s700 + $0x8] sm:$0xf]
        %v704 = vld [vmem:[%s700 + $0xc] sm:$0xf]
        %v705 = vld [vmem:[%s700 + $0x10] sm:$0xf]
        %v706 = vld [vmem:[%s700 + $0x14] sm:$0xf]
        %v707 = vld [vmem:[%s700 + $0x18] sm:$0xf]
        %v708 = vld [vmem:[%s700 + $0x1c] sm:$0xf]
        %v709 = vld [vmem:[%s700 + $0x20] sm:$0xf]
        %v710 = vld [vmem:[%s700 + $0x24] sm:$0xf]
        %v711 = vld [vmem:[%s700 + $0x28] sm:$0xf]
        %v712 = vld [vmem:[%s700 + $0x2c] sm:$0xf]
        %v713 = vld [vmem:[%s700 + $0x30] sm:$0xf]
        %v714 = vld [vmem:[%s700 + $0x34] sm:$0xf]
        %v715 = vld [vmem:[%s700 + $0x38] sm:$0xf]
        %v716 = vld [vmem:[%s700 + $0x3c] sm:$0xf]
        %s717 = scalar_lea.vmem [#allocation7], 2
        %v718 = vld [vmem:[%s717] sm:$0x1]
        %v720 = vlaneseq
        %v721 = vshrl.u32 %v720, 7
        %v722 = vsub.s32 0, %v721
        %v723 = vrot.slane %v718, %v722
        %v741 = vunpack.c.l.b16 %v701
        %v742 = vunpack.c.l.b16 %v702
        %v743 = vunpack.c.l.b16 %v703
        %v744 = vunpack.c.l.b16 %v704
        %v745 = vunpack.c.l.b16 %v705
        %v746 = vunpack.c.l.b16 %v706
        %v747 = vunpack.c.l.b16 %v707
        %v748 = vunpack.c.l.b16 %v708
        %v749 = vunpack.c.l.b16 %v709
        %v750 = vunpack.c.l.b16 %v710
        %v751 = vunpack.c.l.b16 %v711
        %v752 = vunpack.c.l.b16 %v712
        %v753 = vunpack.c.l.b16 %v713
        %v754 = vunpack.c.l.b16 %v714
        %v755 = vunpack.c.l.b16 %v715
        %v756 = vunpack.c.l.b16 %v716
        %v757 = vpack.c.b16 %v742, %v741
        %v758 = vpack.c.b16 %v744, %v743
        %v759 = vpack.c.b16 %v746, %v745
        %v760 = vpack.c.b16 %v748, %v747
        %v761 = vpack.c.b16 %v750, %v749
        %v762 = vpack.c.b16 %v752, %v751
        %v763 = vpack.c.b16 %v754, %v753
        %v764 = vpack.c.b16 %v756, %v755
        %773 = vmatprep.subr.bf16.mxu0 0
        %774 = vmatpush1.bf16.msra.mxu0 %v764
        %775 = vmatprep.subr.bf16.mxu0 0
        %776 = vmatpush1.bf16.msra.mxu0 %v763
        %777 = vmatprep.subr.bf16.mxu0 0
        %778 = vmatpush1.bf16.msra.mxu0 %v762
        %779 = vmatprep.subr.bf16.mxu0 0
        %780 = vmatpush1.bf16.msra.mxu0 %v761
        %781 = vmatprep.subr.bf16.mxu0 0
        %782 = vmatpush1.bf16.msra.mxu0 %v760
        %783 = vmatprep.subr.bf16.mxu0 0
        %784 = vmatpush1.bf16.msra.mxu0 %v759
        %785 = vmatprep.subr.bf16.mxu0 0
        %786 = vmatpush1.bf16.msra.mxu0 %v758
        %787 = vmatprep.subr.bf16.mxu0 0
        %788 = vmatpush1.bf16.msra.mxu0 %v757
        %789 = vmatprep.subr.bf16.mxu0 0
        %790 = vmatpush2.bf16.msra.mxu0 0
        %791 = vmatprep.subr.bf16.mxu0 0
        %792 = vmatpush2.bf16.msra.mxu0 0
        %793 = vmatprep.subr.bf16.mxu0 0
        %794 = vmatpush2.bf16.msra.mxu0 0
        %795 = vmatprep.subr.bf16.mxu0 0
        %796 = vmatpush2.bf16.msra.mxu0 0
        %797 = vmatprep.subr.bf16.mxu0 0
        %798 = vmatpush2.bf16.msra.mxu0 0
        %799 = vmatprep.subr.bf16.mxu0 0
        %800 = vmatpush2.bf16.msra.mxu0 0
        %801 = vmatprep.subr.bf16.mxu0 0
        %802 = vmatpush2.bf16.msra.mxu0 0
        %803 = vmatprep.subr.bf16.mxu0 0
        %804 = vmatpush2.bf16.msra.mxu0 0
        %805 = vmatprep.mubr.bf16.mxu0 0
        %806 = vmatmul.mubr.bf16.gmra.mxu0 %v692
        %v807 = vpop.f32.mrf.mxu0
        %v808 = vadd.f32 %v723, %v807
        %v809 = vpop.f32.mrf.mxu0
        %v810 = vpop.f32.mrf.mxu0
        %v811 = vadd.f32 %v723, %v810
        %v812 = vpop.f32.mrf.mxu0
        %813 = vmatprep.mubr.bf16.mxu0 0
        %814 = vmatmul.mubr.bf16.gmra.mxu0 %v693
        %v815 = vpop.f32.mrf.mxu0
        %v816 = vadd.f32 %v723, %v815
        %v817 = vpop.f32.mrf.mxu0
        %v818 = vpop.f32.mrf.mxu0
        %v819 = vadd.f32 %v723, %v818
        %v820 = vpop.f32.mrf.mxu0
        %821 = vmatprep.mubr.bf16.mxu0 0
        %822 = vmatmul.mubr.bf16.gmra.mxu0 %v694
        %v823 = vpop.f32.mrf.mxu0
        %v824 = vadd.f32 %v723, %v823
        %v825 = vpop.f32.mrf.mxu0
        %v826 = vpop.f32.mrf.mxu0
        %v827 = vadd.f32 %v723, %v826
        %v828 = vpop.f32.mrf.mxu0
        %829 = vmatprep.mubr.bf16.mxu0 0
        %830 = vmatmul.mubr.bf16.gmra.mxu0 %v695
        %v831 = vpop.f32.mrf.mxu0
        %v832 = vadd.f32 %v723, %v831
        %v833 = vpop.f32.mrf.mxu0
        %v834 = vpop.f32.mrf.mxu0
        %v835 = vadd.f32 %v723, %v834
        %v836 = vpop.f32.mrf.mxu0
        %837 = vmatprep.mubr.bf16.mxu0 0
        %838 = vmatmul.mubr.bf16.gmra.mxu0 %v696
        %v839 = vpop.f32.mrf.mxu0
        %v840 = vadd.f32 %v723, %v839
        %v841 = vpop.f32.mrf.mxu0
        %v842 = vpop.f32.mrf.mxu0
        %v843 = vadd.f32 %v723, %v842
        %v844 = vpop.f32.mrf.mxu0
        %845 = vmatprep.mubr.bf16.mxu0 0
        %846 = vmatmul.mubr.bf16.gmra.mxu0 %v697
        %v847 = vpop.f32.mrf.mxu0
        %v848 = vadd.f32 %v723, %v847
        %v849 = vpop.f32.mrf.mxu0
        %v850 = vpop.f32.mrf.mxu0
        %v851 = vadd.f32 %v723, %v850
        %v852 = vpop.f32.mrf.mxu0
        %853 = vmatprep.mubr.bf16.mxu0 0
        %854 = vmatmul.mubr.bf16.gmra.mxu0 %v698
        %v855 = vpop.f32.mrf.mxu0
        %v856 = vadd.f32 %v723, %v855
        %v857 = vpop.f32.mrf.mxu0
        %v858 = vpop.f32.mrf.mxu0
        %v859 = vadd.f32 %v723, %v858
        %v860 = vpop.f32.mrf.mxu0
        %861 = vmatprep.mubr.bf16.mxu0 0
        %862 = vmatmul.mubr.bf16.gmra.mxu0 %v699
        %v863 = vpop.f32.mrf.mxu0
        %v864 = vadd.f32 %v723, %v863
        %v865 = vpop.f32.mrf.mxu0
        %v866 = vpop.f32.mrf.mxu0
        %v867 = vadd.f32 %v723, %v866
        %v868 = vpop.f32.mrf.mxu0
        %869 = vdwg.mxu0
        %v870 = vadd.f32 %v808, %v290
        %v871 = vadd.f32 %v811, %v291
        %v872 = vadd.f32 %v816, %v292
        %v873 = vadd.f32 %v819, %v293
        %v874 = vadd.f32 %v824, %v294
        %v875 = vadd.f32 %v827, %v295
        %v876 = vadd.f32 %v832, %v296
        %v877 = vadd.f32 %v835, %v297
        %v878 = vadd.f32 %v840, %v298
        %v879 = vadd.f32 %v843, %v299
        %v880 = vadd.f32 %v848, %v300
        %v881 = vadd.f32 %v851, %v301
        %v882 = vadd.f32 %v856, %v302
        %v883 = vadd.f32 %v859, %v303
        %v884 = vadd.f32 %v864, %v304
        %v885 = vadd.f32 %v867, %v305
        %886 = vadd.xlane.f32.xlu0 %v870
        %v887 = vpop.xlane.xlu0 %886
        %888 = vadd.xlane.f32.xlu0 %v871
        %v889 = vpop.xlane.xlu0 %888
        %890 = vadd.xlane.f32.xlu0 %v872
        %v891 = vpop.xlane.xlu0 %890
        %892 = vadd.xlane.f32.xlu0 %v873
        %v893 = vpop.xlane.xlu0 %892
        %894 = vadd.xlane.f32.xlu0 %v874
        %v895 = vpop.xlane.xlu0 %894
        %896 = vadd.xlane.f32.xlu0 %v875
        %v897 = vpop.xlane.xlu0 %896
        %898 = vadd.xlane.f32.xlu0 %v876
        %v899 = vpop.xlane.xlu0 %898
        %900 = vadd.xlane.f32.xlu0 %v877
        %v901 = vpop.xlane.xlu0 %900
        %902 = vadd.xlane.f32.xlu0 %v878
        %v903 = vpop.xlane.xlu0 %902
        %904 = vadd.xlane.f32.xlu0 %v879
        %v905 = vpop.xlane.xlu0 %904
        %906 = vadd.xlane.f32.xlu0 %v880
        %v907 = vpop.xlane.xlu0 %906
        %908 = vadd.xlane.f32.xlu0 %v881
        %v909 = vpop.xlane.xlu0 %908
        %910 = vadd.xlane.f32.xlu0 %v882
        %v911 = vpop.xlane.xlu0 %910
        %912 = vadd.xlane.f32.xlu0 %v883
        %v913 = vpop.xlane.xlu0 %912
        %914 = vadd.xlane.f32.xlu0 %v884
        %v915 = vpop.xlane.xlu0 %914
        %916 = vadd.xlane.f32.xlu0 %v885
        %v917 = vpop.xlane.xlu0 %916
        %v918 = vmul.f32 %v870, %v870
        %v919 = vmul.f32 %v871, %v871
        %v920 = vmul.f32 %v872, %v872
        %v921 = vmul.f32 %v873, %v873
        %v922 = vmul.f32 %v874, %v874
        %v923 = vmul.f32 %v875, %v875
        %v924 = vmul.f32 %v876, %v876
        %v925 = vmul.f32 %v877, %v877
        %v926 = vmul.f32 %v878, %v878
        %v927 = vmul.f32 %v879, %v879
        %v928 = vmul.f32 %v880, %v880
        %v929 = vmul.f32 %v881, %v881
        %v930 = vmul.f32 %v882, %v882
        %v931 = vmul.f32 %v883, %v883
        %v932 = vmul.f32 %v884, %v884
        %v933 = vmul.f32 %v885, %v885
        %934 = vadd.xlane.f32.xlu0 %v918
        %v935 = vpop.xlane.xlu0 %934
        %936 = vadd.xlane.f32.xlu0 %v919
        %v937 = vpop.xlane.xlu0 %936
        %938 = vadd.xlane.f32.xlu0 %v920
        %v939 = vpop.xlane.xlu0 %938
        %940 = vadd.xlane.f32.xlu0 %v921
        %v941 = vpop.xlane.xlu0 %940
        %942 = vadd.xlane.f32.xlu0 %v922
        %v943 = vpop.xlane.xlu0 %942
        %944 = vadd.xlane.f32.xlu0 %v923
        %v945 = vpop.xlane.xlu0 %944
        %946 = vadd.xlane.f32.xlu0 %v924
        %v947 = vpop.xlane.xlu0 %946
        %948 = vadd.xlane.f32.xlu0 %v925
        %v949 = vpop.xlane.xlu0 %948
        %950 = vadd.xlane.f32.xlu0 %v926
        %v951 = vpop.xlane.xlu0 %950
        %952 = vadd.xlane.f32.xlu0 %v927
        %v953 = vpop.xlane.xlu0 %952
        %954 = vadd.xlane.f32.xlu0 %v928
        %v955 = vpop.xlane.xlu0 %954
        %956 = vadd.xlane.f32.xlu0 %v929
        %v957 = vpop.xlane.xlu0 %956
        %958 = vadd.xlane.f32.xlu0 %v930
        %v959 = vpop.xlane.xlu0 %958
        %960 = vadd.xlane.f32.xlu0 %v931
        %v961 = vpop.xlane.xlu0 %960
        %962 = vadd.xlane.f32.xlu0 %v932
        %v963 = vpop.xlane.xlu0 %962
        %964 = vadd.xlane.f32.xlu0 %v933
        %v965 = vpop.xlane.xlu0 %964
        %v966 = vmul.f32 %v887, 0.0078125
        %v967 = vmul.f32 %v889, 0.0078125
        %v968 = vmul.f32 %v891, 0.0078125
        %v969 = vmul.f32 %v893, 0.0078125
        %v970 = vmul.f32 %v895, 0.0078125
        %v971 = vmul.f32 %v897, 0.0078125
        %v972 = vmul.f32 %v899, 0.0078125
        %v973 = vmul.f32 %v901, 0.0078125
        %v974 = vmul.f32 %v903, 0.0078125
        %v975 = vmul.f32 %v905, 0.0078125
        %v976 = vmul.f32 %v907, 0.0078125
        %v977 = vmul.f32 %v909, 0.0078125
        %v978 = vmul.f32 %v911, 0.0078125
        %v979 = vmul.f32 %v913, 0.0078125
        %v980 = vmul.f32 %v915, 0.0078125
        %v981 = vmul.f32 %v917, 0.0078125
        %v982 = vmul.f32 %v935, 0.0078125
        %v983 = vmul.f32 %v937, 0.0078125
        %v984 = vmul.f32 %v939, 0.0078125
        %v985 = vmul.f32 %v941, 0.0078125
        %v986 = vmul.f32 %v943, 0.0078125
        %v987 = vmul.f32 %v945, 0.0078125
        %v988 = vmul.f32 %v947, 0.0078125
        %v989 = vmul.f32 %v949, 0.0078125
        %v990 = vmul.f32 %v951, 0.0078125
        %v991 = vmul.f32 %v953, 0.0078125
        %v992 = vmul.f32 %v955, 0.0078125
        %v993 = vmul.f32 %v957, 0.0078125
        %v994 = vmul.f32 %v959, 0.0078125
        %v995 = vmul.f32 %v961, 0.0078125
        %v996 = vmul.f32 %v963, 0.0078125
        %v997 = vmul.f32 %v965, 0.0078125
        %v998 = vmul.f32 %v966, %v966
        %v999 = vmul.f32 %v967, %v967
        %v1000 = vmul.f32 %v968, %v968
        %v1001 = vmul.f32 %v969, %v969
        %v1002 = vmul.f32 %v970, %v970
        %v1003 = vmul.f32 %v971, %v971
        %v1004 = vmul.f32 %v972, %v972
        %v1005 = vmul.f32 %v973, %v973
        %v1006 = vmul.f32 %v974, %v974
        %v1007 = vmul.f32 %v975, %v975
        %v1008 = vmul.f32 %v976, %v976
        %v1009 = vmul.f32 %v977, %v977
        %v1010 = vmul.f32 %v978, %v978
        %v1011 = vmul.f32 %v979, %v979
        %v1012 = vmul.f32 %v980, %v980
        %v1013 = vmul.f32 %v981, %v981
        %v1014 = vsub.f32 %v982, %v998
        %v1015 = vsub.f32 %v983, %v999
        %v1016 = vsub.f32 %v984, %v1000
        %v1017 = vsub.f32 %v985, %v1001
        %v1018 = vsub.f32 %v986, %v1002
        %v1019 = vsub.f32 %v987, %v1003
        %v1020 = vsub.f32 %v988, %v1004
        %v1021 = vsub.f32 %v989, %v1005
        %v1022 = vsub.f32 %v990, %v1006
        %v1023 = vsub.f32 %v991, %v1007
        %v1024 = vsub.f32 %v992, %v1008
        %v1025 = vsub.f32 %v993, %v1009
        %v1026 = vsub.f32 %v994, %v1010
        %v1027 = vsub.f32 %v995, %v1011
        %v1028 = vsub.f32 %v996, %v1012
        %v1029 = vsub.f32 %v997, %v1013
        %v1030 = vadd.f32 %v1014, 1e-05
        %v1031 = vadd.f32 %v1015, 1e-05
        %v1032 = vadd.f32 %v1016, 1e-05
        %v1033 = vadd.f32 %v1017, 1e-05
        %v1034 = vadd.f32 %v1018, 1e-05
        %v1035 = vadd.f32 %v1019, 1e-05
        %v1036 = vadd.f32 %v1020, 1e-05
        %v1037 = vadd.f32 %v1021, 1e-05
        %v1038 = vadd.f32 %v1022, 1e-05
        %v1039 = vadd.f32 %v1023, 1e-05
        %v1040 = vadd.f32 %v1024, 1e-05
        %v1041 = vadd.f32 %v1025, 1e-05
        %v1042 = vadd.f32 %v1026, 1e-05
        %v1043 = vadd.f32 %v1027, 1e-05
        %v1044 = vadd.f32 %v1028, 1e-05
        %v1045 = vadd.f32 %v1029, 1e-05
        %v1046 = vrsqrt.pop %v1030
        %v1047 = vrsqrt.pop %v1031
        %v1048 = vrsqrt.pop %v1032
        %v1049 = vrsqrt.pop %v1033
        %v1050 = vrsqrt.pop %v1034
        %v1051 = vrsqrt.pop %v1035
        %v1052 = vrsqrt.pop %v1036
        %v1053 = vrsqrt.pop %v1037
        %v1054 = vrsqrt.pop %v1038
        %v1055 = vrsqrt.pop %v1039
        %v1056 = vrsqrt.pop %v1040
        %v1057 = vrsqrt.pop %v1041
        %v1058 = vrsqrt.pop %v1042
        %v1059 = vrsqrt.pop %v1043
        %v1060 = vrsqrt.pop %v1044
        %v1061 = vrsqrt.pop %v1045
        %v1062 = vsub.f32 %v870, %v966
        %v1063 = vsub.f32 %v871, %v967
        %v1064 = vsub.f32 %v872, %v968
        %v1065 = vsub.f32 %v873, %v969
        %v1066 = vsub.f32 %v874, %v970
        %v1067 = vsub.f32 %v875, %v971
        %v1068 = vsub.f32 %v876, %v972
        %v1069 = vsub.f32 %v877, %v973
        %v1070 = vsub.f32 %v878, %v974
        %v1071 = vsub.f32 %v879, %v975
        %v1072 = vsub.f32 %v880, %v976
        %v1073 = vsub.f32 %v881, %v977
        %v1074 = vsub.f32 %v882, %v978
        %v1075 = vsub.f32 %v883, %v979
        %v1076 = vsub.f32 %v884, %v980
        %v1077 = vsub.f32 %v885, %v981
        %v1078 = vmul.f32 %v1062, %v1046
        %v1079 = vmul.f32 %v1063, %v1047
        %v1080 = vmul.f32 %v1064, %v1048
        %v1081 = vmul.f32 %v1065, %v1049
        %v1082 = vmul.f32 %v1066, %v1050
        %v1083 = vmul.f32 %v1067, %v1051
        %v1084 = vmul.f32 %v1068, %v1052
        %v1085 = vmul.f32 %v1069, %v1053
        %v1086 = vmul.f32 %v1070, %v1054
        %v1087 = vmul.f32 %v1071, %v1055
        %v1088 = vmul.f32 %v1072, %v1056
        %v1089 = vmul.f32 %v1073, %v1057
        %v1090 = vmul.f32 %v1074, %v1058
        %v1091 = vmul.f32 %v1075, %v1059
        %v1092 = vmul.f32 %v1076, %v1060
        %v1093 = vmul.f32 %v1077, %v1061
        %v1094 = vld [vmem:[%s3] sm:$0x1]
        %v1096 = vlaneseq
        %v1097 = vshrl.u32 %v1096, 7
        %v1098 = vsub.s32 0, %v1097
        %v1099 = vrot.slane %v1094, %v1098
        %v1101 = vmul.f32 %v1078, %v1099
        %v1102 = vmul.f32 %v1079, %v1099
        %v1103 = vmul.f32 %v1080, %v1099
        %v1104 = vmul.f32 %v1081, %v1099
        %v1105 = vmul.f32 %v1082, %v1099
        %v1106 = vmul.f32 %v1083, %v1099
        %v1107 = vmul.f32 %v1084, %v1099
        %v1108 = vmul.f32 %v1085, %v1099
        %v1109 = vmul.f32 %v1086, %v1099
        %v1110 = vmul.f32 %v1087, %v1099
        %v1111 = vmul.f32 %v1088, %v1099
        %v1112 = vmul.f32 %v1089, %v1099
        %v1113 = vmul.f32 %v1090, %v1099
        %v1114 = vmul.f32 %v1091, %v1099
        %v1115 = vmul.f32 %v1092, %v1099
        %v1116 = vmul.f32 %v1093, %v1099
        %v1117 = vld [vmem:[#allocation8] sm:$0x1]
        %v1119 = vlaneseq
        %v1120 = vshrl.u32 %v1119, 7
        %v1121 = vsub.s32 0, %v1120
        %v1122 = vrot.slane %v1117, %v1121
        %v1124 = vadd.f32 %v1101, %v1122
        %v1125 = vadd.f32 %v1102, %v1122
        %v1126 = vadd.f32 %v1103, %v1122
        %v1127 = vadd.f32 %v1104, %v1122
        %v1128 = vadd.f32 %v1105, %v1122
        %v1129 = vadd.f32 %v1106, %v1122
        %v1130 = vadd.f32 %v1107, %v1122
        %v1131 = vadd.f32 %v1108, %v1122
        %v1132 = vadd.f32 %v1109, %v1122
        %v1133 = vadd.f32 %v1110, %v1122
        %v1134 = vadd.f32 %v1111, %v1122
        %v1135 = vadd.f32 %v1112, %v1122
        %v1136 = vadd.f32 %v1113, %v1122
        %v1137 = vadd.f32 %v1114, %v1122
        %v1138 = vadd.f32 %v1115, %v1122
        %v1139 = vadd.f32 %v1116, %v1122
        %v1140 = vpack.c.bf16 %v1125, %v1124
        %v1141 = vpack.c.bf16 %v1127, %v1126
        %v1142 = vpack.c.bf16 %v1129, %v1128
        %v1143 = vpack.c.bf16 %v1131, %v1130
        %v1144 = vpack.c.bf16 %v1133, %v1132
        %v1145 = vpack.c.bf16 %v1135, %v1134
        %v1146 = vpack.c.bf16 %v1137, %v1136
        %v1147 = vpack.c.bf16 %v1139, %v1138
        %s1148 = scalar_lea.vmem [#allocation5], 192
        %v1149 = vld [vmem:[%s1148] sm:$0xf]
        %v1150 = vld [vmem:[%s1148 + $0x4] sm:$0xf]
        %v1151 = vld [vmem:[%s1148 + $0x8] sm:$0xf]
        %v1152 = vld [vmem:[%s1148 + $0xc] sm:$0xf]
        %v1153 = vld [vmem:[%s1148 + $0x10] sm:$0xf]
        %v1154 = vld [vmem:[%s1148 + $0x14] sm:$0xf]
        %v1155 = vld [vmem:[%s1148 + $0x18] sm:$0xf]
        %v1156 = vld [vmem:[%s1148 + $0x1c] sm:$0xf]
        %v1157 = vld [vmem:[%s1148 + $0x20] sm:$0xf]
        %v1158 = vld [vmem:[%s1148 + $0x24] sm:$0xf]
        %v1159 = vld [vmem:[%s1148 + $0x28] sm:$0xf]
        %v1160 = vld [vmem:[%s1148 + $0x2c] sm:$0xf]
        %v1161 = vld [vmem:[%s1148 + $0x30] sm:$0xf]
        %v1162 = vld [vmem:[%s1148 + $0x34] sm:$0xf]
        %v1163 = vld [vmem:[%s1148 + $0x38] sm:$0xf]
        %v1164 = vld [vmem:[%s1148 + $0x3c] sm:$0xf]
        %s1165 = scalar_lea.vmem [#allocation7], 3
        %v1166 = vld [vmem:[%s1165] sm:$0x1]
        %v1168 = vlaneseq
        %v1169 = vshrl.u32 %v1168, 7
        %v1170 = vsub.s32 0, %v1169
        %v1171 = vrot.slane %v1166, %v1170
        %v1189 = vunpack.c.l.b16 %v1149
        %v1190 = vunpack.c.l.b16 %v1150
        %v1191 = vunpack.c.l.b16 %v1151
        %v1192 = vunpack.c.l.b16 %v1152
        %v1193 = vunpack.c.l.b16 %v1153
        %v1194 = vunpack.c.l.b16 %v1154
        %v1195 = vunpack.c.l.b16 %v1155
        %v1196 = vunpack.c.l.b16 %v1156
        %v1197 = vunpack.c.l.b16 %v1157
        %v1198 = vunpack.c.l.b16 %v1158
        %v1199 = vunpack.c.l.b16 %v1159
        %v1200 = vunpack.c.l.b16 %v1160
        %v1201 = vunpack.c.l.b16 %v1161
        %v1202 = vunpack.c.l.b16 %v1162
        %v1203 = vunpack.c.l.b16 %v1163
        %v1204 = vunpack.c.l.b16 %v1164
        %v1205 = vpack.c.b16 %v1190, %v1189
        %v1206 = vpack.c.b16 %v1192, %v1191
        %v1207 = vpack.c.b16 %v1194, %v1193
        %v1208 = vpack.c.b16 %v1196, %v1195
        %v1209 = vpack.c.b16 %v1198, %v1197
        %v1210 = vpack.c.b16 %v1200, %v1199
        %v1211 = vpack.c.b16 %v1202, %v1201
        %v1212 = vpack.c.b16 %v1204, %v1203
        %1221 = vmatprep.subr.bf16.mxu0 0
        %1222 = vmatpush1.bf16.msra.mxu0 %v1212
        %1223 = vmatprep.subr.bf16.mxu0 0
        %1224 = vmatpush1.bf16.msra.mxu0 %v1211
        %1225 = vmatprep.subr.bf16.mxu0 0
        %1226 = vmatpush1.bf16.msra.mxu0 %v1210
        %1227 = vmatprep.subr.bf16.mxu0 0
        %1228 = vmatpush1.bf16.msra.mxu0 %v1209
        %1229 = vmatprep.subr.bf16.mxu0 0
        %1230 = vmatpush1.bf16.msra.mxu0 %v1208
        %1231 = vmatprep.subr.bf16.mxu0 0
        %1232 = vmatpush1.bf16.msra.mxu0 %v1207
        %1233 = vmatprep.subr.bf16.mxu0 0
        %1234 = vmatpush1.bf16.msra.mxu0 %v1206
        %1235 = vmatprep.subr.bf16.mxu0 0
        %1236 = vmatpush1.bf16.msra.mxu0 %v1205
        %1237 = vmatprep.subr.bf16.mxu0 0
        %1238 = vmatpush2.bf16.msra.mxu0 0
        %1239 = vmatprep.subr.bf16.mxu0 0
        %1240 = vmatpush2.bf16.msra.mxu0 0
        %1241 = vmatprep.subr.bf16.mxu0 0
        %1242 = vmatpush2.bf16.msra.mxu0 0
        %1243 = vmatprep.subr.bf16.mxu0 0
        %1244 = vmatpush2.bf16.msra.mxu0 0
        %1245 = vmatprep.subr.bf16.mxu0 0
        %1246 = vmatpush2.bf16.msra.mxu0 0
        %1247 = vmatprep.subr.bf16.mxu0 0
        %1248 = vmatpush2.bf16.msra.mxu0 0
        %1249 = vmatprep.subr.bf16.mxu0 0
        %1250 = vmatpush2.bf16.msra.mxu0 0
        %1251 = vmatprep.subr.bf16.mxu0 0
        %1252 = vmatpush2.bf16.msra.mxu0 0
        %1253 = vmatprep.mubr.bf16.mxu0 0
        %1254 = vmatmul.mubr.bf16.gmra.mxu0 %v1140
        %v1255 = vpop.f32.mrf.mxu0
        %v1256 = vadd.f32 %v1171, %v1255
        %v1257 = vpop.f32.mrf.mxu0
        %v1258 = vpop.f32.mrf.mxu0
        %v1259 = vadd.f32 %v1171, %v1258
        %v1260 = vpop.f32.mrf.mxu0
        %1261 = vmatprep.mubr.bf16.mxu0 0
        %1262 = vmatmul.mubr.bf16.gmra.mxu0 %v1141
        %v1263 = vpop.f32.mrf.mxu0
        %v1264 = vadd.f32 %v1171, %v1263
        %v1265 = vpop.f32.mrf.mxu0
        %v1266 = vpop.f32.mrf.mxu0
        %v1267 = vadd.f32 %v1171, %v1266
        %v1268 = vpop.f32.mrf.mxu0
        %1269 = vmatprep.mubr.bf16.mxu0 0
        %1270 = vmatmul.mubr.bf16.gmra.mxu0 %v1142
        %v1271 = vpop.f32.mrf.mxu0
        %v1272 = vadd.f32 %v1171, %v1271
        %v1273 = vpop.f32.mrf.mxu0
        %v1274 = vpop.f32.mrf.mxu0
        %v1275 = vadd.f32 %v1171, %v1274
        %v1276 = vpop.f32.mrf.mxu0
        %1277 = vmatprep.mubr.bf16.mxu0 0
        %1278 = vmatmul.mubr.bf16.gmra.mxu0 %v1143
        %v1279 = vpop.f32.mrf.mxu0
        %v1280 = vadd.f32 %v1171, %v1279
        %v1281 = vpop.f32.mrf.mxu0
        %v1282 = vpop.f32.mrf.mxu0
        %v1283 = vadd.f32 %v1171, %v1282
        %v1284 = vpop.f32.mrf.mxu0
        %1285 = vmatprep.mubr.bf16.mxu0 0
        %1286 = vmatmul.mubr.bf16.gmra.mxu0 %v1144
        %v1287 = vpop.f32.mrf.mxu0
        %v1288 = vadd.f32 %v1171, %v1287
        %v1289 = vpop.f32.mrf.mxu0
        %v1290 = vpop.f32.mrf.mxu0
        %v1291 = vadd.f32 %v1171, %v1290
        %v1292 = vpop.f32.mrf.mxu0
        %1293 = vmatprep.mubr.bf16.mxu0 0
        %1294 = vmatmul.mubr.bf16.gmra.mxu0 %v1145
        %v1295 = vpop.f32.mrf.mxu0
        %v1296 = vadd.f32 %v1171, %v1295
        %v1297 = vpop.f32.mrf.mxu0
        %v1298 = vpop.f32.mrf.mxu0
        %v1299 = vadd.f32 %v1171, %v1298
        %v1300 = vpop.f32.mrf.mxu0
        %1301 = vmatprep.mubr.bf16.mxu0 0
        %1302 = vmatmul.mubr.bf16.gmra.mxu0 %v1146
        %v1303 = vpop.f32.mrf.mxu0
        %v1304 = vadd.f32 %v1171, %v1303
        %v1305 = vpop.f32.mrf.mxu0
        %v1306 = vpop.f32.mrf.mxu0
        %v1307 = vadd.f32 %v1171, %v1306
        %v1308 = vpop.f32.mrf.mxu0
        %1309 = vmatprep.mubr.bf16.mxu0 0
        %1310 = vmatmul.mubr.bf16.gmra.mxu0 %v1147
        %v1311 = vpop.f32.mrf.mxu0
        %v1312 = vadd.f32 %v1171, %v1311
        %v1313 = vpop.f32.mrf.mxu0
        %v1314 = vpop.f32.mrf.mxu0
        %v1315 = vadd.f32 %v1171, %v1314
        %v1316 = vpop.f32.mrf.mxu0
        %1317 = vdwg.mxu0
        %v1318 = vmax.f32 %v1256, 0.0
        %v1319 = vmax.f32 %v1259, 0.0
        %v1320 = vmax.f32 %v1264, 0.0
        %v1321 = vmax.f32 %v1267, 0.0
        %v1322 = vmax.f32 %v1272, 0.0
        %v1323 = vmax.f32 %v1275, 0.0
        %v1324 = vmax.f32 %v1280, 0.0
        %v1325 = vmax.f32 %v1283, 0.0
        %v1326 = vmax.f32 %v1288, 0.0
        %v1327 = vmax.f32 %v1291, 0.0
        %v1328 = vmax.f32 %v1296, 0.0
        %v1329 = vmax.f32 %v1299, 0.0
        %v1330 = vmax.f32 %v1304, 0.0
        %v1331 = vmax.f32 %v1307, 0.0
        %v1332 = vmax.f32 %v1312, 0.0
        %v1333 = vmax.f32 %v1315, 0.0
        %v1334 = vpack.c.bf16 %v1319, %v1318
        %v1335 = vpack.c.bf16 %v1321, %v1320
        %v1336 = vpack.c.bf16 %v1323, %v1322
        %v1337 = vpack.c.bf16 %v1325, %v1324
        %v1338 = vpack.c.bf16 %v1327, %v1326
        %v1339 = vpack.c.bf16 %v1329, %v1328
        %v1340 = vpack.c.bf16 %v1331, %v1330
        %v1341 = vpack.c.bf16 %v1333, %v1332
        %s1342 = scalar_lea.vmem [#allocation5], 256
        %v1343 = vld [vmem:[%s1342] sm:$0xf]
        %v1344 = vld [vmem:[%s1342 + $0x4] sm:$0xf]
        %v1345 = vld [vmem:[%s1342 + $0x8] sm:$0xf]
        %v1346 = vld [vmem:[%s1342 + $0xc] sm:$0xf]
        %v1347 = vld [vmem:[%s1342 + $0x10] sm:$0xf]
        %v1348 = vld [vmem:[%s1342 + $0x14] sm:$0xf]
        %v1349 = vld [vmem:[%s1342 + $0x18] sm:$0xf]
        %v1350 = vld [vmem:[%s1342 + $0x1c] sm:$0xf]
        %v1351 = vld [vmem:[%s1342 + $0x20] sm:$0xf]
        %v1352 = vld [vmem:[%s1342 + $0x24] sm:$0xf]
        %v1353 = vld [vmem:[%s1342 + $0x28] sm:$0xf]
        %v1354 = vld [vmem:[%s1342 + $0x2c] sm:$0xf]
        %v1355 = vld [vmem:[%s1342 + $0x30] sm:$0xf]
        %v1356 = vld [vmem:[%s1342 + $0x34] sm:$0xf]
        %v1357 = vld [vmem:[%s1342 + $0x38] sm:$0xf]
        %v1358 = vld [vmem:[%s1342 + $0x3c] sm:$0xf]
        %s1359 = scalar_lea.vmem [#allocation7], 4
        %v1360 = vld [vmem:[%s1359] sm:$0x1]
        %v1362 = vlaneseq
        %v1363 = vshrl.u32 %v1362, 7
        %v1364 = vsub.s32 0, %v1363
        %v1365 = vrot.slane %v1360, %v1364
        %v1383 = vunpack.c.l.b16 %v1343
        %v1384 = vunpack.c.l.b16 %v1344
        %v1385 = vunpack.c.l.b16 %v1345
        %v1386 = vunpack.c.l.b16 %v1346
        %v1387 = vunpack.c.l.b16 %v1347
        %v1388 = vunpack.c.l.b16 %v1348
        %v1389 = vunpack.c.l.b16 %v1349
        %v1390 = vunpack.c.l.b16 %v1350
        %v1391 = vunpack.c.l.b16 %v1351
        %v1392 = vunpack.c.l.b16 %v1352
        %v1393 = vunpack.c.l.b16 %v1353
        %v1394 = vunpack.c.l.b16 %v1354
        %v1395 = vunpack.c.l.b16 %v1355
        %v1396 = vunpack.c.l.b16 %v1356
        %v1397 = vunpack.c.l.b16 %v1357
        %v1398 = vunpack.c.l.b16 %v1358
        %v1399 = vpack.c.b16 %v1384, %v1383
        %v1400 = vpack.c.b16 %v1386, %v1385
        %v1401 = vpack.c.b16 %v1388, %v1387
        %v1402 = vpack.c.b16 %v1390, %v1389
        %v1403 = vpack.c.b16 %v1392, %v1391
        %v1404 = vpack.c.b16 %v1394, %v1393
        %v1405 = vpack.c.b16 %v1396, %v1395
        %v1406 = vpack.c.b16 %v1398, %v1397
        %1415 = vmatprep.subr.bf16.mxu0 0
        %1416 = vmatpush1.bf16.msra.mxu0 %v1406
        %1417 = vmatprep.subr.bf16.mxu0 0
        %1418 = vmatpush1.bf16.msra.mxu0 %v1405
        %1419 = vmatprep.subr.bf16.mxu0 0
        %1420 = vmatpush1.bf16.msra.mxu0 %v1404
        %1421 = vmatprep.subr.bf16.mxu0 0
        %1422 = vmatpush1.bf16.msra.mxu0 %v1403
        %1423 = vmatprep.subr.bf16.mxu0 0
        %1424 = vmatpush1.bf16.msra.mxu0 %v1402
        %1425 = vmatprep.subr.bf16.mxu0 0
        %1426 = vmatpush1.bf16.msra.mxu0 %v1401
        %1427 = vmatprep.subr.bf16.mxu0 0
        %1428 = vmatpush1.bf16.msra.mxu0 %v1400
        %1429 = vmatprep.subr.bf16.mxu0 0
        %1430 = vmatpush1.bf16.msra.mxu0 %v1399
        %1431 = vmatprep.subr.bf16.mxu0 0
        %1432 = vmatpush2.bf16.msra.mxu0 0
        %1433 = vmatprep.subr.bf16.mxu0 0
        %1434 = vmatpush2.bf16.msra.mxu0 0
        %1435 = vmatprep.subr.bf16.mxu0 0
        %1436 = vmatpush2.bf16.msra.mxu0 0
        %1437 = vmatprep.subr.bf16.mxu0 0
        %1438 = vmatpush2.bf16.msra.mxu0 0
        %1439 = vmatprep.subr.bf16.mxu0 0
        %1440 = vmatpush2.bf16.msra.mxu0 0
        %1441 = vmatprep.subr.bf16.mxu0 0
        %1442 = vmatpush2.bf16.msra.mxu0 0
        %1443 = vmatprep.subr.bf16.mxu0 0
        %1444 = vmatpush2.bf16.msra.mxu0 0
        %1445 = vmatprep.subr.bf16.mxu0 0
        %1446 = vmatpush2.bf16.msra.mxu0 0
        %1447 = vmatprep.mubr.bf16.mxu0 0
        %1448 = vmatmul.mubr.bf16.gmra.mxu0 %v1334
        %v1449 = vpop.f32.mrf.mxu0
        %v1450 = vadd.f32 %v1365, %v1449
        %v1451 = vpop.f32.mrf.mxu0
        %v1452 = vpop.f32.mrf.mxu0
        %v1453 = vadd.f32 %v1365, %v1452
        %v1454 = vpop.f32.mrf.mxu0
        %1455 = vmatprep.mubr.bf16.mxu0 0
        %1456 = vmatmul.mubr.bf16.gmra.mxu0 %v1335
        %v1457 = vpop.f32.mrf.mxu0
        %v1458 = vadd.f32 %v1365, %v1457
        %v1459 = vpop.f32.mrf.mxu0
        %v1460 = vpop.f32.mrf.mxu0
        %v1461 = vadd.f32 %v1365, %v1460
        %v1462 = vpop.f32.mrf.mxu0
        %1463 = vmatprep.mubr.bf16.mxu0 0
        %1464 = vmatmul.mubr.bf16.gmra.mxu0 %v1336
        %v1465 = vpop.f32.mrf.mxu0
        %v1466 = vadd.f32 %v1365, %v1465
        %v1467 = vpop.f32.mrf.mxu0
        %v1468 = vpop.f32.mrf.mxu0
        %v1469 = vadd.f32 %v1365, %v1468
        %v1470 = vpop.f32.mrf.mxu0
        %1471 = vmatprep.mubr.bf16.mxu0 0
        %1472 = vmatmul.mubr.bf16.gmra.mxu0 %v1337
        %v1473 = vpop.f32.mrf.mxu0
        %v1474 = vadd.f32 %v1365, %v1473
        %v1475 = vpop.f32.mrf.mxu0
        %v1476 = vpop.f32.mrf.mxu0
        %v1477 = vadd.f32 %v1365, %v1476
        %v1478 = vpop.f32.mrf.mxu0
        %1479 = vmatprep.mubr.bf16.mxu0 0
        %1480 = vmatmul.mubr.bf16.gmra.mxu0 %v1338
        %v1481 = vpop.f32.mrf.mxu0
        %v1482 = vadd.f32 %v1365, %v1481
        %v1483 = vpop.f32.mrf.mxu0
        %v1484 = vpop.f32.mrf.mxu0
        %v1485 = vadd.f32 %v1365, %v1484
        %v1486 = vpop.f32.mrf.mxu0
        %1487 = vmatprep.mubr.bf16.mxu0 0
        %1488 = vmatmul.mubr.bf16.gmra.mxu0 %v1339
        %v1489 = vpop.f32.mrf.mxu0
        %v1490 = vadd.f32 %v1365, %v1489
        %v1491 = vpop.f32.mrf.mxu0
        %v1492 = vpop.f32.mrf.mxu0
        %v1493 = vadd.f32 %v1365, %v1492
        %v1494 = vpop.f32.mrf.mxu0
        %1495 = vmatprep.mubr.bf16.mxu0 0
        %1496 = vmatmul.mubr.bf16.gmra.mxu0 %v1340
        %v1497 = vpop.f32.mrf.mxu0
        %v1498 = vadd.f32 %v1365, %v1497
        %v1499 = vpop.f32.mrf.mxu0
        %v1500 = vpop.f32.mrf.mxu0
        %v1501 = vadd.f32 %v1365, %v1500
        %v1502 = vpop.f32.mrf.mxu0
        %1503 = vmatprep.mubr.bf16.mxu0 0
        %1504 = vmatmul.mubr.bf16.gmra.mxu0 %v1341
        %v1505 = vpop.f32.mrf.mxu0
        %v1506 = vadd.f32 %v1365, %v1505
        %v1507 = vpop.f32.mrf.mxu0
        %v1508 = vpop.f32.mrf.mxu0
        %v1509 = vadd.f32 %v1365, %v1508
        %v1510 = vpop.f32.mrf.mxu0
        %1511 = vdwg.mxu0
        %v1512 = vmax.f32 %v1450, 0.0
        %v1513 = vmax.f32 %v1453, 0.0
        %v1514 = vmax.f32 %v1458, 0.0
        %v1515 = vmax.f32 %v1461, 0.0
        %v1516 = vmax.f32 %v1466, 0.0
        %v1517 = vmax.f32 %v1469, 0.0
        %v1518 = vmax.f32 %v1474, 0.0
        %v1519 = vmax.f32 %v1477, 0.0
        %v1520 = vmax.f32 %v1482, 0.0
        %v1521 = vmax.f32 %v1485, 0.0
        %v1522 = vmax.f32 %v1490, 0.0
        %v1523 = vmax.f32 %v1493, 0.0
        %v1524 = vmax.f32 %v1498, 0.0
        %v1525 = vmax.f32 %v1501, 0.0
        %v1526 = vmax.f32 %v1506, 0.0
        %v1527 = vmax.f32 %v1509, 0.0
        %v1528 = vpack.c.bf16 %v1513, %v1512
        %v1529 = vpack.c.bf16 %v1515, %v1514
        %v1530 = vpack.c.bf16 %v1517, %v1516
        %v1531 = vpack.c.bf16 %v1519, %v1518
        %v1532 = vpack.c.bf16 %v1521, %v1520
        %v1533 = vpack.c.bf16 %v1523, %v1522
        %v1534 = vpack.c.bf16 %v1525, %v1524
        %v1535 = vpack.c.bf16 %v1527, %v1526
        %s1536 = scalar_lea.vmem [#allocation5], 320
        %v1537 = vld [vmem:[%s1536] sm:$0xf]
        %v1538 = vld [vmem:[%s1536 + $0x4] sm:$0xf]
        %v1539 = vld [vmem:[%s1536 + $0x8] sm:$0xf]
        %v1540 = vld [vmem:[%s1536 + $0xc] sm:$0xf]
        %v1541 = vld [vmem:[%s1536 + $0x10] sm:$0xf]
        %v1542 = vld [vmem:[%s1536 + $0x14] sm:$0xf]
        %v1543 = vld [vmem:[%s1536 + $0x18] sm:$0xf]
        %v1544 = vld [vmem:[%s1536 + $0x1c] sm:$0xf]
        %v1545 = vld [vmem:[%s1536 + $0x20] sm:$0xf]
        %v1546 = vld [vmem:[%s1536 + $0x24] sm:$0xf]
        %v1547 = vld [vmem:[%s1536 + $0x28] sm:$0xf]
        %v1548 = vld [vmem:[%s1536 + $0x2c] sm:$0xf]
        %v1549 = vld [vmem:[%s1536 + $0x30] sm:$0xf]
        %v1550 = vld [vmem:[%s1536 + $0x34] sm:$0xf]
        %v1551 = vld [vmem:[%s1536 + $0x38] sm:$0xf]
        %v1552 = vld [vmem:[%s1536 + $0x3c] sm:$0xf]
        %s1553 = scalar_lea.vmem [#allocation7], 5
        %v1554 = vld [vmem:[%s1553] sm:$0x1]
        %v1556 = vlaneseq
        %v1557 = vshrl.u32 %v1556, 7
        %v1558 = vsub.s32 0, %v1557
        %v1559 = vrot.slane %v1554, %v1558
        %v1577 = vunpack.c.l.b16 %v1537
        %v1578 = vunpack.c.l.b16 %v1538
        %v1579 = vunpack.c.l.b16 %v1539
        %v1580 = vunpack.c.l.b16 %v1540
        %v1581 = vunpack.c.l.b16 %v1541
        %v1582 = vunpack.c.l.b16 %v1542
        %v1583 = vunpack.c.l.b16 %v1543
        %v1584 = vunpack.c.l.b16 %v1544
        %v1585 = vunpack.c.l.b16 %v1545
        %v1586 = vunpack.c.l.b16 %v1546
        %v1587 = vunpack.c.l.b16 %v1547
        %v1588 = vunpack.c.l.b16 %v1548
        %v1589 = vunpack.c.l.b16 %v1549
        %v1590 = vunpack.c.l.b16 %v1550
        %v1591 = vunpack.c.l.b16 %v1551
        %v1592 = vunpack.c.l.b16 %v1552
        %v1593 = vpack.c.b16 %v1578, %v1577
        %v1594 = vpack.c.b16 %v1580, %v1579
        %v1595 = vpack.c.b16 %v1582, %v1581
        %v1596 = vpack.c.b16 %v1584, %v1583
        %v1597 = vpack.c.b16 %v1586, %v1585
        %v1598 = vpack.c.b16 %v1588, %v1587
        %v1599 = vpack.c.b16 %v1590, %v1589
        %v1600 = vpack.c.b16 %v1592, %v1591
        %1609 = vmatprep.subr.bf16.mxu0 0
        %1610 = vmatpush1.bf16.msra.mxu0 %v1600
        %1611 = vmatprep.subr.bf16.mxu0 0
        %1612 = vmatpush1.bf16.msra.mxu0 %v1599
        %1613 = vmatprep.subr.bf16.mxu0 0
        %1614 = vmatpush1.bf16.msra.mxu0 %v1598
        %1615 = vmatprep.subr.bf16.mxu0 0
        %1616 = vmatpush1.bf16.msra.mxu0 %v1597
        %1617 = vmatprep.subr.bf16.mxu0 0
        %1618 = vmatpush1.bf16.msra.mxu0 %v1596
        %1619 = vmatprep.subr.bf16.mxu0 0
        %1620 = vmatpush1.bf16.msra.mxu0 %v1595
        %1621 = vmatprep.subr.bf16.mxu0 0
        %1622 = vmatpush1.bf16.msra.mxu0 %v1594
        %1623 = vmatprep.subr.bf16.mxu0 0
        %1624 = vmatpush1.bf16.msra.mxu0 %v1593
        %1625 = vmatprep.subr.bf16.mxu0 0
        %1626 = vmatpush2.bf16.msra.mxu0 0
        %1627 = vmatprep.subr.bf16.mxu0 0
        %1628 = vmatpush2.bf16.msra.mxu0 0
        %1629 = vmatprep.subr.bf16.mxu0 0
        %1630 = vmatpush2.bf16.msra.mxu0 0
        %1631 = vmatprep.subr.bf16.mxu0 0
        %1632 = vmatpush2.bf16.msra.mxu0 0
        %1633 = vmatprep.subr.bf16.mxu0 0
        %1634 = vmatpush2.bf16.msra.mxu0 0
        %1635 = vmatprep.subr.bf16.mxu0 0
        %1636 = vmatpush2.bf16.msra.mxu0 0
        %1637 = vmatprep.subr.bf16.mxu0 0
        %1638 = vmatpush2.bf16.msra.mxu0 0
        %1639 = vmatprep.subr.bf16.mxu0 0
        %1640 = vmatpush2.bf16.msra.mxu0 0
        %1641 = vmatprep.mubr.bf16.mxu0 0
        %1642 = vmatmul.mubr.bf16.gmra.mxu0 %v1528
        %v1643 = vpop.f32.mrf.mxu0
        %v1644 = vadd.f32 %v1559, %v1643
        %v1645 = vpop.f32.mrf.mxu0
        %v1646 = vpop.f32.mrf.mxu0
        %v1647 = vadd.f32 %v1559, %v1646
        %v1648 = vpop.f32.mrf.mxu0
        %1649 = vmatprep.mubr.bf16.mxu0 0
        %1650 = vmatmul.mubr.bf16.gmra.mxu0 %v1529
        %v1651 = vpop.f32.mrf.mxu0
        %v1652 = vadd.f32 %v1559, %v1651
        %v1653 = vpop.f32.mrf.mxu0
        %v1654 = vpop.f32.mrf.mxu0
        %v1655 = vadd.f32 %v1559, %v1654
        %v1656 = vpop.f32.mrf.mxu0
        %1657 = vmatprep.mubr.bf16.mxu0 0
        %1658 = vmatmul.mubr.bf16.gmra.mxu0 %v1530
        %v1659 = vpop.f32.mrf.mxu0
        %v1660 = vadd.f32 %v1559, %v1659
        %v1661 = vpop.f32.mrf.mxu0
        %v1662 = vpop.f32.mrf.mxu0
        %v1663 = vadd.f32 %v1559, %v1662
        %v1664 = vpop.f32.mrf.mxu0
        %1665 = vmatprep.mubr.bf16.mxu0 0
        %1666 = vmatmul.mubr.bf16.gmra.mxu0 %v1531
        %v1667 = vpop.f32.mrf.mxu0
        %v1668 = vadd.f32 %v1559, %v1667
        %v1669 = vpop.f32.mrf.mxu0
        %v1670 = vpop.f32.mrf.mxu0
        %v1671 = vadd.f32 %v1559, %v1670
        %v1672 = vpop.f32.mrf.mxu0
        %1673 = vmatprep.mubr.bf16.mxu0 0
        %1674 = vmatmul.mubr.bf16.gmra.mxu0 %v1532
        %v1675 = vpop.f32.mrf.mxu0
        %v1676 = vadd.f32 %v1559, %v1675
        %v1677 = vpop.f32.mrf.mxu0
        %v1678 = vpop.f32.mrf.mxu0
        %v1679 = vadd.f32 %v1559, %v1678
        %v1680 = vpop.f32.mrf.mxu0
        %1681 = vmatprep.mubr.bf16.mxu0 0
        %1682 = vmatmul.mubr.bf16.gmra.mxu0 %v1533
        %v1683 = vpop.f32.mrf.mxu0
        %v1684 = vadd.f32 %v1559, %v1683
        %v1685 = vpop.f32.mrf.mxu0
        %v1686 = vpop.f32.mrf.mxu0
        %v1687 = vadd.f32 %v1559, %v1686
        %v1688 = vpop.f32.mrf.mxu0
        %1689 = vmatprep.mubr.bf16.mxu0 0
        %1690 = vmatmul.mubr.bf16.gmra.mxu0 %v1534
        %v1691 = vpop.f32.mrf.mxu0
        %v1692 = vadd.f32 %v1559, %v1691
        %v1693 = vpop.f32.mrf.mxu0
        %v1694 = vpop.f32.mrf.mxu0
        %v1695 = vadd.f32 %v1559, %v1694
        %v1696 = vpop.f32.mrf.mxu0
        %1697 = vmatprep.mubr.bf16.mxu0 0
        %1698 = vmatmul.mubr.bf16.gmra.mxu0 %v1535
        %v1699 = vpop.f32.mrf.mxu0
        %v1700 = vadd.f32 %v1559, %v1699
        %v1701 = vpop.f32.mrf.mxu0
        %v1702 = vpop.f32.mrf.mxu0
        %v1703 = vadd.f32 %v1559, %v1702
        %v1704 = vpop.f32.mrf.mxu0
        %1705 = vdwg.mxu0
        %v1706 = vadd.f32 %v1644, %v1124
        %v1707 = vadd.f32 %v1647, %v1125
        %v1708 = vadd.f32 %v1652, %v1126
        %v1709 = vadd.f32 %v1655, %v1127
        %v1710 = vadd.f32 %v1660, %v1128
        %v1711 = vadd.f32 %v1663, %v1129
        %v1712 = vadd.f32 %v1668, %v1130
        %v1713 = vadd.f32 %v1671, %v1131
        %v1714 = vadd.f32 %v1676, %v1132
        %v1715 = vadd.f32 %v1679, %v1133
        %v1716 = vadd.f32 %v1684, %v1134
        %v1717 = vadd.f32 %v1687, %v1135
        %v1718 = vadd.f32 %v1692, %v1136
        %v1719 = vadd.f32 %v1695, %v1137
        %v1720 = vadd.f32 %v1700, %v1138
        %v1721 = vadd.f32 %v1703, %v1139
        %1722 = vadd.xlane.f32.xlu0 %v1706
        %v1723 = vpop.xlane.xlu0 %1722
        %1724 = vadd.xlane.f32.xlu0 %v1707
        %v1725 = vpop.xlane.xlu0 %1724
        %1726 = vadd.xlane.f32.xlu0 %v1708
        %v1727 = vpop.xlane.xlu0 %1726
        %1728 = vadd.xlane.f32.xlu0 %v1709
        %v1729 = vpop.xlane.xlu0 %1728
        %1730 = vadd.xlane.f32.xlu0 %v1710
        %v1731 = vpop.xlane.xlu0 %1730
        %1732 = vadd.xlane.f32.xlu0 %v1711
        %v1733 = vpop.xlane.xlu0 %1732
        %1734 = vadd.xlane.f32.xlu0 %v1712
        %v1735 = vpop.xlane.xlu0 %1734
        %1736 = vadd.xlane.f32.xlu0 %v1713
        %v1737 = vpop.xlane.xlu0 %1736
        %1738 = vadd.xlane.f32.xlu0 %v1714
        %v1739 = vpop.xlane.xlu0 %1738
        %1740 = vadd.xlane.f32.xlu0 %v1715
        %v1741 = vpop.xlane.xlu0 %1740
        %1742 = vadd.xlane.f32.xlu0 %v1716
        %v1743 = vpop.xlane.xlu0 %1742
        %1744 = vadd.xlane.f32.xlu0 %v1717
        %v1745 = vpop.xlane.xlu0 %1744
        %1746 = vadd.xlane.f32.xlu0 %v1718
        %v1747 = vpop.xlane.xlu0 %1746
        %1748 = vadd.xlane.f32.xlu0 %v1719
        %v1749 = vpop.xlane.xlu0 %1748
        %1750 = vadd.xlane.f32.xlu0 %v1720
        %v1751 = vpop.xlane.xlu0 %1750
        %1752 = vadd.xlane.f32.xlu0 %v1721
        %v1753 = vpop.xlane.xlu0 %1752
        %v1754 = vmul.f32 %v1706, %v1706
        %v1755 = vmul.f32 %v1707, %v1707
        %v1756 = vmul.f32 %v1708, %v1708
        %v1757 = vmul.f32 %v1709, %v1709
        %v1758 = vmul.f32 %v1710, %v1710
        %v1759 = vmul.f32 %v1711, %v1711
        %v1760 = vmul.f32 %v1712, %v1712
        %v1761 = vmul.f32 %v1713, %v1713
        %v1762 = vmul.f32 %v1714, %v1714
        %v1763 = vmul.f32 %v1715, %v1715
        %v1764 = vmul.f32 %v1716, %v1716
        %v1765 = vmul.f32 %v1717, %v1717
        %v1766 = vmul.f32 %v1718, %v1718
        %v1767 = vmul.f32 %v1719, %v1719
        %v1768 = vmul.f32 %v1720, %v1720
        %v1769 = vmul.f32 %v1721, %v1721
        %1770 = vadd.xlane.f32.xlu0 %v1754
        %v1771 = vpop.xlane.xlu0 %1770
        %1772 = vadd.xlane.f32.xlu0 %v1755
        %v1773 = vpop.xlane.xlu0 %1772
        %1774 = vadd.xlane.f32.xlu0 %v1756
        %v1775 = vpop.xlane.xlu0 %1774
        %1776 = vadd.xlane.f32.xlu0 %v1757
        %v1777 = vpop.xlane.xlu0 %1776
        %1778 = vadd.xlane.f32.xlu0 %v1758
        %v1779 = vpop.xlane.xlu0 %1778
        %1780 = vadd.xlane.f32.xlu0 %v1759
        %v1781 = vpop.xlane.xlu0 %1780
        %1782 = vadd.xlane.f32.xlu0 %v1760
        %v1783 = vpop.xlane.xlu0 %1782
        %1784 = vadd.xlane.f32.xlu0 %v1761
        %v1785 = vpop.xlane.xlu0 %1784
        %1786 = vadd.xlane.f32.xlu0 %v1762
        %v1787 = vpop.xlane.xlu0 %1786
        %1788 = vadd.xlane.f32.xlu0 %v1763
        %v1789 = vpop.xlane.xlu0 %1788
        %1790 = vadd.xlane.f32.xlu0 %v1764
        %v1791 = vpop.xlane.xlu0 %1790
        %1792 = vadd.xlane.f32.xlu0 %v1765
        %v1793 = vpop.xlane.xlu0 %1792
        %1794 = vadd.xlane.f32.xlu0 %v1766
        %v1795 = vpop.xlane.xlu0 %1794
        %1796 = vadd.xlane.f32.xlu0 %v1767
        %v1797 = vpop.xlane.xlu0 %1796
        %1798 = vadd.xlane.f32.xlu0 %v1768
        %v1799 = vpop.xlane.xlu0 %1798
        %1800 = vadd.xlane.f32.xlu0 %v1769
        %v1801 = vpop.xlane.xlu0 %1800
        %v1802 = vmul.f32 %v1723, 0.0078125
        %v1803 = vmul.f32 %v1725, 0.0078125
        %v1804 = vmul.f32 %v1727, 0.0078125
        %v1805 = vmul.f32 %v1729, 0.0078125
        %v1806 = vmul.f32 %v1731, 0.0078125
        %v1807 = vmul.f32 %v1733, 0.0078125
        %v1808 = vmul.f32 %v1735, 0.0078125
        %v1809 = vmul.f32 %v1737, 0.0078125
        %v1810 = vmul.f32 %v1739, 0.0078125
        %v1811 = vmul.f32 %v1741, 0.0078125
        %v1812 = vmul.f32 %v1743, 0.0078125
        %v1813 = vmul.f32 %v1745, 0.0078125
        %v1814 = vmul.f32 %v1747, 0.0078125
        %v1815 = vmul.f32 %v1749, 0.0078125
        %v1816 = vmul.f32 %v1751, 0.0078125
        %v1817 = vmul.f32 %v1753, 0.0078125
        %v1818 = vmul.f32 %v1771, 0.0078125
        %v1819 = vmul.f32 %v1773, 0.0078125
        %v1820 = vmul.f32 %v1775, 0.0078125
        %v1821 = vmul.f32 %v1777, 0.0078125
        %v1822 = vmul.f32 %v1779, 0.0078125
        %v1823 = vmul.f32 %v1781, 0.0078125
        %v1824 = vmul.f32 %v1783, 0.0078125
        %v1825 = vmul.f32 %v1785, 0.0078125
        %v1826 = vmul.f32 %v1787, 0.0078125
        %v1827 = vmul.f32 %v1789, 0.0078125
        %v1828 = vmul.f32 %v1791, 0.0078125
        %v1829 = vmul.f32 %v1793, 0.0078125
        %v1830 = vmul.f32 %v1795, 0.0078125
        %v1831 = vmul.f32 %v1797, 0.0078125
        %v1832 = vmul.f32 %v1799, 0.0078125
        %v1833 = vmul.f32 %v1801, 0.0078125
        %v1834 = vmul.f32 %v1802, %v1802
        %v1835 = vmul.f32 %v1803, %v1803
        %v1836 = vmul.f32 %v1804, %v1804
        %v1837 = vmul.f32 %v1805, %v1805
        %v1838 = vmul.f32 %v1806, %v1806
        %v1839 = vmul.f32 %v1807, %v1807
        %v1840 = vmul.f32 %v1808, %v1808
        %v1841 = vmul.f32 %v1809, %v1809
        %v1842 = vmul.f32 %v1810, %v1810
        %v1843 = vmul.f32 %v1811, %v1811
        %v1844 = vmul.f32 %v1812, %v1812
        %v1845 = vmul.f32 %v1813, %v1813
        %v1846 = vmul.f32 %v1814, %v1814
        %v1847 = vmul.f32 %v1815, %v1815
        %v1848 = vmul.f32 %v1816, %v1816
        %v1849 = vmul.f32 %v1817, %v1817
        %v1850 = vsub.f32 %v1818, %v1834
        %v1851 = vsub.f32 %v1819, %v1835
        %v1852 = vsub.f32 %v1820, %v1836
        %v1853 = vsub.f32 %v1821, %v1837
        %v1854 = vsub.f32 %v1822, %v1838
        %v1855 = vsub.f32 %v1823, %v1839
        %v1856 = vsub.f32 %v1824, %v1840
        %v1857 = vsub.f32 %v1825, %v1841
        %v1858 = vsub.f32 %v1826, %v1842
        %v1859 = vsub.f32 %v1827, %v1843
        %v1860 = vsub.f32 %v1828, %v1844
        %v1861 = vsub.f32 %v1829, %v1845
        %v1862 = vsub.f32 %v1830, %v1846
        %v1863 = vsub.f32 %v1831, %v1847
        %v1864 = vsub.f32 %v1832, %v1848
        %v1865 = vsub.f32 %v1833, %v1849
        %v1866 = vadd.f32 %v1850, 1e-05
        %v1867 = vadd.f32 %v1851, 1e-05
        %v1868 = vadd.f32 %v1852, 1e-05
        %v1869 = vadd.f32 %v1853, 1e-05
        %v1870 = vadd.f32 %v1854, 1e-05
        %v1871 = vadd.f32 %v1855, 1e-05
        %v1872 = vadd.f32 %v1856, 1e-05
        %v1873 = vadd.f32 %v1857, 1e-05
        %v1874 = vadd.f32 %v1858, 1e-05
        %v1875 = vadd.f32 %v1859, 1e-05
        %v1876 = vadd.f32 %v1860, 1e-05
        %v1877 = vadd.f32 %v1861, 1e-05
        %v1878 = vadd.f32 %v1862, 1e-05
        %v1879 = vadd.f32 %v1863, 1e-05
        %v1880 = vadd.f32 %v1864, 1e-05
        %v1881 = vadd.f32 %v1865, 1e-05
        %v1882 = vrsqrt.pop %v1866
        %v1883 = vrsqrt.pop %v1867
        %v1884 = vrsqrt.pop %v1868
        %v1885 = vrsqrt.pop %v1869
        %v1886 = vrsqrt.pop %v1870
        %v1887 = vrsqrt.pop %v1871
        %v1888 = vrsqrt.pop %v1872
        %v1889 = vrsqrt.pop %v1873
        %v1890 = vrsqrt.pop %v1874
        %v1891 = vrsqrt.pop %v1875
        %v1892 = vrsqrt.pop %v1876
        %v1893 = vrsqrt.pop %v1877
        %v1894 = vrsqrt.pop %v1878
        %v1895 = vrsqrt.pop %v1879
        %v1896 = vrsqrt.pop %v1880
        %v1897 = vrsqrt.pop %v1881
        %v1898 = vsub.f32 %v1706, %v1802
        %v1899 = vsub.f32 %v1707, %v1803
        %v1900 = vsub.f32 %v1708, %v1804
        %v1901 = vsub.f32 %v1709, %v1805
        %v1902 = vsub.f32 %v1710, %v1806
        %v1903 = vsub.f32 %v1711, %v1807
        %v1904 = vsub.f32 %v1712, %v1808
        %v1905 = vsub.f32 %v1713, %v1809
        %v1906 = vsub.f32 %v1714, %v1810
        %v1907 = vsub.f32 %v1715, %v1811
        %v1908 = vsub.f32 %v1716, %v1812
        %v1909 = vsub.f32 %v1717, %v1813
        %v1910 = vsub.f32 %v1718, %v1814
        %v1911 = vsub.f32 %v1719, %v1815
        %v1912 = vsub.f32 %v1720, %v1816
        %v1913 = vsub.f32 %v1721, %v1817
        %v1914 = vmul.f32 %v1898, %v1882
        %v1915 = vmul.f32 %v1899, %v1883
        %v1916 = vmul.f32 %v1900, %v1884
        %v1917 = vmul.f32 %v1901, %v1885
        %v1918 = vmul.f32 %v1902, %v1886
        %v1919 = vmul.f32 %v1903, %v1887
        %v1920 = vmul.f32 %v1904, %v1888
        %v1921 = vmul.f32 %v1905, %v1889
        %v1922 = vmul.f32 %v1906, %v1890
        %v1923 = vmul.f32 %v1907, %v1891
        %v1924 = vmul.f32 %v1908, %v1892
        %v1925 = vmul.f32 %v1909, %v1893
        %v1926 = vmul.f32 %v1910, %v1894
        %v1927 = vmul.f32 %v1911, %v1895
        %v1928 = vmul.f32 %v1912, %v1896
        %v1929 = vmul.f32 %v1913, %v1897
        %s1930 = scalar_lea.vmem %s3, 1
        %v1931 = vld [vmem:[%s1930] sm:$0x1]
        %v1933 = vlaneseq
        %v1934 = vshrl.u32 %v1933, 7
        %v1935 = vsub.s32 0, %v1934
        %v1936 = vrot.slane %v1931, %v1935
        %v1938 = vmul.f32 %v1914, %v1936
        %v1939 = vmul.f32 %v1915, %v1936
        %v1940 = vmul.f32 %v1916, %v1936
        %v1941 = vmul.f32 %v1917, %v1936
        %v1942 = vmul.f32 %v1918, %v1936
        %v1943 = vmul.f32 %v1919, %v1936
        %v1944 = vmul.f32 %v1920, %v1936
        %v1945 = vmul.f32 %v1921, %v1936
        %v1946 = vmul.f32 %v1922, %v1936
        %v1947 = vmul.f32 %v1923, %v1936
        %v1948 = vmul.f32 %v1924, %v1936
        %v1949 = vmul.f32 %v1925, %v1936
        %v1950 = vmul.f32 %v1926, %v1936
        %v1951 = vmul.f32 %v1927, %v1936
        %v1952 = vmul.f32 %v1928, %v1936
        %v1953 = vmul.f32 %v1929, %v1936
        %s1954 = scalar_lea.vmem [#allocation8], 1
        %v1955 = vld [vmem:[%s1954] sm:$0x1]
        %v1957 = vlaneseq
        %v1958 = vshrl.u32 %v1957, 7
        %v1959 = vsub.s32 0, %v1958
        %v1960 = vrot.slane %v1955, %v1959
        %v1962 = vadd.f32 %v1938, %v1960
        %v1963 = vadd.f32 %v1939, %v1960
        %v1964 = vadd.f32 %v1940, %v1960
        %v1965 = vadd.f32 %v1941, %v1960
        %v1966 = vadd.f32 %v1942, %v1960
        %v1967 = vadd.f32 %v1943, %v1960
        %v1968 = vadd.f32 %v1944, %v1960
        %v1969 = vadd.f32 %v1945, %v1960
        %v1970 = vadd.f32 %v1946, %v1960
        %v1971 = vadd.f32 %v1947, %v1960
        %v1972 = vadd.f32 %v1948, %v1960
        %v1973 = vadd.f32 %v1949, %v1960
        %v1974 = vadd.f32 %v1950, %v1960
        %v1975 = vadd.f32 %v1951, %v1960
        %v1976 = vadd.f32 %v1952, %v1960
        %v1977 = vadd.f32 %v1953, %v1960
        %v1978 = vpack.c.bf16 %v1963, %v1962
        %v1979 = vpack.c.bf16 %v1965, %v1964
        %v1980 = vpack.c.bf16 %v1967, %v1966
        %v1981 = vpack.c.bf16 %v1969, %v1968
        %v1982 = vpack.c.bf16 %v1971, %v1970
        %v1983 = vpack.c.bf16 %v1973, %v1972
        %v1984 = vpack.c.bf16 %v1975, %v1974
        %v1985 = vpack.c.bf16 %v1977, %v1976
        %s1986 = scalar_lea.vmem [#allocation5], 384
        %v1987 = vld [vmem:[%s1986] sm:$0xf]
        %v1988 = vld [vmem:[%s1986 + $0x4] sm:$0xf]
        %v1989 = vld [vmem:[%s1986 + $0x8] sm:$0xf]
        %v1990 = vld [vmem:[%s1986 + $0xc] sm:$0xf]
        %v1991 = vld [vmem:[%s1986 + $0x10] sm:$0xf]
        %v1992 = vld [vmem:[%s1986 + $0x14] sm:$0xf]
        %v1993 = vld [vmem:[%s1986 + $0x18] sm:$0xf]
        %v1994 = vld [vmem:[%s1986 + $0x1c] sm:$0xf]
        %v1995 = vld [vmem:[%s1986 + $0x20] sm:$0xf]
        %v1996 = vld [vmem:[%s1986 + $0x24] sm:$0xf]
        %v1997 = vld [vmem:[%s1986 + $0x28] sm:$0xf]
        %v1998 = vld [vmem:[%s1986 + $0x2c] sm:$0xf]
        %v1999 = vld [vmem:[%s1986 + $0x30] sm:$0xf]
        %v2000 = vld [vmem:[%s1986 + $0x34] sm:$0xf]
        %v2001 = vld [vmem:[%s1986 + $0x38] sm:$0xf]
        %v2002 = vld [vmem:[%s1986 + $0x3c] sm:$0xf]
        %s2003 = scalar_lea.vmem [#allocation7], 6
        %v2004 = vld [vmem:[%s2003] sm:$0x1]
        %v2006 = vlaneseq
        %v2007 = vshrl.u32 %v2006, 7
        %v2008 = vsub.s32 0, %v2007
        %v2009 = vrot.slane %v2004, %v2008
        %v2027 = vunpack.c.l.b16 %v1987
        %v2028 = vunpack.c.l.b16 %v1988
        %v2029 = vunpack.c.l.b16 %v1989
        %v2030 = vunpack.c.l.b16 %v1990
        %v2031 = vunpack.c.l.b16 %v1991
        %v2032 = vunpack.c.l.b16 %v1992
        %v2033 = vunpack.c.l.b16 %v1993
        %v2034 = vunpack.c.l.b16 %v1994
        %v2035 = vunpack.c.l.b16 %v1995
        %v2036 = vunpack.c.l.b16 %v1996
        %v2037 = vunpack.c.l.b16 %v1997
        %v2038 = vunpack.c.l.b16 %v1998
        %v2039 = vunpack.c.l.b16 %v1999
        %v2040 = vunpack.c.l.b16 %v2000
        %v2041 = vunpack.c.l.b16 %v2001
        %v2042 = vunpack.c.l.b16 %v2002
        %v2043 = vpack.c.b16 %v2028, %v2027
        %v2044 = vpack.c.b16 %v2030, %v2029
        %v2045 = vpack.c.b16 %v2032, %v2031
        %v2046 = vpack.c.b16 %v2034, %v2033
        %v2047 = vpack.c.b16 %v2036, %v2035
        %v2048 = vpack.c.b16 %v2038, %v2037
        %v2049 = vpack.c.b16 %v2040, %v2039
        %v2050 = vpack.c.b16 %v2042, %v2041
        %2059 = vmatprep.subr.bf16.mxu0 0
        %2060 = vmatpush1.bf16.msra.mxu0 %v2050
        %2061 = vmatprep.subr.bf16.mxu0 0
        %2062 = vmatpush1.bf16.msra.mxu0 %v2049
        %2063 = vmatprep.subr.bf16.mxu0 0
        %2064 = vmatpush1.bf16.msra.mxu0 %v2048
        %2065 = vmatprep.subr.bf16.mxu0 0
        %2066 = vmatpush1.bf16.msra.mxu0 %v2047
        %2067 = vmatprep.subr.bf16.mxu0 0
        %2068 = vmatpush1.bf16.msra.mxu0 %v2046
        %2069 = vmatprep.subr.bf16.mxu0 0
        %2070 = vmatpush1.bf16.msra.mxu0 %v2045
        %2071 = vmatprep.subr.bf16.mxu0 0
        %2072 = vmatpush1.bf16.msra.mxu0 %v2044
        %2073 = vmatprep.subr.bf16.mxu0 0
        %2074 = vmatpush1.bf16.msra.mxu0 %v2043
        %2075 = vmatprep.subr.bf16.mxu0 0
        %2076 = vmatpush2.bf16.msra.mxu0 0
        %2077 = vmatprep.subr.bf16.mxu0 0
        %2078 = vmatpush2.bf16.msra.mxu0 0
        %2079 = vmatprep.subr.bf16.mxu0 0
        %2080 = vmatpush2.bf16.msra.mxu0 0
        %2081 = vmatprep.subr.bf16.mxu0 0
        %2082 = vmatpush2.bf16.msra.mxu0 0
        %2083 = vmatprep.subr.bf16.mxu0 0
        %2084 = vmatpush2.bf16.msra.mxu0 0
        %2085 = vmatprep.subr.bf16.mxu0 0
        %2086 = vmatpush2.bf16.msra.mxu0 0
        %2087 = vmatprep.subr.bf16.mxu0 0
        %2088 = vmatpush2.bf16.msra.mxu0 0
        %2089 = vmatprep.subr.bf16.mxu0 0
        %2090 = vmatpush2.bf16.msra.mxu0 0
        %2091 = vmatprep.mubr.bf16.mxu0 0
        %2092 = vmatmul.mubr.bf16.gmra.mxu0 %v1978
        %v2093 = vpop.f32.mrf.mxu0
        %v2094 = vadd.f32 %v2009, %v2093
        %v2095 = vpop.f32.mrf.mxu0
        %v2096 = vpop.f32.mrf.mxu0
        %v2097 = vadd.f32 %v2009, %v2096
        %v2098 = vpop.f32.mrf.mxu0
        %2099 = vmatprep.mubr.bf16.mxu0 0
        %2100 = vmatmul.mubr.bf16.gmra.mxu0 %v1979
        %v2101 = vpop.f32.mrf.mxu0
        %v2102 = vadd.f32 %v2009, %v2101
        %v2103 = vpop.f32.mrf.mxu0
        %v2104 = vpop.f32.mrf.mxu0
        %v2105 = vadd.f32 %v2009, %v2104
        %v2106 = vpop.f32.mrf.mxu0
        %2107 = vmatprep.mubr.bf16.mxu0 0
        %2108 = vmatmul.mubr.bf16.gmra.mxu0 %v1980
        %v2109 = vpop.f32.mrf.mxu0
        %v2110 = vadd.f32 %v2009, %v2109
        %v2111 = vpop.f32.mrf.mxu0
        %v2112 = vpop.f32.mrf.mxu0
        %v2113 = vadd.f32 %v2009, %v2112
        %v2114 = vpop.f32.mrf.mxu0
        %2115 = vmatprep.mubr.bf16.mxu0 0
        %2116 = vmatmul.mubr.bf16.gmra.mxu0 %v1981
        %v2117 = vpop.f32.mrf.mxu0
        %v2118 = vadd.f32 %v2009, %v2117
        %v2119 = vpop.f32.mrf.mxu0
        %v2120 = vpop.f32.mrf.mxu0
        %v2121 = vadd.f32 %v2009, %v2120
        %v2122 = vpop.f32.mrf.mxu0
        %2123 = vmatprep.mubr.bf16.mxu0 0
        %2124 = vmatmul.mubr.bf16.gmra.mxu0 %v1982
        %v2125 = vpop.f32.mrf.mxu0
        %v2126 = vadd.f32 %v2009, %v2125
        %v2127 = vpop.f32.mrf.mxu0
        %v2128 = vpop.f32.mrf.mxu0
        %v2129 = vadd.f32 %v2009, %v2128
        %v2130 = vpop.f32.mrf.mxu0
        %2131 = vmatprep.mubr.bf16.mxu0 0
        %2132 = vmatmul.mubr.bf16.gmra.mxu0 %v1983
        %v2133 = vpop.f32.mrf.mxu0
        %v2134 = vadd.f32 %v2009, %v2133
        %v2135 = vpop.f32.mrf.mxu0
        %v2136 = vpop.f32.mrf.mxu0
        %v2137 = vadd.f32 %v2009, %v2136
        %v2138 = vpop.f32.mrf.mxu0
        %2139 = vmatprep.mubr.bf16.mxu0 0
        %2140 = vmatmul.mubr.bf16.gmra.mxu0 %v1984
        %v2141 = vpop.f32.mrf.mxu0
        %v2142 = vadd.f32 %v2009, %v2141
        %v2143 = vpop.f32.mrf.mxu0
        %v2144 = vpop.f32.mrf.mxu0
        %v2145 = vadd.f32 %v2009, %v2144
        %v2146 = vpop.f32.mrf.mxu0
        %2147 = vmatprep.mubr.bf16.mxu0 0
        %2148 = vmatmul.mubr.bf16.gmra.mxu0 %v1985
        %v2149 = vpop.f32.mrf.mxu0
        %v2150 = vadd.f32 %v2009, %v2149
        %v2151 = vpop.f32.mrf.mxu0
        %v2152 = vpop.f32.mrf.mxu0
        %v2153 = vadd.f32 %v2009, %v2152
        %v2154 = vpop.f32.mrf.mxu0
        %2155 = vdwg.mxu0
        %v2156 = vmax.f32 %v2094, 0.0
        %v2157 = vmax.f32 %v2097, 0.0
        %v2158 = vmax.f32 %v2102, 0.0
        %v2159 = vmax.f32 %v2105, 0.0
        %v2160 = vmax.f32 %v2110, 0.0
        %v2161 = vmax.f32 %v2113, 0.0
        %v2162 = vmax.f32 %v2118, 0.0
        %v2163 = vmax.f32 %v2121, 0.0
        %v2164 = vmax.f32 %v2126, 0.0
        %v2165 = vmax.f32 %v2129, 0.0
        %v2166 = vmax.f32 %v2134, 0.0
        %v2167 = vmax.f32 %v2137, 0.0
        %v2168 = vmax.f32 %v2142, 0.0
        %v2169 = vmax.f32 %v2145, 0.0
        %v2170 = vmax.f32 %v2150, 0.0
        %v2171 = vmax.f32 %v2153, 0.0
        %v2172 = vpack.c.bf16 %v2157, %v2156
        %v2173 = vpack.c.bf16 %v2159, %v2158
        %v2174 = vpack.c.bf16 %v2161, %v2160
        %v2175 = vpack.c.bf16 %v2163, %v2162
        %v2176 = vpack.c.bf16 %v2165, %v2164
        %v2177 = vpack.c.bf16 %v2167, %v2166
        %v2178 = vpack.c.bf16 %v2169, %v2168
        %v2179 = vpack.c.bf16 %v2171, %v2170
        %s2180 = scalar_lea.vmem [#allocation5], 448
        %v2181 = vld [vmem:[%s2180] sm:$0xf]
        %v2182 = vld [vmem:[%s2180 + $0x4] sm:$0xf]
        %v2183 = vld [vmem:[%s2180 + $0x8] sm:$0xf]
        %v2184 = vld [vmem:[%s2180 + $0xc] sm:$0xf]
        %v2185 = vld [vmem:[%s2180 + $0x10] sm:$0xf]
        %v2186 = vld [vmem:[%s2180 + $0x14] sm:$0xf]
        %v2187 = vld [vmem:[%s2180 + $0x18] sm:$0xf]
        %v2188 = vld [vmem:[%s2180 + $0x1c] sm:$0xf]
        %v2189 = vld [vmem:[%s2180 + $0x20] sm:$0xf]
        %v2190 = vld [vmem:[%s2180 + $0x24] sm:$0xf]
        %v2191 = vld [vmem:[%s2180 + $0x28] sm:$0xf]
        %v2192 = vld [vmem:[%s2180 + $0x2c] sm:$0xf]
        %v2193 = vld [vmem:[%s2180 + $0x30] sm:$0xf]
        %v2194 = vld [vmem:[%s2180 + $0x34] sm:$0xf]
        %v2195 = vld [vmem:[%s2180 + $0x38] sm:$0xf]
        %v2196 = vld [vmem:[%s2180 + $0x3c] sm:$0xf]
        %s2197 = scalar_lea.vmem [#allocation7], 7
        %v2198 = vld [vmem:[%s2197] sm:$0x1]
        %v2200 = vlaneseq
        %v2201 = vshrl.u32 %v2200, 7
        %v2202 = vsub.s32 0, %v2201
        %v2203 = vrot.slane %v2198, %v2202
        %v2221 = vunpack.c.l.b16 %v2181
        %v2222 = vunpack.c.l.b16 %v2182
        %v2223 = vunpack.c.l.b16 %v2183
        %v2224 = vunpack.c.l.b16 %v2184
        %v2225 = vunpack.c.l.b16 %v2185
        %v2226 = vunpack.c.l.b16 %v2186
        %v2227 = vunpack.c.l.b16 %v2187
        %v2228 = vunpack.c.l.b16 %v2188
        %v2229 = vunpack.c.l.b16 %v2189
        %v2230 = vunpack.c.l.b16 %v2190
        %v2231 = vunpack.c.l.b16 %v2191
        %v2232 = vunpack.c.l.b16 %v2192
        %v2233 = vunpack.c.l.b16 %v2193
        %v2234 = vunpack.c.l.b16 %v2194
        %v2235 = vunpack.c.l.b16 %v2195
        %v2236 = vunpack.c.l.b16 %v2196
        %v2237 = vpack.c.b16 %v2222, %v2221
        %v2238 = vpack.c.b16 %v2224, %v2223
        %v2239 = vpack.c.b16 %v2226, %v2225
        %v2240 = vpack.c.b16 %v2228, %v2227
        %v2241 = vpack.c.b16 %v2230, %v2229
        %v2242 = vpack.c.b16 %v2232, %v2231
        %v2243 = vpack.c.b16 %v2234, %v2233
        %v2244 = vpack.c.b16 %v2236, %v2235
        %2253 = vmatprep.subr.bf16.mxu0 0
        %2254 = vmatpush1.bf16.msra.mxu0 %v2244
        %2255 = vmatprep.subr.bf16.mxu0 0
        %2256 = vmatpush1.bf16.msra.mxu0 %v2243
        %2257 = vmatprep.subr.bf16.mxu0 0
        %2258 = vmatpush1.bf16.msra.mxu0 %v2242
        %2259 = vmatprep.subr.bf16.mxu0 0
        %2260 = vmatpush1.bf16.msra.mxu0 %v2241
        %2261 = vmatprep.subr.bf16.mxu0 0
        %2262 = vmatpush1.bf16.msra.mxu0 %v2240
        %2263 = vmatprep.subr.bf16.mxu0 0
        %2264 = vmatpush1.bf16.msra.mxu0 %v2239
        %2265 = vmatprep.subr.bf16.mxu0 0
        %2266 = vmatpush1.bf16.msra.mxu0 %v2238
        %2267 = vmatprep.subr.bf16.mxu0 0
        %2268 = vmatpush1.bf16.msra.mxu0 %v2237
        %2269 = vmatprep.subr.bf16.mxu0 0
        %2270 = vmatpush2.bf16.msra.mxu0 0
        %2271 = vmatprep.subr.bf16.mxu0 0
        %2272 = vmatpush2.bf16.msra.mxu0 0
        %2273 = vmatprep.subr.bf16.mxu0 0
        %2274 = vmatpush2.bf16.msra.mxu0 0
        %2275 = vmatprep.subr.bf16.mxu0 0
        %2276 = vmatpush2.bf16.msra.mxu0 0
        %2277 = vmatprep.subr.bf16.mxu0 0
        %2278 = vmatpush2.bf16.msra.mxu0 0
        %2279 = vmatprep.subr.bf16.mxu0 0
        %2280 = vmatpush2.bf16.msra.mxu0 0
        %2281 = vmatprep.subr.bf16.mxu0 0
        %2282 = vmatpush2.bf16.msra.mxu0 0
        %2283 = vmatprep.subr.bf16.mxu0 0
        %2284 = vmatpush2.bf16.msra.mxu0 0
        %2285 = vmatprep.mubr.bf16.mxu0 0
        %2286 = vmatmul.mubr.bf16.gmra.mxu0 %v2172
        %v2287 = vpop.f32.mrf.mxu0
        %v2288 = vadd.f32 %v2203, %v2287
        %v2289 = vpop.f32.mrf.mxu0
        %v2290 = vpop.f32.mrf.mxu0
        %v2291 = vadd.f32 %v2203, %v2290
        %v2292 = vpop.f32.mrf.mxu0
        %2293 = vmatprep.mubr.bf16.mxu0 0
        %2294 = vmatmul.mubr.bf16.gmra.mxu0 %v2173
        %v2295 = vpop.f32.mrf.mxu0
        %v2296 = vadd.f32 %v2203, %v2295
        %v2297 = vpop.f32.mrf.mxu0
        %v2298 = vpop.f32.mrf.mxu0
        %v2299 = vadd.f32 %v2203, %v2298
        %v2300 = vpop.f32.mrf.mxu0
        %2301 = vmatprep.mubr.bf16.mxu0 0
        %2302 = vmatmul.mubr.bf16.gmra.mxu0 %v2174
        %v2303 = vpop.f32.mrf.mxu0
        %v2304 = vadd.f32 %v2203, %v2303
        %v2305 = vpop.f32.mrf.mxu0
        %v2306 = vpop.f32.mrf.mxu0
        %v2307 = vadd.f32 %v2203, %v2306
        %v2308 = vpop.f32.mrf.mxu0
        %2309 = vmatprep.mubr.bf16.mxu0 0
        %2310 = vmatmul.mubr.bf16.gmra.mxu0 %v2175
        %v2311 = vpop.f32.mrf.mxu0
        %v2312 = vadd.f32 %v2203, %v2311
        %v2313 = vpop.f32.mrf.mxu0
        %v2314 = vpop.f32.mrf.mxu0
        %v2315 = vadd.f32 %v2203, %v2314
        %v2316 = vpop.f32.mrf.mxu0
        %2317 = vmatprep.mubr.bf16.mxu0 0
        %2318 = vmatmul.mubr.bf16.gmra.mxu0 %v2176
        %v2319 = vpop.f32.mrf.mxu0
        %v2320 = vadd.f32 %v2203, %v2319
        %v2321 = vpop.f32.mrf.mxu0
        %v2322 = vpop.f32.mrf.mxu0
        %v2323 = vadd.f32 %v2203, %v2322
        %v2324 = vpop.f32.mrf.mxu0
        %2325 = vmatprep.mubr.bf16.mxu0 0
        %2326 = vmatmul.mubr.bf16.gmra.mxu0 %v2177
        %v2327 = vpop.f32.mrf.mxu0
        %v2328 = vadd.f32 %v2203, %v2327
        %v2329 = vpop.f32.mrf.mxu0
        %v2330 = vpop.f32.mrf.mxu0
        %v2331 = vadd.f32 %v2203, %v2330
        %v2332 = vpop.f32.mrf.mxu0
        %2333 = vmatprep.mubr.bf16.mxu0 0
        %2334 = vmatmul.mubr.bf16.gmra.mxu0 %v2178
        %v2335 = vpop.f32.mrf.mxu0
        %v2336 = vadd.f32 %v2203, %v2335
        %v2337 = vpop.f32.mrf.mxu0
        %v2338 = vpop.f32.mrf.mxu0
        %v2339 = vadd.f32 %v2203, %v2338
        %v2340 = vpop.f32.mrf.mxu0
        %2341 = vmatprep.mubr.bf16.mxu0 0
        %2342 = vmatmul.mubr.bf16.gmra.mxu0 %v2179
        %v2343 = vpop.f32.mrf.mxu0
        %v2344 = vadd.f32 %v2203, %v2343
        %v2345 = vpop.f32.mrf.mxu0
        %v2346 = vpop.f32.mrf.mxu0
        %v2347 = vadd.f32 %v2203, %v2346
        %v2348 = vpop.f32.mrf.mxu0
        %2349 = vdwg.mxu0
        %v2350 = vmax.f32 %v2288, 0.0
        %v2351 = vmax.f32 %v2291, 0.0
        %v2352 = vmax.f32 %v2296, 0.0
        %v2353 = vmax.f32 %v2299, 0.0
        %v2354 = vmax.f32 %v2304, 0.0
        %v2355 = vmax.f32 %v2307, 0.0
        %v2356 = vmax.f32 %v2312, 0.0
        %v2357 = vmax.f32 %v2315, 0.0
        %v2358 = vmax.f32 %v2320, 0.0
        %v2359 = vmax.f32 %v2323, 0.0
        %v2360 = vmax.f32 %v2328, 0.0
        %v2361 = vmax.f32 %v2331, 0.0
        %v2362 = vmax.f32 %v2336, 0.0
        %v2363 = vmax.f32 %v2339, 0.0
        %v2364 = vmax.f32 %v2344, 0.0
        %v2365 = vmax.f32 %v2347, 0.0
        %v2366 = vpack.c.bf16 %v2351, %v2350
        %v2367 = vpack.c.bf16 %v2353, %v2352
        %v2368 = vpack.c.bf16 %v2355, %v2354
        %v2369 = vpack.c.bf16 %v2357, %v2356
        %v2370 = vpack.c.bf16 %v2359, %v2358
        %v2371 = vpack.c.bf16 %v2361, %v2360
        %v2372 = vpack.c.bf16 %v2363, %v2362
        %v2373 = vpack.c.bf16 %v2365, %v2364
        %s2374 = scalar_lea.vmem [#allocation5], 512
        %v2375 = vld [vmem:[%s2374] sm:$0xf]
        %v2376 = vld [vmem:[%s2374 + $0x4] sm:$0xf]
        %v2377 = vld [vmem:[%s2374 + $0x8] sm:$0xf]
        %v2378 = vld [vmem:[%s2374 + $0xc] sm:$0xf]
        %v2379 = vld [vmem:[%s2374 + $0x10] sm:$0xf]
        %v2380 = vld [vmem:[%s2374 + $0x14] sm:$0xf]
        %v2381 = vld [vmem:[%s2374 + $0x18] sm:$0xf]
        %v2382 = vld [vmem:[%s2374 + $0x1c] sm:$0xf]
        %v2383 = vld [vmem:[%s2374 + $0x20] sm:$0xf]
        %v2384 = vld [vmem:[%s2374 + $0x24] sm:$0xf]
        %v2385 = vld [vmem:[%s2374 + $0x28] sm:$0xf]
        %v2386 = vld [vmem:[%s2374 + $0x2c] sm:$0xf]
        %v2387 = vld [vmem:[%s2374 + $0x30] sm:$0xf]
        %v2388 = vld [vmem:[%s2374 + $0x34] sm:$0xf]
        %v2389 = vld [vmem:[%s2374 + $0x38] sm:$0xf]
        %v2390 = vld [vmem:[%s2374 + $0x3c] sm:$0xf]
        %s2391 = scalar_lea.vmem [#allocation7], 8
        %v2392 = vld [vmem:[%s2391] sm:$0x1]
        %v2394 = vlaneseq
        %v2395 = vshrl.u32 %v2394, 7
        %v2396 = vsub.s32 0, %v2395
        %v2397 = vrot.slane %v2392, %v2396
        %v2415 = vunpack.c.l.b16 %v2375
        %v2416 = vunpack.c.l.b16 %v2376
        %v2417 = vunpack.c.l.b16 %v2377
        %v2418 = vunpack.c.l.b16 %v2378
        %v2419 = vunpack.c.l.b16 %v2379
        %v2420 = vunpack.c.l.b16 %v2380
        %v2421 = vunpack.c.l.b16 %v2381
        %v2422 = vunpack.c.l.b16 %v2382
        %v2423 = vunpack.c.l.b16 %v2383
        %v2424 = vunpack.c.l.b16 %v2384
        %v2425 = vunpack.c.l.b16 %v2385
        %v2426 = vunpack.c.l.b16 %v2386
        %v2427 = vunpack.c.l.b16 %v2387
        %v2428 = vunpack.c.l.b16 %v2388
        %v2429 = vunpack.c.l.b16 %v2389
        %v2430 = vunpack.c.l.b16 %v2390
        %v2431 = vpack.c.b16 %v2416, %v2415
        %v2432 = vpack.c.b16 %v2418, %v2417
        %v2433 = vpack.c.b16 %v2420, %v2419
        %v2434 = vpack.c.b16 %v2422, %v2421
        %v2435 = vpack.c.b16 %v2424, %v2423
        %v2436 = vpack.c.b16 %v2426, %v2425
        %v2437 = vpack.c.b16 %v2428, %v2427
        %v2438 = vpack.c.b16 %v2430, %v2429
        %2447 = vmatprep.subr.bf16.mxu0 0
        %2448 = vmatpush1.bf16.msra.mxu0 %v2438
        %2449 = vmatprep.subr.bf16.mxu0 0
        %2450 = vmatpush1.bf16.msra.mxu0 %v2437
        %2451 = vmatprep.subr.bf16.mxu0 0
        %2452 = vmatpush1.bf16.msra.mxu0 %v2436
        %2453 = vmatprep.subr.bf16.mxu0 0
        %2454 = vmatpush1.bf16.msra.mxu0 %v2435
        %2455 = vmatprep.subr.bf16.mxu0 0
        %2456 = vmatpush1.bf16.msra.mxu0 %v2434
        %2457 = vmatprep.subr.bf16.mxu0 0
        %2458 = vmatpush1.bf16.msra.mxu0 %v2433
        %2459 = vmatprep.subr.bf16.mxu0 0
        %2460 = vmatpush1.bf16.msra.mxu0 %v2432
        %2461 = vmatprep.subr.bf16.mxu0 0
        %2462 = vmatpush1.bf16.msra.mxu0 %v2431
        %2463 = vmatprep.subr.bf16.mxu0 0
        %2464 = vmatpush2.bf16.msra.mxu0 0
        %2465 = vmatprep.subr.bf16.mxu0 0
        %2466 = vmatpush2.bf16.msra.mxu0 0
        %2467 = vmatprep.subr.bf16.mxu0 0
        %2468 = vmatpush2.bf16.msra.mxu0 0
        %2469 = vmatprep.subr.bf16.mxu0 0
        %2470 = vmatpush2.bf16.msra.mxu0 0
        %2471 = vmatprep.subr.bf16.mxu0 0
        %2472 = vmatpush2.bf16.msra.mxu0 0
        %2473 = vmatprep.subr.bf16.mxu0 0
        %2474 = vmatpush2.bf16.msra.mxu0 0
        %2475 = vmatprep.subr.bf16.mxu0 0
        %2476 = vmatpush2.bf16.msra.mxu0 0
        %2477 = vmatprep.subr.bf16.mxu0 0
        %2478 = vmatpush2.bf16.msra.mxu0 0
        %2479 = vmatprep.mubr.bf16.mxu0 0
        %2480 = vmatmul.mubr.bf16.gmra.mxu0 %v2366
        %v2481 = vpop.f32.mrf.mxu0
        %v2482 = vadd.f32 %v2397, %v2481
        %v2483 = vpop.f32.mrf.mxu0
        %v2484 = vpop.f32.mrf.mxu0
        %v2485 = vadd.f32 %v2397, %v2484
        %v2486 = vpop.f32.mrf.mxu0
        %2487 = vmatprep.mubr.bf16.mxu0 0
        %2488 = vmatmul.mubr.bf16.gmra.mxu0 %v2367
        %v2489 = vpop.f32.mrf.mxu0
        %v2490 = vadd.f32 %v2397, %v2489
        %v2491 = vpop.f32.mrf.mxu0
        %v2492 = vpop.f32.mrf.mxu0
        %v2493 = vadd.f32 %v2397, %v2492
        %v2494 = vpop.f32.mrf.mxu0
        %2495 = vmatprep.mubr.bf16.mxu0 0
        %2496 = vmatmul.mubr.bf16.gmra.mxu0 %v2368
        %v2497 = vpop.f32.mrf.mxu0
        %v2498 = vadd.f32 %v2397, %v2497
        %v2499 = vpop.f32.mrf.mxu0
        %v2500 = vpop.f32.mrf.mxu0
        %v2501 = vadd.f32 %v2397, %v2500
        %v2502 = vpop.f32.mrf.mxu0
        %2503 = vmatprep.mubr.bf16.mxu0 0
        %2504 = vmatmul.mubr.bf16.gmra.mxu0 %v2369
        %v2505 = vpop.f32.mrf.mxu0
        %v2506 = vadd.f32 %v2397, %v2505
        %v2507 = vpop.f32.mrf.mxu0
        %v2508 = vpop.f32.mrf.mxu0
        %v2509 = vadd.f32 %v2397, %v2508
        %v2510 = vpop.f32.mrf.mxu0
        %2511 = vmatprep.mubr.bf16.mxu0 0
        %2512 = vmatmul.mubr.bf16.gmra.mxu0 %v2370
        %v2513 = vpop.f32.mrf.mxu0
        %v2514 = vadd.f32 %v2397, %v2513
        %v2515 = vpop.f32.mrf.mxu0
        %v2516 = vpop.f32.mrf.mxu0
        %v2517 = vadd.f32 %v2397, %v2516
        %v2518 = vpop.f32.mrf.mxu0
        %2519 = vmatprep.mubr.bf16.mxu0 0
        %2520 = vmatmul.mubr.bf16.gmra.mxu0 %v2371
        %v2521 = vpop.f32.mrf.mxu0
        %v2522 = vadd.f32 %v2397, %v2521
        %v2523 = vpop.f32.mrf.mxu0
        %v2524 = vpop.f32.mrf.mxu0
        %v2525 = vadd.f32 %v2397, %v2524
        %v2526 = vpop.f32.mrf.mxu0
        %2527 = vmatprep.mubr.bf16.mxu0 0
        %2528 = vmatmul.mubr.bf16.gmra.mxu0 %v2372
        %v2529 = vpop.f32.mrf.mxu0
        %v2530 = vadd.f32 %v2397, %v2529
        %v2531 = vpop.f32.mrf.mxu0
        %v2532 = vpop.f32.mrf.mxu0
        %v2533 = vadd.f32 %v2397, %v2532
        %v2534 = vpop.f32.mrf.mxu0
        %2535 = vmatprep.mubr.bf16.mxu0 0
        %2536 = vmatmul.mubr.bf16.gmra.mxu0 %v2373
        %v2537 = vpop.f32.mrf.mxu0
        %v2538 = vadd.f32 %v2397, %v2537
        %v2539 = vpop.f32.mrf.mxu0
        %v2540 = vpop.f32.mrf.mxu0
        %v2541 = vadd.f32 %v2397, %v2540
        %v2542 = vpop.f32.mrf.mxu0
        %2543 = vdwg.mxu0
        %v2544 = vadd.f32 %v2482, %v1962
        %v2545 = vadd.f32 %v2485, %v1963
        %v2546 = vadd.f32 %v2490, %v1964
        %v2547 = vadd.f32 %v2493, %v1965
        %v2548 = vadd.f32 %v2498, %v1966
        %v2549 = vadd.f32 %v2501, %v1967
        %v2550 = vadd.f32 %v2506, %v1968
        %v2551 = vadd.f32 %v2509, %v1969
        %v2552 = vadd.f32 %v2514, %v1970
        %v2553 = vadd.f32 %v2517, %v1971
        %v2554 = vadd.f32 %v2522, %v1972
        %v2555 = vadd.f32 %v2525, %v1973
        %v2556 = vadd.f32 %v2530, %v1974
        %v2557 = vadd.f32 %v2533, %v1975
        %v2558 = vadd.f32 %v2538, %v1976
        %v2559 = vadd.f32 %v2541, %v1977
        %2560 = vadd.xlane.f32.xlu0 %v2544
        %v2561 = vpop.xlane.xlu0 %2560
        %2562 = vadd.xlane.f32.xlu0 %v2545
        %v2563 = vpop.xlane.xlu0 %2562
        %2564 = vadd.xlane.f32.xlu0 %v2546
        %v2565 = vpop.xlane.xlu0 %2564
        %2566 = vadd.xlane.f32.xlu0 %v2547
        %v2567 = vpop.xlane.xlu0 %2566
        %2568 = vadd.xlane.f32.xlu0 %v2548
        %v2569 = vpop.xlane.xlu0 %2568
        %2570 = vadd.xlane.f32.xlu0 %v2549
        %v2571 = vpop.xlane.xlu0 %2570
        %2572 = vadd.xlane.f32.xlu0 %v2550
        %v2573 = vpop.xlane.xlu0 %2572
        %2574 = vadd.xlane.f32.xlu0 %v2551
        %v2575 = vpop.xlane.xlu0 %2574
        %2576 = vadd.xlane.f32.xlu0 %v2552
        %v2577 = vpop.xlane.xlu0 %2576
        %2578 = vadd.xlane.f32.xlu0 %v2553
        %v2579 = vpop.xlane.xlu0 %2578
        %2580 = vadd.xlane.f32.xlu0 %v2554
        %v2581 = vpop.xlane.xlu0 %2580
        %2582 = vadd.xlane.f32.xlu0 %v2555
        %v2583 = vpop.xlane.xlu0 %2582
        %2584 = vadd.xlane.f32.xlu0 %v2556
        %v2585 = vpop.xlane.xlu0 %2584
        %2586 = vadd.xlane.f32.xlu0 %v2557
        %v2587 = vpop.xlane.xlu0 %2586
        %2588 = vadd.xlane.f32.xlu0 %v2558
        %v2589 = vpop.xlane.xlu0 %2588
        %2590 = vadd.xlane.f32.xlu0 %v2559
        %v2591 = vpop.xlane.xlu0 %2590
        %v2592 = vmul.f32 %v2544, %v2544
        %v2593 = vmul.f32 %v2545, %v2545
        %v2594 = vmul.f32 %v2546, %v2546
        %v2595 = vmul.f32 %v2547, %v2547
        %v2596 = vmul.f32 %v2548, %v2548
        %v2597 = vmul.f32 %v2549, %v2549
        %v2598 = vmul.f32 %v2550, %v2550
        %v2599 = vmul.f32 %v2551, %v2551
        %v2600 = vmul.f32 %v2552, %v2552
        %v2601 = vmul.f32 %v2553, %v2553
        %v2602 = vmul.f32 %v2554, %v2554
        %v2603 = vmul.f32 %v2555, %v2555
        %v2604 = vmul.f32 %v2556, %v2556
        %v2605 = vmul.f32 %v2557, %v2557
        %v2606 = vmul.f32 %v2558, %v2558
        %v2607 = vmul.f32 %v2559, %v2559
        %2608 = vadd.xlane.f32.xlu0 %v2592
        %v2609 = vpop.xlane.xlu0 %2608
        %2610 = vadd.xlane.f32.xlu0 %v2593
        %v2611 = vpop.xlane.xlu0 %2610
        %2612 = vadd.xlane.f32.xlu0 %v2594
        %v2613 = vpop.xlane.xlu0 %2612
        %2614 = vadd.xlane.f32.xlu0 %v2595
        %v2615 = vpop.xlane.xlu0 %2614
        %2616 = vadd.xlane.f32.xlu0 %v2596
        %v2617 = vpop.xlane.xlu0 %2616
        %2618 = vadd.xlane.f32.xlu0 %v2597
        %v2619 = vpop.xlane.xlu0 %2618
        %2620 = vadd.xlane.f32.xlu0 %v2598
        %v2621 = vpop.xlane.xlu0 %2620
        %2622 = vadd.xlane.f32.xlu0 %v2599
        %v2623 = vpop.xlane.xlu0 %2622
        %2624 = vadd.xlane.f32.xlu0 %v2600
        %v2625 = vpop.xlane.xlu0 %2624
        %2626 = vadd.xlane.f32.xlu0 %v2601
        %v2627 = vpop.xlane.xlu0 %2626
        %2628 = vadd.xlane.f32.xlu0 %v2602
        %v2629 = vpop.xlane.xlu0 %2628
        %2630 = vadd.xlane.f32.xlu0 %v2603
        %v2631 = vpop.xlane.xlu0 %2630
        %2632 = vadd.xlane.f32.xlu0 %v2604
        %v2633 = vpop.xlane.xlu0 %2632
        %2634 = vadd.xlane.f32.xlu0 %v2605
        %v2635 = vpop.xlane.xlu0 %2634
        %2636 = vadd.xlane.f32.xlu0 %v2606
        %v2637 = vpop.xlane.xlu0 %2636
        %2638 = vadd.xlane.f32.xlu0 %v2607
        %v2639 = vpop.xlane.xlu0 %2638
        %v2640 = vmul.f32 %v2561, 0.0078125
        %v2641 = vmul.f32 %v2563, 0.0078125
        %v2642 = vmul.f32 %v2565, 0.0078125
        %v2643 = vmul.f32 %v2567, 0.0078125
        %v2644 = vmul.f32 %v2569, 0.0078125
        %v2645 = vmul.f32 %v2571, 0.0078125
        %v2646 = vmul.f32 %v2573, 0.0078125
        %v2647 = vmul.f32 %v2575, 0.0078125
        %v2648 = vmul.f32 %v2577, 0.0078125
        %v2649 = vmul.f32 %v2579, 0.0078125
        %v2650 = vmul.f32 %v2581, 0.0078125
        %v2651 = vmul.f32 %v2583, 0.0078125
        %v2652 = vmul.f32 %v2585, 0.0078125
        %v2653 = vmul.f32 %v2587, 0.0078125
        %v2654 = vmul.f32 %v2589, 0.0078125
        %v2655 = vmul.f32 %v2591, 0.0078125
        %v2656 = vmul.f32 %v2609, 0.0078125
        %v2657 = vmul.f32 %v2611, 0.0078125
        %v2658 = vmul.f32 %v2613, 0.0078125
        %v2659 = vmul.f32 %v2615, 0.0078125
        %v2660 = vmul.f32 %v2617, 0.0078125
        %v2661 = vmul.f32 %v2619, 0.0078125
        %v2662 = vmul.f32 %v2621, 0.0078125
        %v2663 = vmul.f32 %v2623, 0.0078125
        %v2664 = vmul.f32 %v2625, 0.0078125
        %v2665 = vmul.f32 %v2627, 0.0078125
        %v2666 = vmul.f32 %v2629, 0.0078125
        %v2667 = vmul.f32 %v2631, 0.0078125
        %v2668 = vmul.f32 %v2633, 0.0078125
        %v2669 = vmul.f32 %v2635, 0.0078125
        %v2670 = vmul.f32 %v2637, 0.0078125
        %v2671 = vmul.f32 %v2639, 0.0078125
        %v2672 = vmul.f32 %v2640, %v2640
        %v2673 = vmul.f32 %v2641, %v2641
        %v2674 = vmul.f32 %v2642, %v2642
        %v2675 = vmul.f32 %v2643, %v2643
        %v2676 = vmul.f32 %v2644, %v2644
        %v2677 = vmul.f32 %v2645, %v2645
        %v2678 = vmul.f32 %v2646, %v2646
        %v2679 = vmul.f32 %v2647, %v2647
        %v2680 = vmul.f32 %v2648, %v2648
        %v2681 = vmul.f32 %v2649, %v2649
        %v2682 = vmul.f32 %v2650, %v2650
        %v2683 = vmul.f32 %v2651, %v2651
        %v2684 = vmul.f32 %v2652, %v2652
        %v2685 = vmul.f32 %v2653, %v2653
        %v2686 = vmul.f32 %v2654, %v2654
        %v2687 = vmul.f32 %v2655, %v2655
        %v2688 = vsub.f32 %v2656, %v2672
        %v2689 = vsub.f32 %v2657, %v2673
        %v2690 = vsub.f32 %v2658, %v2674
        %v2691 = vsub.f32 %v2659, %v2675
        %v2692 = vsub.f32 %v2660, %v2676
        %v2693 = vsub.f32 %v2661, %v2677
        %v2694 = vsub.f32 %v2662, %v2678
        %v2695 = vsub.f32 %v2663, %v2679
        %v2696 = vsub.f32 %v2664, %v2680
        %v2697 = vsub.f32 %v2665, %v2681
        %v2698 = vsub.f32 %v2666, %v2682
        %v2699 = vsub.f32 %v2667, %v2683
        %v2700 = vsub.f32 %v2668, %v2684
        %v2701 = vsub.f32 %v2669, %v2685
        %v2702 = vsub.f32 %v2670, %v2686
        %v2703 = vsub.f32 %v2671, %v2687
        %v2704 = vadd.f32 %v2688, 1e-05
        %v2705 = vadd.f32 %v2689, 1e-05
        %v2706 = vadd.f32 %v2690, 1e-05
        %v2707 = vadd.f32 %v2691, 1e-05
        %v2708 = vadd.f32 %v2692, 1e-05
        %v2709 = vadd.f32 %v2693, 1e-05
        %v2710 = vadd.f32 %v2694, 1e-05
        %v2711 = vadd.f32 %v2695, 1e-05
        %v2712 = vadd.f32 %v2696, 1e-05
        %v2713 = vadd.f32 %v2697, 1e-05
        %v2714 = vadd.f32 %v2698, 1e-05
        %v2715 = vadd.f32 %v2699, 1e-05
        %v2716 = vadd.f32 %v2700, 1e-05
        %v2717 = vadd.f32 %v2701, 1e-05
        %v2718 = vadd.f32 %v2702, 1e-05
        %v2719 = vadd.f32 %v2703, 1e-05
        %v2720 = vrsqrt.pop %v2704
        %v2721 = vrsqrt.pop %v2705
        %v2722 = vrsqrt.pop %v2706
        %v2723 = vrsqrt.pop %v2707
        %v2724 = vrsqrt.pop %v2708
        %v2725 = vrsqrt.pop %v2709
        %v2726 = vrsqrt.pop %v2710
        %v2727 = vrsqrt.pop %v2711
        %v2728 = vrsqrt.pop %v2712
        %v2729 = vrsqrt.pop %v2713
        %v2730 = vrsqrt.pop %v2714
        %v2731 = vrsqrt.pop %v2715
        %v2732 = vrsqrt.pop %v2716
        %v2733 = vrsqrt.pop %v2717
        %v2734 = vrsqrt.pop %v2718
        %v2735 = vrsqrt.pop %v2719
        %v2736 = vsub.f32 %v2544, %v2640
        %v2737 = vsub.f32 %v2545, %v2641
        %v2738 = vsub.f32 %v2546, %v2642
        %v2739 = vsub.f32 %v2547, %v2643
        %v2740 = vsub.f32 %v2548, %v2644
        %v2741 = vsub.f32 %v2549, %v2645
        %v2742 = vsub.f32 %v2550, %v2646
        %v2743 = vsub.f32 %v2551, %v2647
        %v2744 = vsub.f32 %v2552, %v2648
        %v2745 = vsub.f32 %v2553, %v2649
        %v2746 = vsub.f32 %v2554, %v2650
        %v2747 = vsub.f32 %v2555, %v2651
        %v2748 = vsub.f32 %v2556, %v2652
        %v2749 = vsub.f32 %v2557, %v2653
        %v2750 = vsub.f32 %v2558, %v2654
        %v2751 = vsub.f32 %v2559, %v2655
        %v2752 = vmul.f32 %v2736, %v2720
        %v2753 = vmul.f32 %v2737, %v2721
        %v2754 = vmul.f32 %v2738, %v2722
        %v2755 = vmul.f32 %v2739, %v2723
        %v2756 = vmul.f32 %v2740, %v2724
        %v2757 = vmul.f32 %v2741, %v2725
        %v2758 = vmul.f32 %v2742, %v2726
        %v2759 = vmul.f32 %v2743, %v2727
        %v2760 = vmul.f32 %v2744, %v2728
        %v2761 = vmul.f32 %v2745, %v2729
        %v2762 = vmul.f32 %v2746, %v2730
        %v2763 = vmul.f32 %v2747, %v2731
        %v2764 = vmul.f32 %v2748, %v2732
        %v2765 = vmul.f32 %v2749, %v2733
        %v2766 = vmul.f32 %v2750, %v2734
        %v2767 = vmul.f32 %v2751, %v2735
        %s2768 = scalar_lea.vmem %s3, 2
        %v2769 = vld [vmem:[%s2768] sm:$0x1]
        %v2771 = vlaneseq
        %v2772 = vshrl.u32 %v2771, 7
        %v2773 = vsub.s32 0, %v2772
        %v2774 = vrot.slane %v2769, %v2773
        %v2776 = vmul.f32 %v2752, %v2774
        %v2777 = vmul.f32 %v2753, %v2774
        %v2778 = vmul.f32 %v2754, %v2774
        %v2779 = vmul.f32 %v2755, %v2774
        %v2780 = vmul.f32 %v2756, %v2774
        %v2781 = vmul.f32 %v2757, %v2774
        %v2782 = vmul.f32 %v2758, %v2774
        %v2783 = vmul.f32 %v2759, %v2774
        %v2784 = vmul.f32 %v2760, %v2774
        %v2785 = vmul.f32 %v2761, %v2774
        %v2786 = vmul.f32 %v2762, %v2774
        %v2787 = vmul.f32 %v2763, %v2774
        %v2788 = vmul.f32 %v2764, %v2774
        %v2789 = vmul.f32 %v2765, %v2774
        %v2790 = vmul.f32 %v2766, %v2774
        %v2791 = vmul.f32 %v2767, %v2774
        %s2792 = scalar_lea.vmem [#allocation8], 2
        %v2793 = vld [vmem:[%s2792] sm:$0x1]
        %v2795 = vlaneseq
        %v2796 = vshrl.u32 %v2795, 7
        %v2797 = vsub.s32 0, %v2796
        %v2798 = vrot.slane %v2793, %v2797
        %v2800 = vadd.f32 %v2776, %v2798
        %v2801 = vadd.f32 %v2777, %v2798
        %v2802 = vadd.f32 %v2778, %v2798
        %v2803 = vadd.f32 %v2779, %v2798
        %v2804 = vadd.f32 %v2780, %v2798
        %v2805 = vadd.f32 %v2781, %v2798
        %v2806 = vadd.f32 %v2782, %v2798
        %v2807 = vadd.f32 %v2783, %v2798
        %v2808 = vadd.f32 %v2784, %v2798
        %v2809 = vadd.f32 %v2785, %v2798
        %v2810 = vadd.f32 %v2786, %v2798
        %v2811 = vadd.f32 %v2787, %v2798
        %v2812 = vadd.f32 %v2788, %v2798
        %v2813 = vadd.f32 %v2789, %v2798
        %v2814 = vadd.f32 %v2790, %v2798
        %v2815 = vadd.f32 %v2791, %v2798
        %v2816 = vpack.c.bf16 %v2801, %v2800
        %v2817 = vpack.c.bf16 %v2803, %v2802
        %v2818 = vpack.c.bf16 %v2805, %v2804
        %v2819 = vpack.c.bf16 %v2807, %v2806
        %v2820 = vpack.c.bf16 %v2809, %v2808
        %v2821 = vpack.c.bf16 %v2811, %v2810
        %v2822 = vpack.c.bf16 %v2813, %v2812
        %v2823 = vpack.c.bf16 %v2815, %v2814
        %s2824 = scalar_lea.vmem [#allocation5], 576
        %v2825 = vld [vmem:[%s2824] sm:$0xf]
        %v2826 = vld [vmem:[%s2824 + $0x4] sm:$0xf]
        %v2827 = vld [vmem:[%s2824 + $0x8] sm:$0xf]
        %v2828 = vld [vmem:[%s2824 + $0xc] sm:$0xf]
        %v2829 = vld [vmem:[%s2824 + $0x10] sm:$0xf]
        %v2830 = vld [vmem:[%s2824 + $0x14] sm:$0xf]
        %v2831 = vld [vmem:[%s2824 + $0x18] sm:$0xf]
        %v2832 = vld [vmem:[%s2824 + $0x1c] sm:$0xf]
        %v2833 = vld [vmem:[%s2824 + $0x20] sm:$0xf]
        %v2834 = vld [vmem:[%s2824 + $0x24] sm:$0xf]
        %v2835 = vld [vmem:[%s2824 + $0x28] sm:$0xf]
        %v2836 = vld [vmem:[%s2824 + $0x2c] sm:$0xf]
        %v2837 = vld [vmem:[%s2824 + $0x30] sm:$0xf]
        %v2838 = vld [vmem:[%s2824 + $0x34] sm:$0xf]
        %v2839 = vld [vmem:[%s2824 + $0x38] sm:$0xf]
        %v2840 = vld [vmem:[%s2824 + $0x3c] sm:$0xf]
        %s2841 = scalar_lea.vmem [#allocation7], 9
        %v2842 = vld [vmem:[%s2841] sm:$0x1]
        %v2844 = vlaneseq
        %v2845 = vshrl.u32 %v2844, 7
        %v2846 = vsub.s32 0, %v2845
        %v2847 = vrot.slane %v2842, %v2846
        %v2865 = vunpack.c.l.b16 %v2825
        %v2866 = vunpack.c.l.b16 %v2826
        %v2867 = vunpack.c.l.b16 %v2827
        %v2868 = vunpack.c.l.b16 %v2828
        %v2869 = vunpack.c.l.b16 %v2829
        %v2870 = vunpack.c.l.b16 %v2830
        %v2871 = vunpack.c.l.b16 %v2831
        %v2872 = vunpack.c.l.b16 %v2832
        %v2873 = vunpack.c.l.b16 %v2833
        %v2874 = vunpack.c.l.b16 %v2834
        %v2875 = vunpack.c.l.b16 %v2835
        %v2876 = vunpack.c.l.b16 %v2836
        %v2877 = vunpack.c.l.b16 %v2837
        %v2878 = vunpack.c.l.b16 %v2838
        %v2879 = vunpack.c.l.b16 %v2839
        %v2880 = vunpack.c.l.b16 %v2840
        %v2881 = vpack.c.b16 %v2866, %v2865
        %v2882 = vpack.c.b16 %v2868, %v2867
        %v2883 = vpack.c.b16 %v2870, %v2869
        %v2884 = vpack.c.b16 %v2872, %v2871
        %v2885 = vpack.c.b16 %v2874, %v2873
        %v2886 = vpack.c.b16 %v2876, %v2875
        %v2887 = vpack.c.b16 %v2878, %v2877
        %v2888 = vpack.c.b16 %v2880, %v2879
        %2897 = vmatprep.subr.bf16.mxu0 0
        %2898 = vmatpush1.bf16.msra.mxu0 %v2888
        %2899 = vmatprep.subr.bf16.mxu0 0
        %2900 = vmatpush1.bf16.msra.mxu0 %v2887
        %2901 = vmatprep.subr.bf16.mxu0 0
        %2902 = vmatpush1.bf16.msra.mxu0 %v2886
        %2903 = vmatprep.subr.bf16.mxu0 0
        %2904 = vmatpush1.bf16.msra.mxu0 %v2885
        %2905 = vmatprep.subr.bf16.mxu0 0
        %2906 = vmatpush1.bf16.msra.mxu0 %v2884
        %2907 = vmatprep.subr.bf16.mxu0 0
        %2908 = vmatpush1.bf16.msra.mxu0 %v2883
        %2909 = vmatprep.subr.bf16.mxu0 0
        %2910 = vmatpush1.bf16.msra.mxu0 %v2882
        %2911 = vmatprep.subr.bf16.mxu0 0
        %2912 = vmatpush1.bf16.msra.mxu0 %v2881
        %2913 = vmatprep.subr.bf16.mxu0 0
        %2914 = vmatpush2.bf16.msra.mxu0 0
        %2915 = vmatprep.subr.bf16.mxu0 0
        %2916 = vmatpush2.bf16.msra.mxu0 0
        %2917 = vmatprep.subr.bf16.mxu0 0
        %2918 = vmatpush2.bf16.msra.mxu0 0
        %2919 = vmatprep.subr.bf16.mxu0 0
        %2920 = vmatpush2.bf16.msra.mxu0 0
        %2921 = vmatprep.subr.bf16.mxu0 0
        %2922 = vmatpush2.bf16.msra.mxu0 0
        %2923 = vmatprep.subr.bf16.mxu0 0
        %2924 = vmatpush2.bf16.msra.mxu0 0
        %2925 = vmatprep.subr.bf16.mxu0 0
        %2926 = vmatpush2.bf16.msra.mxu0 0
        %2927 = vmatprep.subr.bf16.mxu0 0
        %2928 = vmatpush2.bf16.msra.mxu0 0
        %2929 = vmatprep.mubr.bf16.mxu0 0
        %2930 = vmatmul.mubr.bf16.gmra.mxu0 %v2816
        %v2931 = vpop.f32.mrf.mxu0
        %v2932 = vadd.f32 %v2847, %v2931
        %v2933 = vpop.f32.mrf.mxu0
        %v2934 = vpop.f32.mrf.mxu0
        %v2935 = vadd.f32 %v2847, %v2934
        %v2936 = vpop.f32.mrf.mxu0
        %2937 = vmatprep.mubr.bf16.mxu0 0
        %2938 = vmatmul.mubr.bf16.gmra.mxu0 %v2817
        %v2939 = vpop.f32.mrf.mxu0
        %v2940 = vadd.f32 %v2847, %v2939
        %v2941 = vpop.f32.mrf.mxu0
        %v2942 = vpop.f32.mrf.mxu0
        %v2943 = vadd.f32 %v2847, %v2942
        %v2944 = vpop.f32.mrf.mxu0
        %2945 = vmatprep.mubr.bf16.mxu0 0
        %2946 = vmatmul.mubr.bf16.gmra.mxu0 %v2818
        %v2947 = vpop.f32.mrf.mxu0
        %v2948 = vadd.f32 %v2847, %v2947
        %v2949 = vpop.f32.mrf.mxu0
        %v2950 = vpop.f32.mrf.mxu0
        %v2951 = vadd.f32 %v2847, %v2950
        %v2952 = vpop.f32.mrf.mxu0
        %2953 = vmatprep.mubr.bf16.mxu0 0
        %2954 = vmatmul.mubr.bf16.gmra.mxu0 %v2819
        %v2955 = vpop.f32.mrf.mxu0
        %v2956 = vadd.f32 %v2847, %v2955
        %v2957 = vpop.f32.mrf.mxu0
        %v2958 = vpop.f32.mrf.mxu0
        %v2959 = vadd.f32 %v2847, %v2958
        %v2960 = vpop.f32.mrf.mxu0
        %2961 = vmatprep.mubr.bf16.mxu0 0
        %2962 = vmatmul.mubr.bf16.gmra.mxu0 %v2820
        %v2963 = vpop.f32.mrf.mxu0
        %v2964 = vadd.f32 %v2847, %v2963
        %v2965 = vpop.f32.mrf.mxu0
        %v2966 = vpop.f32.mrf.mxu0
        %v2967 = vadd.f32 %v2847, %v2966
        %v2968 = vpop.f32.mrf.mxu0
        %2969 = vmatprep.mubr.bf16.mxu0 0
        %2970 = vmatmul.mubr.bf16.gmra.mxu0 %v2821
        %v2971 = vpop.f32.mrf.mxu0
        %v2972 = vadd.f32 %v2847, %v2971
        %v2973 = vpop.f32.mrf.mxu0
        %v2974 = vpop.f32.mrf.mxu0
        %v2975 = vadd.f32 %v2847, %v2974
        %v2976 = vpop.f32.mrf.mxu0
        %2977 = vmatprep.mubr.bf16.mxu0 0
        %2978 = vmatmul.mubr.bf16.gmra.mxu0 %v2822
        %v2979 = vpop.f32.mrf.mxu0
        %v2980 = vadd.f32 %v2847, %v2979
        %v2981 = vpop.f32.mrf.mxu0
        %v2982 = vpop.f32.mrf.mxu0
        %v2983 = vadd.f32 %v2847, %v2982
        %v2984 = vpop.f32.mrf.mxu0
        %2985 = vmatprep.mubr.bf16.mxu0 0
        %2986 = vmatmul.mubr.bf16.gmra.mxu0 %v2823
        %v2987 = vpop.f32.mrf.mxu0
        %v2988 = vadd.f32 %v2847, %v2987
        %v2989 = vpop.f32.mrf.mxu0
        %v2990 = vpop.f32.mrf.mxu0
        %v2991 = vadd.f32 %v2847, %v2990
        %v2992 = vpop.f32.mrf.mxu0
        %2993 = vdwg.mxu0
        %v2994 = vmax.f32 %v2932, 0.0
        %v2995 = vmax.f32 %v2935, 0.0
        %v2996 = vmax.f32 %v2940, 0.0
        %v2997 = vmax.f32 %v2943, 0.0
        %v2998 = vmax.f32 %v2948, 0.0
        %v2999 = vmax.f32 %v2951, 0.0
        %v3000 = vmax.f32 %v2956, 0.0
        %v3001 = vmax.f32 %v2959, 0.0
        %v3002 = vmax.f32 %v2964, 0.0
        %v3003 = vmax.f32 %v2967, 0.0
        %v3004 = vmax.f32 %v2972, 0.0
        %v3005 = vmax.f32 %v2975, 0.0
        %v3006 = vmax.f32 %v2980, 0.0
        %v3007 = vmax.f32 %v2983, 0.0
        %v3008 = vmax.f32 %v2988, 0.0
        %v3009 = vmax.f32 %v2991, 0.0
        %v3010 = vpack.c.bf16 %v2995, %v2994
        %v3011 = vpack.c.bf16 %v2997, %v2996
        %v3012 = vpack.c.bf16 %v2999, %v2998
        %v3013 = vpack.c.bf16 %v3001, %v3000
        %v3014 = vpack.c.bf16 %v3003, %v3002
        %v3015 = vpack.c.bf16 %v3005, %v3004
        %v3016 = vpack.c.bf16 %v3007, %v3006
        %v3017 = vpack.c.bf16 %v3009, %v3008
        %s3018 = scalar_lea.vmem [#allocation5], 640
        %v3019 = vld [vmem:[%s3018] sm:$0xf]
        %v3020 = vld [vmem:[%s3018 + $0x4] sm:$0xf]
        %v3021 = vld [vmem:[%s3018 + $0x8] sm:$0xf]
        %v3022 = vld [vmem:[%s3018 + $0xc] sm:$0xf]
        %v3023 = vld [vmem:[%s3018 + $0x10] sm:$0xf]
        %v3024 = vld [vmem:[%s3018 + $0x14] sm:$0xf]
        %v3025 = vld [vmem:[%s3018 + $0x18] sm:$0xf]
        %v3026 = vld [vmem:[%s3018 + $0x1c] sm:$0xf]
        %v3027 = vld [vmem:[%s3018 + $0x20] sm:$0xf]
        %v3028 = vld [vmem:[%s3018 + $0x24] sm:$0xf]
        %v3029 = vld [vmem:[%s3018 + $0x28] sm:$0xf]
        %v3030 = vld [vmem:[%s3018 + $0x2c] sm:$0xf]
        %v3031 = vld [vmem:[%s3018 + $0x30] sm:$0xf]
        %v3032 = vld [vmem:[%s3018 + $0x34] sm:$0xf]
        %v3033 = vld [vmem:[%s3018 + $0x38] sm:$0xf]
        %v3034 = vld [vmem:[%s3018 + $0x3c] sm:$0xf]
        %s3035 = scalar_lea.vmem [#allocation7], 10
        %v3036 = vld [vmem:[%s3035] sm:$0x1]
        %v3038 = vlaneseq
        %v3039 = vshrl.u32 %v3038, 7
        %v3040 = vsub.s32 0, %v3039
        %v3041 = vrot.slane %v3036, %v3040
        %v3059 = vunpack.c.l.b16 %v3019
        %v3060 = vunpack.c.l.b16 %v3020
        %v3061 = vunpack.c.l.b16 %v3021
        %v3062 = vunpack.c.l.b16 %v3022
        %v3063 = vunpack.c.l.b16 %v3023
        %v3064 = vunpack.c.l.b16 %v3024
        %v3065 = vunpack.c.l.b16 %v3025
        %v3066 = vunpack.c.l.b16 %v3026
        %v3067 = vunpack.c.l.b16 %v3027
        %v3068 = vunpack.c.l.b16 %v3028
        %v3069 = vunpack.c.l.b16 %v3029
        %v3070 = vunpack.c.l.b16 %v3030
        %v3071 = vunpack.c.l.b16 %v3031
        %v3072 = vunpack.c.l.b16 %v3032
        %v3073 = vunpack.c.l.b16 %v3033
        %v3074 = vunpack.c.l.b16 %v3034
        %v3075 = vpack.c.b16 %v3060, %v3059
        %v3076 = vpack.c.b16 %v3062, %v3061
        %v3077 = vpack.c.b16 %v3064, %v3063
        %v3078 = vpack.c.b16 %v3066, %v3065
        %v3079 = vpack.c.b16 %v3068, %v3067
        %v3080 = vpack.c.b16 %v3070, %v3069
        %v3081 = vpack.c.b16 %v3072, %v3071
        %v3082 = vpack.c.b16 %v3074, %v3073
        %3091 = vmatprep.subr.bf16.mxu0 0
        %3092 = vmatpush1.bf16.msra.mxu0 %v3082
        %3093 = vmatprep.subr.bf16.mxu0 0
        %3094 = vmatpush1.bf16.msra.mxu0 %v3081
        %3095 = vmatprep.subr.bf16.mxu0 0
        %3096 = vmatpush1.bf16.msra.mxu0 %v3080
        %3097 = vmatprep.subr.bf16.mxu0 0
        %3098 = vmatpush1.bf16.msra.mxu0 %v3079
        %3099 = vmatprep.subr.bf16.mxu0 0
        %3100 = vmatpush1.bf16.msra.mxu0 %v3078
        %3101 = vmatprep.subr.bf16.mxu0 0
        %3102 = vmatpush1.bf16.msra.mxu0 %v3077
        %3103 = vmatprep.subr.bf16.mxu0 0
        %3104 = vmatpush1.bf16.msra.mxu0 %v3076
        %3105 = vmatprep.subr.bf16.mxu0 0
        %3106 = vmatpush1.bf16.msra.mxu0 %v3075
        %3107 = vmatprep.subr.bf16.mxu0 0
        %3108 = vmatpush2.bf16.msra.mxu0 0
        %3109 = vmatprep.subr.bf16.mxu0 0
        %3110 = vmatpush2.bf16.msra.mxu0 0
        %3111 = vmatprep.subr.bf16.mxu0 0
        %3112 = vmatpush2.bf16.msra.mxu0 0
        %3113 = vmatprep.subr.bf16.mxu0 0
        %3114 = vmatpush2.bf16.msra.mxu0 0
        %3115 = vmatprep.subr.bf16.mxu0 0
        %3116 = vmatpush2.bf16.msra.mxu0 0
        %3117 = vmatprep.subr.bf16.mxu0 0
        %3118 = vmatpush2.bf16.msra.mxu0 0
        %3119 = vmatprep.subr.bf16.mxu0 0
        %3120 = vmatpush2.bf16.msra.mxu0 0
        %3121 = vmatprep.subr.bf16.mxu0 0
        %3122 = vmatpush2.bf16.msra.mxu0 0
        %3123 = vmatprep.mubr.bf16.mxu0 0
        %3124 = vmatmul.mubr.bf16.gmra.mxu0 %v3010
        %v3125 = vpop.f32.mrf.mxu0
        %v3126 = vadd.f32 %v3041, %v3125
        %v3127 = vpop.f32.mrf.mxu0
        %v3128 = vpop.f32.mrf.mxu0
        %v3129 = vadd.f32 %v3041, %v3128
        %v3130 = vpop.f32.mrf.mxu0
        %3131 = vmatprep.mubr.bf16.mxu0 0
        %3132 = vmatmul.mubr.bf16.gmra.mxu0 %v3011
        %v3133 = vpop.f32.mrf.mxu0
        %v3134 = vadd.f32 %v3041, %v3133
        %v3135 = vpop.f32.mrf.mxu0
        %v3136 = vpop.f32.mrf.mxu0
        %v3137 = vadd.f32 %v3041, %v3136
        %v3138 = vpop.f32.mrf.mxu0
        %3139 = vmatprep.mubr.bf16.mxu0 0
        %3140 = vmatmul.mubr.bf16.gmra.mxu0 %v3012
        %v3141 = vpop.f32.mrf.mxu0
        %v3142 = vadd.f32 %v3041, %v3141
        %v3143 = vpop.f32.mrf.mxu0
        %v3144 = vpop.f32.mrf.mxu0
        %v3145 = vadd.f32 %v3041, %v3144
        %v3146 = vpop.f32.mrf.mxu0
        %3147 = vmatprep.mubr.bf16.mxu0 0
        %3148 = vmatmul.mubr.bf16.gmra.mxu0 %v3013
        %v3149 = vpop.f32.mrf.mxu0
        %v3150 = vadd.f32 %v3041, %v3149
        %v3151 = vpop.f32.mrf.mxu0
        %v3152 = vpop.f32.mrf.mxu0
        %v3153 = vadd.f32 %v3041, %v3152
        %v3154 = vpop.f32.mrf.mxu0
        %3155 = vmatprep.mubr.bf16.mxu0 0
        %3156 = vmatmul.mubr.bf16.gmra.mxu0 %v3014
        %v3157 = vpop.f32.mrf.mxu0
        %v3158 = vadd.f32 %v3041, %v3157
        %v3159 = vpop.f32.mrf.mxu0
        %v3160 = vpop.f32.mrf.mxu0
        %v3161 = vadd.f32 %v3041, %v3160
        %v3162 = vpop.f32.mrf.mxu0
        %3163 = vmatprep.mubr.bf16.mxu0 0
        %3164 = vmatmul.mubr.bf16.gmra.mxu0 %v3015
        %v3165 = vpop.f32.mrf.mxu0
        %v3166 = vadd.f32 %v3041, %v3165
        %v3167 = vpop.f32.mrf.mxu0
        %v3168 = vpop.f32.mrf.mxu0
        %v3169 = vadd.f32 %v3041, %v3168
        %v3170 = vpop.f32.mrf.mxu0
        %3171 = vmatprep.mubr.bf16.mxu0 0
        %3172 = vmatmul.mubr.bf16.gmra.mxu0 %v3016
        %v3173 = vpop.f32.mrf.mxu0
        %v3174 = vadd.f32 %v3041, %v3173
        %v3175 = vpop.f32.mrf.mxu0
        %v3176 = vpop.f32.mrf.mxu0
        %v3177 = vadd.f32 %v3041, %v3176
        %v3178 = vpop.f32.mrf.mxu0
        %3179 = vmatprep.mubr.bf16.mxu0 0
        %3180 = vmatmul.mubr.bf16.gmra.mxu0 %v3017
        %v3181 = vpop.f32.mrf.mxu0
        %v3182 = vadd.f32 %v3041, %v3181
        %v3183 = vpop.f32.mrf.mxu0
        %v3184 = vpop.f32.mrf.mxu0
        %v3185 = vadd.f32 %v3041, %v3184
        %v3186 = vpop.f32.mrf.mxu0
        %3187 = vdwg.mxu0
        %v3188 = vmax.f32 %v3126, 0.0
        %v3189 = vmax.f32 %v3129, 0.0
        %v3190 = vmax.f32 %v3134, 0.0
        %v3191 = vmax.f32 %v3137, 0.0
        %v3192 = vmax.f32 %v3142, 0.0
        %v3193 = vmax.f32 %v3145, 0.0
        %v3194 = vmax.f32 %v3150, 0.0
        %v3195 = vmax.f32 %v3153, 0.0
        %v3196 = vmax.f32 %v3158, 0.0
        %v3197 = vmax.f32 %v3161, 0.0
        %v3198 = vmax.f32 %v3166, 0.0
        %v3199 = vmax.f32 %v3169, 0.0
        %v3200 = vmax.f32 %v3174, 0.0
        %v3201 = vmax.f32 %v3177, 0.0
        %v3202 = vmax.f32 %v3182, 0.0
        %v3203 = vmax.f32 %v3185, 0.0
        %v3204 = vpack.c.bf16 %v3189, %v3188
        %v3205 = vpack.c.bf16 %v3191, %v3190
        %v3206 = vpack.c.bf16 %v3193, %v3192
        %v3207 = vpack.c.bf16 %v3195, %v3194
        %v3208 = vpack.c.bf16 %v3197, %v3196
        %v3209 = vpack.c.bf16 %v3199, %v3198
        %v3210 = vpack.c.bf16 %v3201, %v3200
        %v3211 = vpack.c.bf16 %v3203, %v3202
        %s3212 = scalar_lea.vmem [#allocation5], 704
        %v3213 = vld [vmem:[%s3212] sm:$0xf]
        %v3214 = vld [vmem:[%s3212 + $0x4] sm:$0xf]
        %v3215 = vld [vmem:[%s3212 + $0x8] sm:$0xf]
        %v3216 = vld [vmem:[%s3212 + $0xc] sm:$0xf]
        %v3217 = vld [vmem:[%s3212 + $0x10] sm:$0xf]
        %v3218 = vld [vmem:[%s3212 + $0x14] sm:$0xf]
        %v3219 = vld [vmem:[%s3212 + $0x18] sm:$0xf]
        %v3220 = vld [vmem:[%s3212 + $0x1c] sm:$0xf]
        %v3221 = vld [vmem:[%s3212 + $0x20] sm:$0xf]
        %v3222 = vld [vmem:[%s3212 + $0x24] sm:$0xf]
        %v3223 = vld [vmem:[%s3212 + $0x28] sm:$0xf]
        %v3224 = vld [vmem:[%s3212 + $0x2c] sm:$0xf]
        %v3225 = vld [vmem:[%s3212 + $0x30] sm:$0xf]
        %v3226 = vld [vmem:[%s3212 + $0x34] sm:$0xf]
        %v3227 = vld [vmem:[%s3212 + $0x38] sm:$0xf]
        %v3228 = vld [vmem:[%s3212 + $0x3c] sm:$0xf]
        %s3229 = scalar_lea.vmem [#allocation7], 11
        %v3230 = vld [vmem:[%s3229] sm:$0x1]
        %v3232 = vlaneseq
        %v3233 = vshrl.u32 %v3232, 7
        %v3234 = vsub.s32 0, %v3233
        %v3235 = vrot.slane %v3230, %v3234
        %v3253 = vunpack.c.l.b16 %v3213
        %v3254 = vunpack.c.l.b16 %v3214
        %v3255 = vunpack.c.l.b16 %v3215
        %v3256 = vunpack.c.l.b16 %v3216
        %v3257 = vunpack.c.l.b16 %v3217
        %v3258 = vunpack.c.l.b16 %v3218
        %v3259 = vunpack.c.l.b16 %v3219
        %v3260 = vunpack.c.l.b16 %v3220
        %v3261 = vunpack.c.l.b16 %v3221
        %v3262 = vunpack.c.l.b16 %v3222
        %v3263 = vunpack.c.l.b16 %v3223
        %v3264 = vunpack.c.l.b16 %v3224
        %v3265 = vunpack.c.l.b16 %v3225
        %v3266 = vunpack.c.l.b16 %v3226
        %v3267 = vunpack.c.l.b16 %v3227
        %v3268 = vunpack.c.l.b16 %v3228
        %v3269 = vpack.c.b16 %v3254, %v3253
        %v3270 = vpack.c.b16 %v3256, %v3255
        %v3271 = vpack.c.b16 %v3258, %v3257
        %v3272 = vpack.c.b16 %v3260, %v3259
        %v3273 = vpack.c.b16 %v3262, %v3261
        %v3274 = vpack.c.b16 %v3264, %v3263
        %v3275 = vpack.c.b16 %v3266, %v3265
        %v3276 = vpack.c.b16 %v3268, %v3267
        %3285 = vmatprep.subr.bf16.mxu0 0
        %3286 = vmatpush1.bf16.msra.mxu0 %v3276
        %3287 = vmatprep.subr.bf16.mxu0 0
        %3288 = vmatpush1.bf16.msra.mxu0 %v3275
        %3289 = vmatprep.subr.bf16.mxu0 0
        %3290 = vmatpush1.bf16.msra.mxu0 %v3274
        %3291 = vmatprep.subr.bf16.mxu0 0
        %3292 = vmatpush1.bf16.msra.mxu0 %v3273
        %3293 = vmatprep.subr.bf16.mxu0 0
        %3294 = vmatpush1.bf16.msra.mxu0 %v3272
        %3295 = vmatprep.subr.bf16.mxu0 0
        %3296 = vmatpush1.bf16.msra.mxu0 %v3271
        %3297 = vmatprep.subr.bf16.mxu0 0
        %3298 = vmatpush1.bf16.msra.mxu0 %v3270
        %3299 = vmatprep.subr.bf16.mxu0 0
        %3300 = vmatpush1.bf16.msra.mxu0 %v3269
        %3301 = vmatprep.subr.bf16.mxu0 0
        %3302 = vmatpush2.bf16.msra.mxu0 0
        %3303 = vmatprep.subr.bf16.mxu0 0
        %3304 = vmatpush2.bf16.msra.mxu0 0
        %3305 = vmatprep.subr.bf16.mxu0 0
        %3306 = vmatpush2.bf16.msra.mxu0 0
        %3307 = vmatprep.subr.bf16.mxu0 0
        %3308 = vmatpush2.bf16.msra.mxu0 0
        %3309 = vmatprep.subr.bf16.mxu0 0
        %3310 = vmatpush2.bf16.msra.mxu0 0
        %3311 = vmatprep.subr.bf16.mxu0 0
        %3312 = vmatpush2.bf16.msra.mxu0 0
        %3313 = vmatprep.subr.bf16.mxu0 0
        %3314 = vmatpush2.bf16.msra.mxu0 0
        %3315 = vmatprep.subr.bf16.mxu0 0
        %3316 = vmatpush2.bf16.msra.mxu0 0
        %3317 = vmatprep.mubr.bf16.mxu0 0
        %3318 = vmatmul.mubr.bf16.gmra.mxu0 %v3204
        %v3319 = vpop.f32.mrf.mxu0
        %v3320 = vadd.f32 %v3235, %v3319
        %v3321 = vpop.f32.mrf.mxu0
        %v3322 = vpop.f32.mrf.mxu0
        %v3323 = vadd.f32 %v3235, %v3322
        %v3324 = vpop.f32.mrf.mxu0
        %3325 = vmatprep.mubr.bf16.mxu0 0
        %3326 = vmatmul.mubr.bf16.gmra.mxu0 %v3205
        %v3327 = vpop.f32.mrf.mxu0
        %v3328 = vadd.f32 %v3235, %v3327
        %v3329 = vpop.f32.mrf.mxu0
        %v3330 = vpop.f32.mrf.mxu0
        %v3331 = vadd.f32 %v3235, %v3330
        %v3332 = vpop.f32.mrf.mxu0
        %3333 = vmatprep.mubr.bf16.mxu0 0
        %3334 = vmatmul.mubr.bf16.gmra.mxu0 %v3206
        %v3335 = vpop.f32.mrf.mxu0
        %v3336 = vadd.f32 %v3235, %v3335
        %v3337 = vpop.f32.mrf.mxu0
        %v3338 = vpop.f32.mrf.mxu0
        %v3339 = vadd.f32 %v3235, %v3338
        %v3340 = vpop.f32.mrf.mxu0
        %3341 = vmatprep.mubr.bf16.mxu0 0
        %3342 = vmatmul.mubr.bf16.gmra.mxu0 %v3207
        %v3343 = vpop.f32.mrf.mxu0
        %v3344 = vadd.f32 %v3235, %v3343
        %v3345 = vpop.f32.mrf.mxu0
        %v3346 = vpop.f32.mrf.mxu0
        %v3347 = vadd.f32 %v3235, %v3346
        %v3348 = vpop.f32.mrf.mxu0
        %3349 = vmatprep.mubr.bf16.mxu0 0
        %3350 = vmatmul.mubr.bf16.gmra.mxu0 %v3208
        %v3351 = vpop.f32.mrf.mxu0
        %v3352 = vadd.f32 %v3235, %v3351
        %v3353 = vpop.f32.mrf.mxu0
        %v3354 = vpop.f32.mrf.mxu0
        %v3355 = vadd.f32 %v3235, %v3354
        %v3356 = vpop.f32.mrf.mxu0
        %3357 = vmatprep.mubr.bf16.mxu0 0
        %3358 = vmatmul.mubr.bf16.gmra.mxu0 %v3209
        %v3359 = vpop.f32.mrf.mxu0
        %v3360 = vadd.f32 %v3235, %v3359
        %v3361 = vpop.f32.mrf.mxu0
        %v3362 = vpop.f32.mrf.mxu0
        %v3363 = vadd.f32 %v3235, %v3362
        %v3364 = vpop.f32.mrf.mxu0
        %3365 = vmatprep.mubr.bf16.mxu0 0
        %3366 = vmatmul.mubr.bf16.gmra.mxu0 %v3210
        %v3367 = vpop.f32.mrf.mxu0
        %v3368 = vadd.f32 %v3235, %v3367
        %v3369 = vpop.f32.mrf.mxu0
        %v3370 = vpop.f32.mrf.mxu0
        %v3371 = vadd.f32 %v3235, %v3370
        %v3372 = vpop.f32.mrf.mxu0
        %3373 = vmatprep.mubr.bf16.mxu0 0
        %3374 = vmatmul.mubr.bf16.gmra.mxu0 %v3211
        %v3375 = vpop.f32.mrf.mxu0
        %v3376 = vadd.f32 %v3235, %v3375
        %v3377 = vpop.f32.mrf.mxu0
        %v3378 = vpop.f32.mrf.mxu0
        %v3379 = vadd.f32 %v3235, %v3378
        %v3380 = vpop.f32.mrf.mxu0
        %3381 = vdwg.mxu0
        %v3382 = vadd.f32 %v3320, %v2800
        %v3383 = vadd.f32 %v3323, %v2801
        %v3384 = vadd.f32 %v3328, %v2802
        %v3385 = vadd.f32 %v3331, %v2803
        %v3386 = vadd.f32 %v3336, %v2804
        %v3387 = vadd.f32 %v3339, %v2805
        %v3388 = vadd.f32 %v3344, %v2806
        %v3389 = vadd.f32 %v3347, %v2807
        %v3390 = vadd.f32 %v3352, %v2808
        %v3391 = vadd.f32 %v3355, %v2809
        %v3392 = vadd.f32 %v3360, %v2810
        %v3393 = vadd.f32 %v3363, %v2811
        %v3394 = vadd.f32 %v3368, %v2812
        %v3395 = vadd.f32 %v3371, %v2813
        %v3396 = vadd.f32 %v3376, %v2814
        %v3397 = vadd.f32 %v3379, %v2815
        %3398 = vadd.xlane.f32.xlu0 %v3382
        %v3399 = vpop.xlane.xlu0 %3398
        %3400 = vadd.xlane.f32.xlu0 %v3383
        %v3401 = vpop.xlane.xlu0 %3400
        %3402 = vadd.xlane.f32.xlu0 %v3384
        %v3403 = vpop.xlane.xlu0 %3402
        %3404 = vadd.xlane.f32.xlu0 %v3385
        %v3405 = vpop.xlane.xlu0 %3404
        %3406 = vadd.xlane.f32.xlu0 %v3386
        %v3407 = vpop.xlane.xlu0 %3406
        %3408 = vadd.xlane.f32.xlu0 %v3387
        %v3409 = vpop.xlane.xlu0 %3408
        %3410 = vadd.xlane.f32.xlu0 %v3388
        %v3411 = vpop.xlane.xlu0 %3410
        %3412 = vadd.xlane.f32.xlu0 %v3389
        %v3413 = vpop.xlane.xlu0 %3412
        %3414 = vadd.xlane.f32.xlu0 %v3390
        %v3415 = vpop.xlane.xlu0 %3414
        %3416 = vadd.xlane.f32.xlu0 %v3391
        %v3417 = vpop.xlane.xlu0 %3416
        %3418 = vadd.xlane.f32.xlu0 %v3392
        %v3419 = vpop.xlane.xlu0 %3418
        %3420 = vadd.xlane.f32.xlu0 %v3393
        %v3421 = vpop.xlane.xlu0 %3420
        %3422 = vadd.xlane.f32.xlu0 %v3394
        %v3423 = vpop.xlane.xlu0 %3422
        %3424 = vadd.xlane.f32.xlu0 %v3395
        %v3425 = vpop.xlane.xlu0 %3424
        %3426 = vadd.xlane.f32.xlu0 %v3396
        %v3427 = vpop.xlane.xlu0 %3426
        %3428 = vadd.xlane.f32.xlu0 %v3397
        %v3429 = vpop.xlane.xlu0 %3428
        %v3430 = vmul.f32 %v3382, %v3382
        %v3431 = vmul.f32 %v3383, %v3383
        %v3432 = vmul.f32 %v3384, %v3384
        %v3433 = vmul.f32 %v3385, %v3385
        %v3434 = vmul.f32 %v3386, %v3386
        %v3435 = vmul.f32 %v3387, %v3387
        %v3436 = vmul.f32 %v3388, %v3388
        %v3437 = vmul.f32 %v3389, %v3389
        %v3438 = vmul.f32 %v3390, %v3390
        %v3439 = vmul.f32 %v3391, %v3391
        %v3440 = vmul.f32 %v3392, %v3392
        %v3441 = vmul.f32 %v3393, %v3393
        %v3442 = vmul.f32 %v3394, %v3394
        %v3443 = vmul.f32 %v3395, %v3395
        %v3444 = vmul.f32 %v3396, %v3396
        %v3445 = vmul.f32 %v3397, %v3397
        %3446 = vadd.xlane.f32.xlu0 %v3430
        %v3447 = vpop.xlane.xlu0 %3446
        %3448 = vadd.xlane.f32.xlu0 %v3431
        %v3449 = vpop.xlane.xlu0 %3448
        %3450 = vadd.xlane.f32.xlu0 %v3432
        %v3451 = vpop.xlane.xlu0 %3450
        %3452 = vadd.xlane.f32.xlu0 %v3433
        %v3453 = vpop.xlane.xlu0 %3452
        %3454 = vadd.xlane.f32.xlu0 %v3434
        %v3455 = vpop.xlane.xlu0 %3454
        %3456 = vadd.xlane.f32.xlu0 %v3435
        %v3457 = vpop.xlane.xlu0 %3456
        %3458 = vadd.xlane.f32.xlu0 %v3436
        %v3459 = vpop.xlane.xlu0 %3458
        %3460 = vadd.xlane.f32.xlu0 %v3437
        %v3461 = vpop.xlane.xlu0 %3460
        %3462 = vadd.xlane.f32.xlu0 %v3438
        %v3463 = vpop.xlane.xlu0 %3462
        %3464 = vadd.xlane.f32.xlu0 %v3439
        %v3465 = vpop.xlane.xlu0 %3464
        %3466 = vadd.xlane.f32.xlu0 %v3440
        %v3467 = vpop.xlane.xlu0 %3466
        %3468 = vadd.xlane.f32.xlu0 %v3441
        %v3469 = vpop.xlane.xlu0 %3468
        %3470 = vadd.xlane.f32.xlu0 %v3442
        %v3471 = vpop.xlane.xlu0 %3470
        %3472 = vadd.xlane.f32.xlu0 %v3443
        %v3473 = vpop.xlane.xlu0 %3472
        %3474 = vadd.xlane.f32.xlu0 %v3444
        %v3475 = vpop.xlane.xlu0 %3474
        %3476 = vadd.xlane.f32.xlu0 %v3445
        %v3477 = vpop.xlane.xlu0 %3476
        %v3478 = vmul.f32 %v3399, 0.0078125
        %v3479 = vmul.f32 %v3401, 0.0078125
        %v3480 = vmul.f32 %v3403, 0.0078125
        %v3481 = vmul.f32 %v3405, 0.0078125
        %v3482 = vmul.f32 %v3407, 0.0078125
        %v3483 = vmul.f32 %v3409, 0.0078125
        %v3484 = vmul.f32 %v3411, 0.0078125
        %v3485 = vmul.f32 %v3413, 0.0078125
        %v3486 = vmul.f32 %v3415, 0.0078125
        %v3487 = vmul.f32 %v3417, 0.0078125
        %v3488 = vmul.f32 %v3419, 0.0078125
        %v3489 = vmul.f32 %v3421, 0.0078125
        %v3490 = vmul.f32 %v3423, 0.0078125
        %v3491 = vmul.f32 %v3425, 0.0078125
        %v3492 = vmul.f32 %v3427, 0.0078125
        %v3493 = vmul.f32 %v3429, 0.0078125
        %v3494 = vmul.f32 %v3447, 0.0078125
        %v3495 = vmul.f32 %v3449, 0.0078125
        %v3496 = vmul.f32 %v3451, 0.0078125
        %v3497 = vmul.f32 %v3453, 0.0078125
        %v3498 = vmul.f32 %v3455, 0.0078125
        %v3499 = vmul.f32 %v3457, 0.0078125
        %v3500 = vmul.f32 %v3459, 0.0078125
        %v3501 = vmul.f32 %v3461, 0.0078125
        %v3502 = vmul.f32 %v3463, 0.0078125
        %v3503 = vmul.f32 %v3465, 0.0078125
        %v3504 = vmul.f32 %v3467, 0.0078125
        %v3505 = vmul.f32 %v3469, 0.0078125
        %v3506 = vmul.f32 %v3471, 0.0078125
        %v3507 = vmul.f32 %v3473, 0.0078125
        %v3508 = vmul.f32 %v3475, 0.0078125
        %v3509 = vmul.f32 %v3477, 0.0078125
        %v3510 = vmul.f32 %v3478, %v3478
        %v3511 = vmul.f32 %v3479, %v3479
        %v3512 = vmul.f32 %v3480, %v3480
        %v3513 = vmul.f32 %v3481, %v3481
        %v3514 = vmul.f32 %v3482, %v3482
        %v3515 = vmul.f32 %v3483, %v3483
        %v3516 = vmul.f32 %v3484, %v3484
        %v3517 = vmul.f32 %v3485, %v3485
        %v3518 = vmul.f32 %v3486, %v3486
        %v3519 = vmul.f32 %v3487, %v3487
        %v3520 = vmul.f32 %v3488, %v3488
        %v3521 = vmul.f32 %v3489, %v3489
        %v3522 = vmul.f32 %v3490, %v3490
        %v3523 = vmul.f32 %v3491, %v3491
        %v3524 = vmul.f32 %v3492, %v3492
        %v3525 = vmul.f32 %v3493, %v3493
        %v3526 = vsub.f32 %v3494, %v3510
        %v3527 = vsub.f32 %v3495, %v3511
        %v3528 = vsub.f32 %v3496, %v3512
        %v3529 = vsub.f32 %v3497, %v3513
        %v3530 = vsub.f32 %v3498, %v3514
        %v3531 = vsub.f32 %v3499, %v3515
        %v3532 = vsub.f32 %v3500, %v3516
        %v3533 = vsub.f32 %v3501, %v3517
        %v3534 = vsub.f32 %v3502, %v3518
        %v3535 = vsub.f32 %v3503, %v3519
        %v3536 = vsub.f32 %v3504, %v3520
        %v3537 = vsub.f32 %v3505, %v3521
        %v3538 = vsub.f32 %v3506, %v3522
        %v3539 = vsub.f32 %v3507, %v3523
        %v3540 = vsub.f32 %v3508, %v3524
        %v3541 = vsub.f32 %v3509, %v3525
        %v3542 = vadd.f32 %v3526, 1e-05
        %v3543 = vadd.f32 %v3527, 1e-05
        %v3544 = vadd.f32 %v3528, 1e-05
        %v3545 = vadd.f32 %v3529, 1e-05
        %v3546 = vadd.f32 %v3530, 1e-05
        %v3547 = vadd.f32 %v3531, 1e-05
        %v3548 = vadd.f32 %v3532, 1e-05
        %v3549 = vadd.f32 %v3533, 1e-05
        %v3550 = vadd.f32 %v3534, 1e-05
        %v3551 = vadd.f32 %v3535, 1e-05
        %v3552 = vadd.f32 %v3536, 1e-05
        %v3553 = vadd.f32 %v3537, 1e-05
        %v3554 = vadd.f32 %v3538, 1e-05
        %v3555 = vadd.f32 %v3539, 1e-05
        %v3556 = vadd.f32 %v3540, 1e-05
        %v3557 = vadd.f32 %v3541, 1e-05
        %v3558 = vrsqrt.pop %v3542
        %v3559 = vrsqrt.pop %v3543
        %v3560 = vrsqrt.pop %v3544
        %v3561 = vrsqrt.pop %v3545
        %v3562 = vrsqrt.pop %v3546
        %v3563 = vrsqrt.pop %v3547
        %v3564 = vrsqrt.pop %v3548
        %v3565 = vrsqrt.pop %v3549
        %v3566 = vrsqrt.pop %v3550
        %v3567 = vrsqrt.pop %v3551
        %v3568 = vrsqrt.pop %v3552
        %v3569 = vrsqrt.pop %v3553
        %v3570 = vrsqrt.pop %v3554
        %v3571 = vrsqrt.pop %v3555
        %v3572 = vrsqrt.pop %v3556
        %v3573 = vrsqrt.pop %v3557
        %v3574 = vsub.f32 %v3382, %v3478
        %v3575 = vsub.f32 %v3383, %v3479
        %v3576 = vsub.f32 %v3384, %v3480
        %v3577 = vsub.f32 %v3385, %v3481
        %v3578 = vsub.f32 %v3386, %v3482
        %v3579 = vsub.f32 %v3387, %v3483
        %v3580 = vsub.f32 %v3388, %v3484
        %v3581 = vsub.f32 %v3389, %v3485
        %v3582 = vsub.f32 %v3390, %v3486
        %v3583 = vsub.f32 %v3391, %v3487
        %v3584 = vsub.f32 %v3392, %v3488
        %v3585 = vsub.f32 %v3393, %v3489
        %v3586 = vsub.f32 %v3394, %v3490
        %v3587 = vsub.f32 %v3395, %v3491
        %v3588 = vsub.f32 %v3396, %v3492
        %v3589 = vsub.f32 %v3397, %v3493
        %v3590 = vmul.f32 %v3574, %v3558
        %v3591 = vmul.f32 %v3575, %v3559
        %v3592 = vmul.f32 %v3576, %v3560
        %v3593 = vmul.f32 %v3577, %v3561
        %v3594 = vmul.f32 %v3578, %v3562
        %v3595 = vmul.f32 %v3579, %v3563
        %v3596 = vmul.f32 %v3580, %v3564
        %v3597 = vmul.f32 %v3581, %v3565
        %v3598 = vmul.f32 %v3582, %v3566
        %v3599 = vmul.f32 %v3583, %v3567
        %v3600 = vmul.f32 %v3584, %v3568
        %v3601 = vmul.f32 %v3585, %v3569
        %v3602 = vmul.f32 %v3586, %v3570
        %v3603 = vmul.f32 %v3587, %v3571
        %v3604 = vmul.f32 %v3588, %v3572
        %v3605 = vmul.f32 %v3589, %v3573
        %s3606 = scalar_lea.vmem %s3, 3
        %v3607 = vld [vmem:[%s3606] sm:$0x1]
        %v3609 = vlaneseq
        %v3610 = vshrl.u32 %v3609, 7
        %v3611 = vsub.s32 0, %v3610
        %v3612 = vrot.slane %v3607, %v3611
        %v3614 = vmul.f32 %v3590, %v3612
        %v3615 = vmul.f32 %v3591, %v3612
        %v3616 = vmul.f32 %v3592, %v3612
        %v3617 = vmul.f32 %v3593, %v3612
        %v3618 = vmul.f32 %v3594, %v3612
        %v3619 = vmul.f32 %v3595, %v3612
        %v3620 = vmul.f32 %v3596, %v3612
        %v3621 = vmul.f32 %v3597, %v3612
        %v3622 = vmul.f32 %v3598, %v3612
        %v3623 = vmul.f32 %v3599, %v3612
        %v3624 = vmul.f32 %v3600, %v3612
        %v3625 = vmul.f32 %v3601, %v3612
        %v3626 = vmul.f32 %v3602, %v3612
        %v3627 = vmul.f32 %v3603, %v3612
        %v3628 = vmul.f32 %v3604, %v3612
        %v3629 = vmul.f32 %v3605, %v3612
        %s3630 = scalar_lea.vmem [#allocation8], 3
        %v3631 = vld [vmem:[%s3630] sm:$0x1]
        %v3633 = vlaneseq
        %v3634 = vshrl.u32 %v3633, 7
        %v3635 = vsub.s32 0, %v3634
        %v3636 = vrot.slane %v3631, %v3635
        %v3638 = vadd.f32 %v3614, %v3636
        %v3639 = vadd.f32 %v3615, %v3636
        %v3640 = vadd.f32 %v3616, %v3636
        %v3641 = vadd.f32 %v3617, %v3636
        %v3642 = vadd.f32 %v3618, %v3636
        %v3643 = vadd.f32 %v3619, %v3636
        %v3644 = vadd.f32 %v3620, %v3636
        %v3645 = vadd.f32 %v3621, %v3636
        %v3646 = vadd.f32 %v3622, %v3636
        %v3647 = vadd.f32 %v3623, %v3636
        %v3648 = vadd.f32 %v3624, %v3636
        %v3649 = vadd.f32 %v3625, %v3636
        %v3650 = vadd.f32 %v3626, %v3636
        %v3651 = vadd.f32 %v3627, %v3636
        %v3652 = vadd.f32 %v3628, %v3636
        %v3653 = vadd.f32 %v3629, %v3636
        %v3654 = vpack.c.bf16 %v3639, %v3638
        %v3655 = vpack.c.bf16 %v3641, %v3640
        %v3656 = vpack.c.bf16 %v3643, %v3642
        %v3657 = vpack.c.bf16 %v3645, %v3644
        %v3658 = vpack.c.bf16 %v3647, %v3646
        %v3659 = vpack.c.bf16 %v3649, %v3648
        %v3660 = vpack.c.bf16 %v3651, %v3650
        %v3661 = vpack.c.bf16 %v3653, %v3652
        %s3662 = scalar_lea.vmem [#allocation5], 768
        %v3663 = vld [vmem:[%s3662] sm:$0xf]
        %v3664 = vld [vmem:[%s3662 + $0x4] sm:$0xf]
        %v3665 = vld [vmem:[%s3662 + $0x8] sm:$0xf]
        %v3666 = vld [vmem:[%s3662 + $0xc] sm:$0xf]
        %v3667 = vld [vmem:[%s3662 + $0x10] sm:$0xf]
        %v3668 = vld [vmem:[%s3662 + $0x14] sm:$0xf]
        %v3669 = vld [vmem:[%s3662 + $0x18] sm:$0xf]
        %v3670 = vld [vmem:[%s3662 + $0x1c] sm:$0xf]
        %v3671 = vld [vmem:[%s3662 + $0x20] sm:$0xf]
        %v3672 = vld [vmem:[%s3662 + $0x24] sm:$0xf]
        %v3673 = vld [vmem:[%s3662 + $0x28] sm:$0xf]
        %v3674 = vld [vmem:[%s3662 + $0x2c] sm:$0xf]
        %v3675 = vld [vmem:[%s3662 + $0x30] sm:$0xf]
        %v3676 = vld [vmem:[%s3662 + $0x34] sm:$0xf]
        %v3677 = vld [vmem:[%s3662 + $0x38] sm:$0xf]
        %v3678 = vld [vmem:[%s3662 + $0x3c] sm:$0xf]
        %s3679 = scalar_lea.vmem [#allocation7], 12
        %v3680 = vld [vmem:[%s3679] sm:$0x1]
        %v3682 = vlaneseq
        %v3683 = vshrl.u32 %v3682, 7
        %v3684 = vsub.s32 0, %v3683
        %v3685 = vrot.slane %v3680, %v3684
        %v3703 = vunpack.c.l.b16 %v3663
        %v3704 = vunpack.c.l.b16 %v3664
        %v3705 = vunpack.c.l.b16 %v3665
        %v3706 = vunpack.c.l.b16 %v3666
        %v3707 = vunpack.c.l.b16 %v3667
        %v3708 = vunpack.c.l.b16 %v3668
        %v3709 = vunpack.c.l.b16 %v3669
        %v3710 = vunpack.c.l.b16 %v3670
        %v3711 = vunpack.c.l.b16 %v3671
        %v3712 = vunpack.c.l.b16 %v3672
        %v3713 = vunpack.c.l.b16 %v3673
        %v3714 = vunpack.c.l.b16 %v3674
        %v3715 = vunpack.c.l.b16 %v3675
        %v3716 = vunpack.c.l.b16 %v3676
        %v3717 = vunpack.c.l.b16 %v3677
        %v3718 = vunpack.c.l.b16 %v3678
        %v3719 = vpack.c.b16 %v3704, %v3703
        %v3720 = vpack.c.b16 %v3706, %v3705
        %v3721 = vpack.c.b16 %v3708, %v3707
        %v3722 = vpack.c.b16 %v3710, %v3709
        %v3723 = vpack.c.b16 %v3712, %v3711
        %v3724 = vpack.c.b16 %v3714, %v3713
        %v3725 = vpack.c.b16 %v3716, %v3715
        %v3726 = vpack.c.b16 %v3718, %v3717
        %3735 = vmatprep.subr.bf16.mxu0 0
        %3736 = vmatpush1.bf16.msra.mxu0 %v3726
        %3737 = vmatprep.subr.bf16.mxu0 0
        %3738 = vmatpush1.bf16.msra.mxu0 %v3725
        %3739 = vmatprep.subr.bf16.mxu0 0
        %3740 = vmatpush1.bf16.msra.mxu0 %v3724
        %3741 = vmatprep.subr.bf16.mxu0 0
        %3742 = vmatpush1.bf16.msra.mxu0 %v3723
        %3743 = vmatprep.subr.bf16.mxu0 0
        %3744 = vmatpush1.bf16.msra.mxu0 %v3722
        %3745 = vmatprep.subr.bf16.mxu0 0
        %3746 = vmatpush1.bf16.msra.mxu0 %v3721
        %3747 = vmatprep.subr.bf16.mxu0 0
        %3748 = vmatpush1.bf16.msra.mxu0 %v3720
        %3749 = vmatprep.subr.bf16.mxu0 0
        %3750 = vmatpush1.bf16.msra.mxu0 %v3719
        %3751 = vmatprep.subr.bf16.mxu0 0
        %3752 = vmatpush2.bf16.msra.mxu0 0
        %3753 = vmatprep.subr.bf16.mxu0 0
        %3754 = vmatpush2.bf16.msra.mxu0 0
        %3755 = vmatprep.subr.bf16.mxu0 0
        %3756 = vmatpush2.bf16.msra.mxu0 0
        %3757 = vmatprep.subr.bf16.mxu0 0
        %3758 = vmatpush2.bf16.msra.mxu0 0
        %3759 = vmatprep.subr.bf16.mxu0 0
        %3760 = vmatpush2.bf16.msra.mxu0 0
        %3761 = vmatprep.subr.bf16.mxu0 0
        %3762 = vmatpush2.bf16.msra.mxu0 0
        %3763 = vmatprep.subr.bf16.mxu0 0
        %3764 = vmatpush2.bf16.msra.mxu0 0
        %3765 = vmatprep.subr.bf16.mxu0 0
        %3766 = vmatpush2.bf16.msra.mxu0 0
        %3767 = vmatprep.mubr.bf16.mxu0 0
        %3768 = vmatmul.mubr.bf16.gmra.mxu0 %v3654
        %v3769 = vpop.f32.mrf.mxu0
        %v3770 = vadd.f32 %v3685, %v3769
        %v3771 = vpop.f32.mrf.mxu0
        %v3772 = vpop.f32.mrf.mxu0
        %v3773 = vadd.f32 %v3685, %v3772
        %v3774 = vpop.f32.mrf.mxu0
        %3775 = vmatprep.mubr.bf16.mxu0 0
        %3776 = vmatmul.mubr.bf16.gmra.mxu0 %v3655
        %v3777 = vpop.f32.mrf.mxu0
        %v3778 = vadd.f32 %v3685, %v3777
        %v3779 = vpop.f32.mrf.mxu0
        %v3780 = vpop.f32.mrf.mxu0
        %v3781 = vadd.f32 %v3685, %v3780
        %v3782 = vpop.f32.mrf.mxu0
        %3783 = vmatprep.mubr.bf16.mxu0 0
        %3784 = vmatmul.mubr.bf16.gmra.mxu0 %v3656
        %v3785 = vpop.f32.mrf.mxu0
        %v3786 = vadd.f32 %v3685, %v3785
        %v3787 = vpop.f32.mrf.mxu0
        %v3788 = vpop.f32.mrf.mxu0
        %v3789 = vadd.f32 %v3685, %v3788
        %v3790 = vpop.f32.mrf.mxu0
        %3791 = vmatprep.mubr.bf16.mxu0 0
        %3792 = vmatmul.mubr.bf16.gmra.mxu0 %v3657
        %v3793 = vpop.f32.mrf.mxu0
        %v3794 = vadd.f32 %v3685, %v3793
        %v3795 = vpop.f32.mrf.mxu0
        %v3796 = vpop.f32.mrf.mxu0
        %v3797 = vadd.f32 %v3685, %v3796
        %v3798 = vpop.f32.mrf.mxu0
        %3799 = vmatprep.mubr.bf16.mxu0 0
        %3800 = vmatmul.mubr.bf16.gmra.mxu0 %v3658
        %v3801 = vpop.f32.mrf.mxu0
        %v3802 = vadd.f32 %v3685, %v3801
        %v3803 = vpop.f32.mrf.mxu0
        %v3804 = vpop.f32.mrf.mxu0
        %v3805 = vadd.f32 %v3685, %v3804
        %v3806 = vpop.f32.mrf.mxu0
        %3807 = vmatprep.mubr.bf16.mxu0 0
        %3808 = vmatmul.mubr.bf16.gmra.mxu0 %v3659
        %v3809 = vpop.f32.mrf.mxu0
        %v3810 = vadd.f32 %v3685, %v3809
        %v3811 = vpop.f32.mrf.mxu0
        %v3812 = vpop.f32.mrf.mxu0
        %v3813 = vadd.f32 %v3685, %v3812
        %v3814 = vpop.f32.mrf.mxu0
        %3815 = vmatprep.mubr.bf16.mxu0 0
        %3816 = vmatmul.mubr.bf16.gmra.mxu0 %v3660
        %v3817 = vpop.f32.mrf.mxu0
        %v3818 = vadd.f32 %v3685, %v3817
        %v3819 = vpop.f32.mrf.mxu0
        %v3820 = vpop.f32.mrf.mxu0
        %v3821 = vadd.f32 %v3685, %v3820
        %v3822 = vpop.f32.mrf.mxu0
        %3823 = vmatprep.mubr.bf16.mxu0 0
        %3824 = vmatmul.mubr.bf16.gmra.mxu0 %v3661
        %v3825 = vpop.f32.mrf.mxu0
        %v3826 = vadd.f32 %v3685, %v3825
        %v3827 = vpop.f32.mrf.mxu0
        %v3828 = vpop.f32.mrf.mxu0
        %v3829 = vadd.f32 %v3685, %v3828
        %v3830 = vpop.f32.mrf.mxu0
        %3831 = vdwg.mxu0
        %v3832 = vmax.f32 %v3770, 0.0
        %v3833 = vmax.f32 %v3773, 0.0
        %v3834 = vmax.f32 %v3778, 0.0
        %v3835 = vmax.f32 %v3781, 0.0
        %v3836 = vmax.f32 %v3786, 0.0
        %v3837 = vmax.f32 %v3789, 0.0
        %v3838 = vmax.f32 %v3794, 0.0
        %v3839 = vmax.f32 %v3797, 0.0
        %v3840 = vmax.f32 %v3802, 0.0
        %v3841 = vmax.f32 %v3805, 0.0
        %v3842 = vmax.f32 %v3810, 0.0
        %v3843 = vmax.f32 %v3813, 0.0
        %v3844 = vmax.f32 %v3818, 0.0
        %v3845 = vmax.f32 %v3821, 0.0
        %v3846 = vmax.f32 %v3826, 0.0
        %v3847 = vmax.f32 %v3829, 0.0
        %v3848 = vpack.c.bf16 %v3833, %v3832
        %v3849 = vpack.c.bf16 %v3835, %v3834
        %v3850 = vpack.c.bf16 %v3837, %v3836
        %v3851 = vpack.c.bf16 %v3839, %v3838
        %v3852 = vpack.c.bf16 %v3841, %v3840
        %v3853 = vpack.c.bf16 %v3843, %v3842
        %v3854 = vpack.c.bf16 %v3845, %v3844
        %v3855 = vpack.c.bf16 %v3847, %v3846
        %s3856 = scalar_lea.vmem [#allocation5], 832
        %v3857 = vld [vmem:[%s3856] sm:$0xf]
        %v3858 = vld [vmem:[%s3856 + $0x4] sm:$0xf]
        %v3859 = vld [vmem:[%s3856 + $0x8] sm:$0xf]
        %v3860 = vld [vmem:[%s3856 + $0xc] sm:$0xf]
        %v3861 = vld [vmem:[%s3856 + $0x10] sm:$0xf]
        %v3862 = vld [vmem:[%s3856 + $0x14] sm:$0xf]
        %v3863 = vld [vmem:[%s3856 + $0x18] sm:$0xf]
        %v3864 = vld [vmem:[%s3856 + $0x1c] sm:$0xf]
        %v3865 = vld [vmem:[%s3856 + $0x20] sm:$0xf]
        %v3866 = vld [vmem:[%s3856 + $0x24] sm:$0xf]
        %v3867 = vld [vmem:[%s3856 + $0x28] sm:$0xf]
        %v3868 = vld [vmem:[%s3856 + $0x2c] sm:$0xf]
        %v3869 = vld [vmem:[%s3856 + $0x30] sm:$0xf]
        %v3870 = vld [vmem:[%s3856 + $0x34] sm:$0xf]
        %v3871 = vld [vmem:[%s3856 + $0x38] sm:$0xf]
        %v3872 = vld [vmem:[%s3856 + $0x3c] sm:$0xf]
        %s3873 = scalar_lea.vmem [#allocation7], 13
        %v3874 = vld [vmem:[%s3873] sm:$0x1]
        %v3876 = vlaneseq
        %v3877 = vshrl.u32 %v3876, 7
        %v3878 = vsub.s32 0, %v3877
        %v3879 = vrot.slane %v3874, %v3878
        %v3897 = vunpack.c.l.b16 %v3857
        %v3898 = vunpack.c.l.b16 %v3858
        %v3899 = vunpack.c.l.b16 %v3859
        %v3900 = vunpack.c.l.b16 %v3860
        %v3901 = vunpack.c.l.b16 %v3861
        %v3902 = vunpack.c.l.b16 %v3862
        %v3903 = vunpack.c.l.b16 %v3863
        %v3904 = vunpack.c.l.b16 %v3864
        %v3905 = vunpack.c.l.b16 %v3865
        %v3906 = vunpack.c.l.b16 %v3866
        %v3907 = vunpack.c.l.b16 %v3867
        %v3908 = vunpack.c.l.b16 %v3868
        %v3909 = vunpack.c.l.b16 %v3869
        %v3910 = vunpack.c.l.b16 %v3870
        %v3911 = vunpack.c.l.b16 %v3871
        %v3912 = vunpack.c.l.b16 %v3872
        %v3913 = vpack.c.b16 %v3898, %v3897
        %v3914 = vpack.c.b16 %v3900, %v3899
        %v3915 = vpack.c.b16 %v3902, %v3901
        %v3916 = vpack.c.b16 %v3904, %v3903
        %v3917 = vpack.c.b16 %v3906, %v3905
        %v3918 = vpack.c.b16 %v3908, %v3907
        %v3919 = vpack.c.b16 %v3910, %v3909
        %v3920 = vpack.c.b16 %v3912, %v3911
        %3929 = vmatprep.subr.bf16.mxu0 0
        %3930 = vmatpush1.bf16.msra.mxu0 %v3920
        %3931 = vmatprep.subr.bf16.mxu0 0
        %3932 = vmatpush1.bf16.msra.mxu0 %v3919
        %3933 = vmatprep.subr.bf16.mxu0 0
        %3934 = vmatpush1.bf16.msra.mxu0 %v3918
        %3935 = vmatprep.subr.bf16.mxu0 0
        %3936 = vmatpush1.bf16.msra.mxu0 %v3917
        %3937 = vmatprep.subr.bf16.mxu0 0
        %3938 = vmatpush1.bf16.msra.mxu0 %v3916
        %3939 = vmatprep.subr.bf16.mxu0 0
        %3940 = vmatpush1.bf16.msra.mxu0 %v3915
        %3941 = vmatprep.subr.bf16.mxu0 0
        %3942 = vmatpush1.bf16.msra.mxu0 %v3914
        %3943 = vmatprep.subr.bf16.mxu0 0
        %3944 = vmatpush1.bf16.msra.mxu0 %v3913
        %3945 = vmatprep.subr.bf16.mxu0 0
        %3946 = vmatpush2.bf16.msra.mxu0 0
        %3947 = vmatprep.subr.bf16.mxu0 0
        %3948 = vmatpush2.bf16.msra.mxu0 0
        %3949 = vmatprep.subr.bf16.mxu0 0
        %3950 = vmatpush2.bf16.msra.mxu0 0
        %3951 = vmatprep.subr.bf16.mxu0 0
        %3952 = vmatpush2.bf16.msra.mxu0 0
        %3953 = vmatprep.subr.bf16.mxu0 0
        %3954 = vmatpush2.bf16.msra.mxu0 0
        %3955 = vmatprep.subr.bf16.mxu0 0
        %3956 = vmatpush2.bf16.msra.mxu0 0
        %3957 = vmatprep.subr.bf16.mxu0 0
        %3958 = vmatpush2.bf16.msra.mxu0 0
        %3959 = vmatprep.subr.bf16.mxu0 0
        %3960 = vmatpush2.bf16.msra.mxu0 0
        %3961 = vmatprep.mubr.bf16.mxu0 0
        %3962 = vmatmul.mubr.bf16.gmra.mxu0 %v3848
        %v3963 = vpop.f32.mrf.mxu0
        %v3964 = vadd.f32 %v3879, %v3963
        %v3965 = vpop.f32.mrf.mxu0
        %v3966 = vpop.f32.mrf.mxu0
        %v3967 = vadd.f32 %v3879, %v3966
        %v3968 = vpop.f32.mrf.mxu0
        %3969 = vmatprep.mubr.bf16.mxu0 0
        %3970 = vmatmul.mubr.bf16.gmra.mxu0 %v3849
        %v3971 = vpop.f32.mrf.mxu0
        %v3972 = vadd.f32 %v3879, %v3971
        %v3973 = vpop.f32.mrf.mxu0
        %v3974 = vpop.f32.mrf.mxu0
        %v3975 = vadd.f32 %v3879, %v3974
        %v3976 = vpop.f32.mrf.mxu0
        %3977 = vmatprep.mubr.bf16.mxu0 0
        %3978 = vmatmul.mubr.bf16.gmra.mxu0 %v3850
        %v3979 = vpop.f32.mrf.mxu0
        %v3980 = vadd.f32 %v3879, %v3979
        %v3981 = vpop.f32.mrf.mxu0
        %v3982 = vpop.f32.mrf.mxu0
        %v3983 = vadd.f32 %v3879, %v3982
        %v3984 = vpop.f32.mrf.mxu0
        %3985 = vmatprep.mubr.bf16.mxu0 0
        %3986 = vmatmul.mubr.bf16.gmra.mxu0 %v3851
        %v3987 = vpop.f32.mrf.mxu0
        %v3988 = vadd.f32 %v3879, %v3987
        %v3989 = vpop.f32.mrf.mxu0
        %v3990 = vpop.f32.mrf.mxu0
        %v3991 = vadd.f32 %v3879, %v3990
        %v3992 = vpop.f32.mrf.mxu0
        %3993 = vmatprep.mubr.bf16.mxu0 0
        %3994 = vmatmul.mubr.bf16.gmra.mxu0 %v3852
        %v3995 = vpop.f32.mrf.mxu0
        %v3996 = vadd.f32 %v3879, %v3995
        %v3997 = vpop.f32.mrf.mxu0
        %v3998 = vpop.f32.mrf.mxu0
        %v3999 = vadd.f32 %v3879, %v3998
        %v4000 = vpop.f32.mrf.mxu0
        %4001 = vmatprep.mubr.bf16.mxu0 0
        %4002 = vmatmul.mubr.bf16.gmra.mxu0 %v3853
        %v4003 = vpop.f32.mrf.mxu0
        %v4004 = vadd.f32 %v3879, %v4003
        %v4005 = vpop.f32.mrf.mxu0
        %v4006 = vpop.f32.mrf.mxu0
        %v4007 = vadd.f32 %v3879, %v4006
        %v4008 = vpop.f32.mrf.mxu0
        %4009 = vmatprep.mubr.bf16.mxu0 0
        %4010 = vmatmul.mubr.bf16.gmra.mxu0 %v3854
        %v4011 = vpop.f32.mrf.mxu0
        %v4012 = vadd.f32 %v3879, %v4011
        %v4013 = vpop.f32.mrf.mxu0
        %v4014 = vpop.f32.mrf.mxu0
        %v4015 = vadd.f32 %v3879, %v4014
        %v4016 = vpop.f32.mrf.mxu0
        %4017 = vmatprep.mubr.bf16.mxu0 0
        %4018 = vmatmul.mubr.bf16.gmra.mxu0 %v3855
        %v4019 = vpop.f32.mrf.mxu0
        %v4020 = vadd.f32 %v3879, %v4019
        %v4021 = vpop.f32.mrf.mxu0
        %v4022 = vpop.f32.mrf.mxu0
        %v4023 = vadd.f32 %v3879, %v4022
        %v4024 = vpop.f32.mrf.mxu0
        %4025 = vdwg.mxu0
        %v4026 = vmax.f32 %v3964, 0.0
        %v4027 = vmax.f32 %v3967, 0.0
        %v4028 = vmax.f32 %v3972, 0.0
        %v4029 = vmax.f32 %v3975, 0.0
        %v4030 = vmax.f32 %v3980, 0.0
        %v4031 = vmax.f32 %v3983, 0.0
        %v4032 = vmax.f32 %v3988, 0.0
        %v4033 = vmax.f32 %v3991, 0.0
        %v4034 = vmax.f32 %v3996, 0.0
        %v4035 = vmax.f32 %v3999, 0.0
        %v4036 = vmax.f32 %v4004, 0.0
        %v4037 = vmax.f32 %v4007, 0.0
        %v4038 = vmax.f32 %v4012, 0.0
        %v4039 = vmax.f32 %v4015, 0.0
        %v4040 = vmax.f32 %v4020, 0.0
        %v4041 = vmax.f32 %v4023, 0.0
        %v4042 = vpack.c.bf16 %v4027, %v4026
        %v4043 = vpack.c.bf16 %v4029, %v4028
        %v4044 = vpack.c.bf16 %v4031, %v4030
        %v4045 = vpack.c.bf16 %v4033, %v4032
        %v4046 = vpack.c.bf16 %v4035, %v4034
        %v4047 = vpack.c.bf16 %v4037, %v4036
        %v4048 = vpack.c.bf16 %v4039, %v4038
        %v4049 = vpack.c.bf16 %v4041, %v4040
        %s4050 = scalar_lea.vmem [#allocation5], 896
        %v4051 = vld [vmem:[%s4050] sm:$0xf]
        %v4052 = vld [vmem:[%s4050 + $0x4] sm:$0xf]
        %v4053 = vld [vmem:[%s4050 + $0x8] sm:$0xf]
        %v4054 = vld [vmem:[%s4050 + $0xc] sm:$0xf]
        %v4055 = vld [vmem:[%s4050 + $0x10] sm:$0xf]
        %v4056 = vld [vmem:[%s4050 + $0x14] sm:$0xf]
        %v4057 = vld [vmem:[%s4050 + $0x18] sm:$0xf]
        %v4058 = vld [vmem:[%s4050 + $0x1c] sm:$0xf]
        %v4059 = vld [vmem:[%s4050 + $0x20] sm:$0xf]
        %v4060 = vld [vmem:[%s4050 + $0x24] sm:$0xf]
        %v4061 = vld [vmem:[%s4050 + $0x28] sm:$0xf]
        %v4062 = vld [vmem:[%s4050 + $0x2c] sm:$0xf]
        %v4063 = vld [vmem:[%s4050 + $0x30] sm:$0xf]
        %v4064 = vld [vmem:[%s4050 + $0x34] sm:$0xf]
        %v4065 = vld [vmem:[%s4050 + $0x38] sm:$0xf]
        %v4066 = vld [vmem:[%s4050 + $0x3c] sm:$0xf]
        %s4067 = scalar_lea.vmem [#allocation7], 14
        %v4068 = vld [vmem:[%s4067] sm:$0x1]
        %v4070 = vlaneseq
        %v4071 = vshrl.u32 %v4070, 7
        %v4072 = vsub.s32 0, %v4071
        %v4073 = vrot.slane %v4068, %v4072
        %v4091 = vunpack.c.l.b16 %v4051
        %v4092 = vunpack.c.l.b16 %v4052
        %v4093 = vunpack.c.l.b16 %v4053
        %v4094 = vunpack.c.l.b16 %v4054
        %v4095 = vunpack.c.l.b16 %v4055
        %v4096 = vunpack.c.l.b16 %v4056
        %v4097 = vunpack.c.l.b16 %v4057
        %v4098 = vunpack.c.l.b16 %v4058
        %v4099 = vunpack.c.l.b16 %v4059
        %v4100 = vunpack.c.l.b16 %v4060
        %v4101 = vunpack.c.l.b16 %v4061
        %v4102 = vunpack.c.l.b16 %v4062
        %v4103 = vunpack.c.l.b16 %v4063
        %v4104 = vunpack.c.l.b16 %v4064
        %v4105 = vunpack.c.l.b16 %v4065
        %v4106 = vunpack.c.l.b16 %v4066
        %v4107 = vpack.c.b16 %v4092, %v4091
        %v4108 = vpack.c.b16 %v4094, %v4093
        %v4109 = vpack.c.b16 %v4096, %v4095
        %v4110 = vpack.c.b16 %v4098, %v4097
        %v4111 = vpack.c.b16 %v4100, %v4099
        %v4112 = vpack.c.b16 %v4102, %v4101
        %v4113 = vpack.c.b16 %v4104, %v4103
        %v4114 = vpack.c.b16 %v4106, %v4105
        %4123 = vmatprep.subr.bf16.mxu0 0
        %4124 = vmatpush1.bf16.msra.mxu0 %v4114
        %4125 = vmatprep.subr.bf16.mxu0 0
        %4126 = vmatpush1.bf16.msra.mxu0 %v4113
        %4127 = vmatprep.subr.bf16.mxu0 0
        %4128 = vmatpush1.bf16.msra.mxu0 %v4112
        %4129 = vmatprep.subr.bf16.mxu0 0
        %4130 = vmatpush1.bf16.msra.mxu0 %v4111
        %4131 = vmatprep.subr.bf16.mxu0 0
        %4132 = vmatpush1.bf16.msra.mxu0 %v4110
        %4133 = vmatprep.subr.bf16.mxu0 0
        %4134 = vmatpush1.bf16.msra.mxu0 %v4109
        %4135 = vmatprep.subr.bf16.mxu0 0
        %4136 = vmatpush1.bf16.msra.mxu0 %v4108
        %4137 = vmatprep.subr.bf16.mxu0 0
        %4138 = vmatpush1.bf16.msra.mxu0 %v4107
        %4139 = vmatprep.subr.bf16.mxu0 0
        %4140 = vmatpush2.bf16.msra.mxu0 0
        %4141 = vmatprep.subr.bf16.mxu0 0
        %4142 = vmatpush2.bf16.msra.mxu0 0
        %4143 = vmatprep.subr.bf16.mxu0 0
        %4144 = vmatpush2.bf16.msra.mxu0 0
        %4145 = vmatprep.subr.bf16.mxu0 0
        %4146 = vmatpush2.bf16.msra.mxu0 0
        %4147 = vmatprep.subr.bf16.mxu0 0
        %4148 = vmatpush2.bf16.msra.mxu0 0
        %4149 = vmatprep.subr.bf16.mxu0 0
        %4150 = vmatpush2.bf16.msra.mxu0 0
        %4151 = vmatprep.subr.bf16.mxu0 0
        %4152 = vmatpush2.bf16.msra.mxu0 0
        %4153 = vmatprep.subr.bf16.mxu0 0
        %4154 = vmatpush2.bf16.msra.mxu0 0
        %4155 = vmatprep.mubr.bf16.mxu0 0
        %4156 = vmatmul.mubr.bf16.gmra.mxu0 %v4042
        %v4157 = vpop.f32.mrf.mxu0
        %v4158 = vadd.f32 %v4073, %v4157
        %v4159 = vpop.f32.mrf.mxu0
        %v4160 = vpop.f32.mrf.mxu0
        %v4161 = vadd.f32 %v4073, %v4160
        %v4162 = vpop.f32.mrf.mxu0
        %4163 = vmatprep.mubr.bf16.mxu0 0
        %4164 = vmatmul.mubr.bf16.gmra.mxu0 %v4043
        %v4165 = vpop.f32.mrf.mxu0
        %v4166 = vadd.f32 %v4073, %v4165
        %v4167 = vpop.f32.mrf.mxu0
        %v4168 = vpop.f32.mrf.mxu0
        %v4169 = vadd.f32 %v4073, %v4168
        %v4170 = vpop.f32.mrf.mxu0
        %4171 = vmatprep.mubr.bf16.mxu0 0
        %4172 = vmatmul.mubr.bf16.gmra.mxu0 %v4044
        %v4173 = vpop.f32.mrf.mxu0
        %v4174 = vadd.f32 %v4073, %v4173
        %v4175 = vpop.f32.mrf.mxu0
        %v4176 = vpop.f32.mrf.mxu0
        %v4177 = vadd.f32 %v4073, %v4176
        %v4178 = vpop.f32.mrf.mxu0
        %4179 = vmatprep.mubr.bf16.mxu0 0
        %4180 = vmatmul.mubr.bf16.gmra.mxu0 %v4045
        %v4181 = vpop.f32.mrf.mxu0
        %v4182 = vadd.f32 %v4073, %v4181
        %v4183 = vpop.f32.mrf.mxu0
        %v4184 = vpop.f32.mrf.mxu0
        %v4185 = vadd.f32 %v4073, %v4184
        %v4186 = vpop.f32.mrf.mxu0
        %4187 = vmatprep.mubr.bf16.mxu0 0
        %4188 = vmatmul.mubr.bf16.gmra.mxu0 %v4046
        %v4189 = vpop.f32.mrf.mxu0
        %v4190 = vadd.f32 %v4073, %v4189
        %v4191 = vpop.f32.mrf.mxu0
        %v4192 = vpop.f32.mrf.mxu0
        %v4193 = vadd.f32 %v4073, %v4192
        %v4194 = vpop.f32.mrf.mxu0
        %4195 = vmatprep.mubr.bf16.mxu0 0
        %4196 = vmatmul.mubr.bf16.gmra.mxu0 %v4047
        %v4197 = vpop.f32.mrf.mxu0
        %v4198 = vadd.f32 %v4073, %v4197
        %v4199 = vpop.f32.mrf.mxu0
        %v4200 = vpop.f32.mrf.mxu0
        %v4201 = vadd.f32 %v4073, %v4200
        %v4202 = vpop.f32.mrf.mxu0
        %4203 = vmatprep.mubr.bf16.mxu0 0
        %4204 = vmatmul.mubr.bf16.gmra.mxu0 %v4048
        %v4205 = vpop.f32.mrf.mxu0
        %v4206 = vadd.f32 %v4073, %v4205
        %v4207 = vpop.f32.mrf.mxu0
        %v4208 = vpop.f32.mrf.mxu0
        %v4209 = vadd.f32 %v4073, %v4208
        %v4210 = vpop.f32.mrf.mxu0
        %4211 = vmatprep.mubr.bf16.mxu0 0
        %4212 = vmatmul.mubr.bf16.gmra.mxu0 %v4049
        %v4213 = vpop.f32.mrf.mxu0
        %v4214 = vadd.f32 %v4073, %v4213
        %v4215 = vpop.f32.mrf.mxu0
        %v4216 = vpop.f32.mrf.mxu0
        %v4217 = vadd.f32 %v4073, %v4216
        %v4218 = vpop.f32.mrf.mxu0
        %4219 = vdwg.mxu0
        %v4220 = vadd.f32 %v4158, %v3638
        %v4221 = vadd.f32 %v4161, %v3639
        %v4222 = vadd.f32 %v4166, %v3640
        %v4223 = vadd.f32 %v4169, %v3641
        %v4224 = vadd.f32 %v4174, %v3642
        %v4225 = vadd.f32 %v4177, %v3643
        %v4226 = vadd.f32 %v4182, %v3644
        %v4227 = vadd.f32 %v4185, %v3645
        %v4228 = vadd.f32 %v4190, %v3646
        %v4229 = vadd.f32 %v4193, %v3647
        %v4230 = vadd.f32 %v4198, %v3648
        %v4231 = vadd.f32 %v4201, %v3649
        %v4232 = vadd.f32 %v4206, %v3650
        %v4233 = vadd.f32 %v4209, %v3651
        %v4234 = vadd.f32 %v4214, %v3652
        %v4235 = vadd.f32 %v4217, %v3653
        %4236 = vadd.xlane.f32.xlu0 %v4220
        %v4237 = vpop.xlane.xlu0 %4236
        %4238 = vadd.xlane.f32.xlu0 %v4221
        %v4239 = vpop.xlane.xlu0 %4238
        %4240 = vadd.xlane.f32.xlu0 %v4222
        %v4241 = vpop.xlane.xlu0 %4240
        %4242 = vadd.xlane.f32.xlu0 %v4223
        %v4243 = vpop.xlane.xlu0 %4242
        %4244 = vadd.xlane.f32.xlu0 %v4224
        %v4245 = vpop.xlane.xlu0 %4244
        %4246 = vadd.xlane.f32.xlu0 %v4225
        %v4247 = vpop.xlane.xlu0 %4246
        %4248 = vadd.xlane.f32.xlu0 %v4226
        %v4249 = vpop.xlane.xlu0 %4248
        %4250 = vadd.xlane.f32.xlu0 %v4227
        %v4251 = vpop.xlane.xlu0 %4250
        %4252 = vadd.xlane.f32.xlu0 %v4228
        %v4253 = vpop.xlane.xlu0 %4252
        %4254 = vadd.xlane.f32.xlu0 %v4229
        %v4255 = vpop.xlane.xlu0 %4254
        %4256 = vadd.xlane.f32.xlu0 %v4230
        %v4257 = vpop.xlane.xlu0 %4256
        %4258 = vadd.xlane.f32.xlu0 %v4231
        %v4259 = vpop.xlane.xlu0 %4258
        %4260 = vadd.xlane.f32.xlu0 %v4232
        %v4261 = vpop.xlane.xlu0 %4260
        %4262 = vadd.xlane.f32.xlu0 %v4233
        %v4263 = vpop.xlane.xlu0 %4262
        %4264 = vadd.xlane.f32.xlu0 %v4234
        %v4265 = vpop.xlane.xlu0 %4264
        %4266 = vadd.xlane.f32.xlu0 %v4235
        %v4267 = vpop.xlane.xlu0 %4266
        %v4268 = vmul.f32 %v4220, %v4220
        %v4269 = vmul.f32 %v4221, %v4221
        %v4270 = vmul.f32 %v4222, %v4222
        %v4271 = vmul.f32 %v4223, %v4223
        %v4272 = vmul.f32 %v4224, %v4224
        %v4273 = vmul.f32 %v4225, %v4225
        %v4274 = vmul.f32 %v4226, %v4226
        %v4275 = vmul.f32 %v4227, %v4227
        %v4276 = vmul.f32 %v4228, %v4228
        %v4277 = vmul.f32 %v4229, %v4229
        %v4278 = vmul.f32 %v4230, %v4230
        %v4279 = vmul.f32 %v4231, %v4231
        %v4280 = vmul.f32 %v4232, %v4232
        %v4281 = vmul.f32 %v4233, %v4233
        %v4282 = vmul.f32 %v4234, %v4234
        %v4283 = vmul.f32 %v4235, %v4235
        %4284 = vadd.xlane.f32.xlu0 %v4268
        %v4285 = vpop.xlane.xlu0 %4284
        %4286 = vadd.xlane.f32.xlu0 %v4269
        %v4287 = vpop.xlane.xlu0 %4286
        %4288 = vadd.xlane.f32.xlu0 %v4270
        %v4289 = vpop.xlane.xlu0 %4288
        %4290 = vadd.xlane.f32.xlu0 %v4271
        %v4291 = vpop.xlane.xlu0 %4290
        %4292 = vadd.xlane.f32.xlu0 %v4272
        %v4293 = vpop.xlane.xlu0 %4292
        %4294 = vadd.xlane.f32.xlu0 %v4273
        %v4295 = vpop.xlane.xlu0 %4294
        %4296 = vadd.xlane.f32.xlu0 %v4274
        %v4297 = vpop.xlane.xlu0 %4296
        %4298 = vadd.xlane.f32.xlu0 %v4275
        %v4299 = vpop.xlane.xlu0 %4298
        %4300 = vadd.xlane.f32.xlu0 %v4276
        %v4301 = vpop.xlane.xlu0 %4300
        %4302 = vadd.xlane.f32.xlu0 %v4277
        %v4303 = vpop.xlane.xlu0 %4302
        %4304 = vadd.xlane.f32.xlu0 %v4278
        %v4305 = vpop.xlane.xlu0 %4304
        %4306 = vadd.xlane.f32.xlu0 %v4279
        %v4307 = vpop.xlane.xlu0 %4306
        %4308 = vadd.xlane.f32.xlu0 %v4280
        %v4309 = vpop.xlane.xlu0 %4308
        %4310 = vadd.xlane.f32.xlu0 %v4281
        %v4311 = vpop.xlane.xlu0 %4310
        %4312 = vadd.xlane.f32.xlu0 %v4282
        %v4313 = vpop.xlane.xlu0 %4312
        %4314 = vadd.xlane.f32.xlu0 %v4283
        %v4315 = vpop.xlane.xlu0 %4314
        %v4316 = vmul.f32 %v4237, 0.0078125
        %v4317 = vmul.f32 %v4239, 0.0078125
        %v4318 = vmul.f32 %v4241, 0.0078125
        %v4319 = vmul.f32 %v4243, 0.0078125
        %v4320 = vmul.f32 %v4245, 0.0078125
        %v4321 = vmul.f32 %v4247, 0.0078125
        %v4322 = vmul.f32 %v4249, 0.0078125
        %v4323 = vmul.f32 %v4251, 0.0078125
        %v4324 = vmul.f32 %v4253, 0.0078125
        %v4325 = vmul.f32 %v4255, 0.0078125
        %v4326 = vmul.f32 %v4257, 0.0078125
        %v4327 = vmul.f32 %v4259, 0.0078125
        %v4328 = vmul.f32 %v4261, 0.0078125
        %v4329 = vmul.f32 %v4263, 0.0078125
        %v4330 = vmul.f32 %v4265, 0.0078125
        %v4331 = vmul.f32 %v4267, 0.0078125
        %v4332 = vmul.f32 %v4285, 0.0078125
        %v4333 = vmul.f32 %v4287, 0.0078125
        %v4334 = vmul.f32 %v4289, 0.0078125
        %v4335 = vmul.f32 %v4291, 0.0078125
        %v4336 = vmul.f32 %v4293, 0.0078125
        %v4337 = vmul.f32 %v4295, 0.0078125
        %v4338 = vmul.f32 %v4297, 0.0078125
        %v4339 = vmul.f32 %v4299, 0.0078125
        %v4340 = vmul.f32 %v4301, 0.0078125
        %v4341 = vmul.f32 %v4303, 0.0078125
        %v4342 = vmul.f32 %v4305, 0.0078125
        %v4343 = vmul.f32 %v4307, 0.0078125
        %v4344 = vmul.f32 %v4309, 0.0078125
        %v4345 = vmul.f32 %v4311, 0.0078125
        %v4346 = vmul.f32 %v4313, 0.0078125
        %v4347 = vmul.f32 %v4315, 0.0078125
        %v4348 = vmul.f32 %v4316, %v4316
        %v4349 = vmul.f32 %v4317, %v4317
        %v4350 = vmul.f32 %v4318, %v4318
        %v4351 = vmul.f32 %v4319, %v4319
        %v4352 = vmul.f32 %v4320, %v4320
        %v4353 = vmul.f32 %v4321, %v4321
        %v4354 = vmul.f32 %v4322, %v4322
        %v4355 = vmul.f32 %v4323, %v4323
        %v4356 = vmul.f32 %v4324, %v4324
        %v4357 = vmul.f32 %v4325, %v4325
        %v4358 = vmul.f32 %v4326, %v4326
        %v4359 = vmul.f32 %v4327, %v4327
        %v4360 = vmul.f32 %v4328, %v4328
        %v4361 = vmul.f32 %v4329, %v4329
        %v4362 = vmul.f32 %v4330, %v4330
        %v4363 = vmul.f32 %v4331, %v4331
        %v4364 = vsub.f32 %v4332, %v4348
        %v4365 = vsub.f32 %v4333, %v4349
        %v4366 = vsub.f32 %v4334, %v4350
        %v4367 = vsub.f32 %v4335, %v4351
        %v4368 = vsub.f32 %v4336, %v4352
        %v4369 = vsub.f32 %v4337, %v4353
        %v4370 = vsub.f32 %v4338, %v4354
        %v4371 = vsub.f32 %v4339, %v4355
        %v4372 = vsub.f32 %v4340, %v4356
        %v4373 = vsub.f32 %v4341, %v4357
        %v4374 = vsub.f32 %v4342, %v4358
        %v4375 = vsub.f32 %v4343, %v4359
        %v4376 = vsub.f32 %v4344, %v4360
        %v4377 = vsub.f32 %v4345, %v4361
        %v4378 = vsub.f32 %v4346, %v4362
        %v4379 = vsub.f32 %v4347, %v4363
        %v4380 = vadd.f32 %v4364, 1e-05
        %v4381 = vadd.f32 %v4365, 1e-05
        %v4382 = vadd.f32 %v4366, 1e-05
        %v4383 = vadd.f32 %v4367, 1e-05
        %v4384 = vadd.f32 %v4368, 1e-05
        %v4385 = vadd.f32 %v4369, 1e-05
        %v4386 = vadd.f32 %v4370, 1e-05
        %v4387 = vadd.f32 %v4371, 1e-05
        %v4388 = vadd.f32 %v4372, 1e-05
        %v4389 = vadd.f32 %v4373, 1e-05
        %v4390 = vadd.f32 %v4374, 1e-05
        %v4391 = vadd.f32 %v4375, 1e-05
        %v4392 = vadd.f32 %v4376, 1e-05
        %v4393 = vadd.f32 %v4377, 1e-05
        %v4394 = vadd.f32 %v4378, 1e-05
        %v4395 = vadd.f32 %v4379, 1e-05
        %v4396 = vrsqrt.pop %v4380
        %v4397 = vrsqrt.pop %v4381
        %v4398 = vrsqrt.pop %v4382
        %v4399 = vrsqrt.pop %v4383
        %v4400 = vrsqrt.pop %v4384
        %v4401 = vrsqrt.pop %v4385
        %v4402 = vrsqrt.pop %v4386
        %v4403 = vrsqrt.pop %v4387
        %v4404 = vrsqrt.pop %v4388
        %v4405 = vrsqrt.pop %v4389
        %v4406 = vrsqrt.pop %v4390
        %v4407 = vrsqrt.pop %v4391
        %v4408 = vrsqrt.pop %v4392
        %v4409 = vrsqrt.pop %v4393
        %v4410 = vrsqrt.pop %v4394
        %v4411 = vrsqrt.pop %v4395
        %v4412 = vsub.f32 %v4220, %v4316
        %v4413 = vsub.f32 %v4221, %v4317
        %v4414 = vsub.f32 %v4222, %v4318
        %v4415 = vsub.f32 %v4223, %v4319
        %v4416 = vsub.f32 %v4224, %v4320
        %v4417 = vsub.f32 %v4225, %v4321
        %v4418 = vsub.f32 %v4226, %v4322
        %v4419 = vsub.f32 %v4227, %v4323
        %v4420 = vsub.f32 %v4228, %v4324
        %v4421 = vsub.f32 %v4229, %v4325
        %v4422 = vsub.f32 %v4230, %v4326
        %v4423 = vsub.f32 %v4231, %v4327
        %v4424 = vsub.f32 %v4232, %v4328
        %v4425 = vsub.f32 %v4233, %v4329
        %v4426 = vsub.f32 %v4234, %v4330
        %v4427 = vsub.f32 %v4235, %v4331
        %v4428 = vmul.f32 %v4412, %v4396
        %v4429 = vmul.f32 %v4413, %v4397
        %v4430 = vmul.f32 %v4414, %v4398
        %v4431 = vmul.f32 %v4415, %v4399
        %v4432 = vmul.f32 %v4416, %v4400
        %v4433 = vmul.f32 %v4417, %v4401
        %v4434 = vmul.f32 %v4418, %v4402
        %v4435 = vmul.f32 %v4419, %v4403
        %v4436 = vmul.f32 %v4420, %v4404
        %v4437 = vmul.f32 %v4421, %v4405
        %v4438 = vmul.f32 %v4422, %v4406
        %v4439 = vmul.f32 %v4423, %v4407
        %v4440 = vmul.f32 %v4424, %v4408
        %v4441 = vmul.f32 %v4425, %v4409
        %v4442 = vmul.f32 %v4426, %v4410
        %v4443 = vmul.f32 %v4427, %v4411
        %s4444 = scalar_lea.vmem %s3, 4
        %v4445 = vld [vmem:[%s4444] sm:$0x1]
        %v4447 = vlaneseq
        %v4448 = vshrl.u32 %v4447, 7
        %v4449 = vsub.s32 0, %v4448
        %v4450 = vrot.slane %v4445, %v4449
        %v4452 = vmul.f32 %v4428, %v4450
        %v4453 = vmul.f32 %v4429, %v4450
        %v4454 = vmul.f32 %v4430, %v4450
        %v4455 = vmul.f32 %v4431, %v4450
        %v4456 = vmul.f32 %v4432, %v4450
        %v4457 = vmul.f32 %v4433, %v4450
        %v4458 = vmul.f32 %v4434, %v4450
        %v4459 = vmul.f32 %v4435, %v4450
        %v4460 = vmul.f32 %v4436, %v4450
        %v4461 = vmul.f32 %v4437, %v4450
        %v4462 = vmul.f32 %v4438, %v4450
        %v4463 = vmul.f32 %v4439, %v4450
        %v4464 = vmul.f32 %v4440, %v4450
        %v4465 = vmul.f32 %v4441, %v4450
        %v4466 = vmul.f32 %v4442, %v4450
        %v4467 = vmul.f32 %v4443, %v4450
        %s4468 = scalar_lea.vmem [#allocation8], 4
        %v4469 = vld [vmem:[%s4468] sm:$0x1]
        %v4471 = vlaneseq
        %v4472 = vshrl.u32 %v4471, 7
        %v4473 = vsub.s32 0, %v4472
        %v4474 = vrot.slane %v4469, %v4473
        %v4476 = vadd.f32 %v4452, %v4474
        %v4477 = vadd.f32 %v4453, %v4474
        %v4478 = vadd.f32 %v4454, %v4474
        %v4479 = vadd.f32 %v4455, %v4474
        %v4480 = vadd.f32 %v4456, %v4474
        %v4481 = vadd.f32 %v4457, %v4474
        %v4482 = vadd.f32 %v4458, %v4474
        %v4483 = vadd.f32 %v4459, %v4474
        %v4484 = vadd.f32 %v4460, %v4474
        %v4485 = vadd.f32 %v4461, %v4474
        %v4486 = vadd.f32 %v4462, %v4474
        %v4487 = vadd.f32 %v4463, %v4474
        %v4488 = vadd.f32 %v4464, %v4474
        %v4489 = vadd.f32 %v4465, %v4474
        %v4490 = vadd.f32 %v4466, %v4474
        %v4491 = vadd.f32 %v4467, %v4474
        %v4492 = vpack.c.bf16 %v4477, %v4476
        %v4493 = vpack.c.bf16 %v4479, %v4478
        %v4494 = vpack.c.bf16 %v4481, %v4480
        %v4495 = vpack.c.bf16 %v4483, %v4482
        %v4496 = vpack.c.bf16 %v4485, %v4484
        %v4497 = vpack.c.bf16 %v4487, %v4486
        %v4498 = vpack.c.bf16 %v4489, %v4488
        %v4499 = vpack.c.bf16 %v4491, %v4490
        %s4500 = scalar_lea.vmem [#allocation5], 960
        %v4501 = vld [vmem:[%s4500] sm:$0xf]
        %v4502 = vld [vmem:[%s4500 + $0x4] sm:$0xf]
        %v4503 = vld [vmem:[%s4500 + $0x8] sm:$0xf]
        %v4504 = vld [vmem:[%s4500 + $0xc] sm:$0xf]
        %v4505 = vld [vmem:[%s4500 + $0x10] sm:$0xf]
        %v4506 = vld [vmem:[%s4500 + $0x14] sm:$0xf]
        %v4507 = vld [vmem:[%s4500 + $0x18] sm:$0xf]
        %v4508 = vld [vmem:[%s4500 + $0x1c] sm:$0xf]
        %v4509 = vld [vmem:[%s4500 + $0x20] sm:$0xf]
        %v4510 = vld [vmem:[%s4500 + $0x24] sm:$0xf]
        %v4511 = vld [vmem:[%s4500 + $0x28] sm:$0xf]
        %v4512 = vld [vmem:[%s4500 + $0x2c] sm:$0xf]
        %v4513 = vld [vmem:[%s4500 + $0x30] sm:$0xf]
        %v4514 = vld [vmem:[%s4500 + $0x34] sm:$0xf]
        %v4515 = vld [vmem:[%s4500 + $0x38] sm:$0xf]
        %v4516 = vld [vmem:[%s4500 + $0x3c] sm:$0xf]
        %s4517 = scalar_lea.vmem [#allocation7], 15
        %v4518 = vld [vmem:[%s4517] sm:$0x1]
        %v4520 = vlaneseq
        %v4521 = vshrl.u32 %v4520, 7
        %v4522 = vsub.s32 0, %v4521
        %v4523 = vrot.slane %v4518, %v4522
        %v4541 = vunpack.c.l.b16 %v4501
        %v4542 = vunpack.c.l.b16 %v4502
        %v4543 = vunpack.c.l.b16 %v4503
        %v4544 = vunpack.c.l.b16 %v4504
        %v4545 = vunpack.c.l.b16 %v4505
        %v4546 = vunpack.c.l.b16 %v4506
        %v4547 = vunpack.c.l.b16 %v4507
        %v4548 = vunpack.c.l.b16 %v4508
        %v4549 = vunpack.c.l.b16 %v4509
        %v4550 = vunpack.c.l.b16 %v4510
        %v4551 = vunpack.c.l.b16 %v4511
        %v4552 = vunpack.c.l.b16 %v4512
        %v4553 = vunpack.c.l.b16 %v4513
        %v4554 = vunpack.c.l.b16 %v4514
        %v4555 = vunpack.c.l.b16 %v4515
        %v4556 = vunpack.c.l.b16 %v4516
        %v4557 = vpack.c.b16 %v4542, %v4541
        %v4558 = vpack.c.b16 %v4544, %v4543
        %v4559 = vpack.c.b16 %v4546, %v4545
        %v4560 = vpack.c.b16 %v4548, %v4547
        %v4561 = vpack.c.b16 %v4550, %v4549
        %v4562 = vpack.c.b16 %v4552, %v4551
        %v4563 = vpack.c.b16 %v4554, %v4553
        %v4564 = vpack.c.b16 %v4556, %v4555
        %4573 = vmatprep.subr.bf16.mxu0 0
        %4574 = vmatpush1.bf16.msra.mxu0 %v4564
        %4575 = vmatprep.subr.bf16.mxu0 0
        %4576 = vmatpush1.bf16.msra.mxu0 %v4563
        %4577 = vmatprep.subr.bf16.mxu0 0
        %4578 = vmatpush1.bf16.msra.mxu0 %v4562
        %4579 = vmatprep.subr.bf16.mxu0 0
        %4580 = vmatpush1.bf16.msra.mxu0 %v4561
        %4581 = vmatprep.subr.bf16.mxu0 0
        %4582 = vmatpush1.bf16.msra.mxu0 %v4560
        %4583 = vmatprep.subr.bf16.mxu0 0
        %4584 = vmatpush1.bf16.msra.mxu0 %v4559
        %4585 = vmatprep.subr.bf16.mxu0 0
        %4586 = vmatpush1.bf16.msra.mxu0 %v4558
        %4587 = vmatprep.subr.bf16.mxu0 0
        %4588 = vmatpush1.bf16.msra.mxu0 %v4557
        %4589 = vmatprep.subr.bf16.mxu0 0
        %4590 = vmatpush2.bf16.msra.mxu0 0
        %4591 = vmatprep.subr.bf16.mxu0 0
        %4592 = vmatpush2.bf16.msra.mxu0 0
        %4593 = vmatprep.subr.bf16.mxu0 0
        %4594 = vmatpush2.bf16.msra.mxu0 0
        %4595 = vmatprep.subr.bf16.mxu0 0
        %4596 = vmatpush2.bf16.msra.mxu0 0
        %4597 = vmatprep.subr.bf16.mxu0 0
        %4598 = vmatpush2.bf16.msra.mxu0 0
        %4599 = vmatprep.subr.bf16.mxu0 0
        %4600 = vmatpush2.bf16.msra.mxu0 0
        %4601 = vmatprep.subr.bf16.mxu0 0
        %4602 = vmatpush2.bf16.msra.mxu0 0
        %4603 = vmatprep.subr.bf16.mxu0 0
        %4604 = vmatpush2.bf16.msra.mxu0 0
        %4605 = vmatprep.mubr.bf16.mxu0 0
        %4606 = vmatmul.mubr.bf16.gmra.mxu0 %v4492
        %v4607 = vpop.f32.mrf.mxu0
        %v4608 = vadd.f32 %v4523, %v4607
        %v4609 = vpop.f32.mrf.mxu0
        %v4610 = vpop.f32.mrf.mxu0
        %v4611 = vadd.f32 %v4523, %v4610
        %v4612 = vpop.f32.mrf.mxu0
        %4613 = vmatprep.mubr.bf16.mxu0 0
        %4614 = vmatmul.mubr.bf16.gmra.mxu0 %v4493
        %v4615 = vpop.f32.mrf.mxu0
        %v4616 = vadd.f32 %v4523, %v4615
        %v4617 = vpop.f32.mrf.mxu0
        %v4618 = vpop.f32.mrf.mxu0
        %v4619 = vadd.f32 %v4523, %v4618
        %v4620 = vpop.f32.mrf.mxu0
        %4621 = vmatprep.mubr.bf16.mxu0 0
        %4622 = vmatmul.mubr.bf16.gmra.mxu0 %v4494
        %v4623 = vpop.f32.mrf.mxu0
        %v4624 = vadd.f32 %v4523, %v4623
        %v4625 = vpop.f32.mrf.mxu0
        %v4626 = vpop.f32.mrf.mxu0
        %v4627 = vadd.f32 %v4523, %v4626
        %v4628 = vpop.f32.mrf.mxu0
        %4629 = vmatprep.mubr.bf16.mxu0 0
        %4630 = vmatmul.mubr.bf16.gmra.mxu0 %v4495
        %v4631 = vpop.f32.mrf.mxu0
        %v4632 = vadd.f32 %v4523, %v4631
        %v4633 = vpop.f32.mrf.mxu0
        %v4634 = vpop.f32.mrf.mxu0
        %v4635 = vadd.f32 %v4523, %v4634
        %v4636 = vpop.f32.mrf.mxu0
        %4637 = vmatprep.mubr.bf16.mxu0 0
        %4638 = vmatmul.mubr.bf16.gmra.mxu0 %v4496
        %v4639 = vpop.f32.mrf.mxu0
        %v4640 = vadd.f32 %v4523, %v4639
        %v4641 = vpop.f32.mrf.mxu0
        %v4642 = vpop.f32.mrf.mxu0
        %v4643 = vadd.f32 %v4523, %v4642
        %v4644 = vpop.f32.mrf.mxu0
        %4645 = vmatprep.mubr.bf16.mxu0 0
        %4646 = vmatmul.mubr.bf16.gmra.mxu0 %v4497
        %v4647 = vpop.f32.mrf.mxu0
        %v4648 = vadd.f32 %v4523, %v4647
        %v4649 = vpop.f32.mrf.mxu0
        %v4650 = vpop.f32.mrf.mxu0
        %v4651 = vadd.f32 %v4523, %v4650
        %v4652 = vpop.f32.mrf.mxu0
        %4653 = vmatprep.mubr.bf16.mxu0 0
        %4654 = vmatmul.mubr.bf16.gmra.mxu0 %v4498
        %v4655 = vpop.f32.mrf.mxu0
        %v4656 = vadd.f32 %v4523, %v4655
        %v4657 = vpop.f32.mrf.mxu0
        %v4658 = vpop.f32.mrf.mxu0
        %v4659 = vadd.f32 %v4523, %v4658
        %v4660 = vpop.f32.mrf.mxu0
        %4661 = vmatprep.mubr.bf16.mxu0 0
        %4662 = vmatmul.mubr.bf16.gmra.mxu0 %v4499
        %v4663 = vpop.f32.mrf.mxu0
        %v4664 = vadd.f32 %v4523, %v4663
        %v4665 = vpop.f32.mrf.mxu0
        %v4666 = vpop.f32.mrf.mxu0
        %v4667 = vadd.f32 %v4523, %v4666
        %v4668 = vpop.f32.mrf.mxu0
        %4669 = vdwg.mxu0
        %v4670 = vmax.f32 %v4608, 0.0
        %v4671 = vmax.f32 %v4611, 0.0
        %v4672 = vmax.f32 %v4616, 0.0
        %v4673 = vmax.f32 %v4619, 0.0
        %v4674 = vmax.f32 %v4624, 0.0
        %v4675 = vmax.f32 %v4627, 0.0
        %v4676 = vmax.f32 %v4632, 0.0
        %v4677 = vmax.f32 %v4635, 0.0
        %v4678 = vmax.f32 %v4640, 0.0
        %v4679 = vmax.f32 %v4643, 0.0
        %v4680 = vmax.f32 %v4648, 0.0
        %v4681 = vmax.f32 %v4651, 0.0
        %v4682 = vmax.f32 %v4656, 0.0
        %v4683 = vmax.f32 %v4659, 0.0
        %v4684 = vmax.f32 %v4664, 0.0
        %v4685 = vmax.f32 %v4667, 0.0
        %v4686 = vpack.c.bf16 %v4671, %v4670
        %v4687 = vpack.c.bf16 %v4673, %v4672
        %v4688 = vpack.c.bf16 %v4675, %v4674
        %v4689 = vpack.c.bf16 %v4677, %v4676
        %v4690 = vpack.c.bf16 %v4679, %v4678
        %v4691 = vpack.c.bf16 %v4681, %v4680
        %v4692 = vpack.c.bf16 %v4683, %v4682
        %v4693 = vpack.c.bf16 %v4685, %v4684
        %s4694 = scalar_lea.vmem [#allocation5], 1024
        %v4695 = vld [vmem:[%s4694] sm:$0xf]
        %v4696 = vld [vmem:[%s4694 + $0x4] sm:$0xf]
        %v4697 = vld [vmem:[%s4694 + $0x8] sm:$0xf]
        %v4698 = vld [vmem:[%s4694 + $0xc] sm:$0xf]
        %v4699 = vld [vmem:[%s4694 + $0x10] sm:$0xf]
        %v4700 = vld [vmem:[%s4694 + $0x14] sm:$0xf]
        %v4701 = vld [vmem:[%s4694 + $0x18] sm:$0xf]
        %v4702 = vld [vmem:[%s4694 + $0x1c] sm:$0xf]
        %v4703 = vld [vmem:[%s4694 + $0x20] sm:$0xf]
        %v4704 = vld [vmem:[%s4694 + $0x24] sm:$0xf]
        %v4705 = vld [vmem:[%s4694 + $0x28] sm:$0xf]
        %v4706 = vld [vmem:[%s4694 + $0x2c] sm:$0xf]
        %v4707 = vld [vmem:[%s4694 + $0x30] sm:$0xf]
        %v4708 = vld [vmem:[%s4694 + $0x34] sm:$0xf]
        %v4709 = vld [vmem:[%s4694 + $0x38] sm:$0xf]
        %v4710 = vld [vmem:[%s4694 + $0x3c] sm:$0xf]
        %s4711 = scalar_lea.vmem [#allocation7], 16
        %v4712 = vld [vmem:[%s4711] sm:$0x1]
        %v4714 = vlaneseq
        %v4715 = vshrl.u32 %v4714, 7
        %v4716 = vsub.s32 0, %v4715
        %v4717 = vrot.slane %v4712, %v4716
        %v4735 = vunpack.c.l.b16 %v4695
        %v4736 = vunpack.c.l.b16 %v4696
        %v4737 = vunpack.c.l.b16 %v4697
        %v4738 = vunpack.c.l.b16 %v4698
        %v4739 = vunpack.c.l.b16 %v4699
        %v4740 = vunpack.c.l.b16 %v4700
        %v4741 = vunpack.c.l.b16 %v4701
        %v4742 = vunpack.c.l.b16 %v4702
        %v4743 = vunpack.c.l.b16 %v4703
        %v4744 = vunpack.c.l.b16 %v4704
        %v4745 = vunpack.c.l.b16 %v4705
        %v4746 = vunpack.c.l.b16 %v4706
        %v4747 = vunpack.c.l.b16 %v4707
        %v4748 = vunpack.c.l.b16 %v4708
        %v4749 = vunpack.c.l.b16 %v4709
        %v4750 = vunpack.c.l.b16 %v4710
        %v4751 = vpack.c.b16 %v4736, %v4735
        %v4752 = vpack.c.b16 %v4738, %v4737
        %v4753 = vpack.c.b16 %v4740, %v4739
        %v4754 = vpack.c.b16 %v4742, %v4741
        %v4755 = vpack.c.b16 %v4744, %v4743
        %v4756 = vpack.c.b16 %v4746, %v4745
        %v4757 = vpack.c.b16 %v4748, %v4747
        %v4758 = vpack.c.b16 %v4750, %v4749
        %4767 = vmatprep.subr.bf16.mxu0 0
        %4768 = vmatpush1.bf16.msra.mxu0 %v4758
        %4769 = vmatprep.subr.bf16.mxu0 0
        %4770 = vmatpush1.bf16.msra.mxu0 %v4757
        %4771 = vmatprep.subr.bf16.mxu0 0
        %4772 = vmatpush1.bf16.msra.mxu0 %v4756
        %4773 = vmatprep.subr.bf16.mxu0 0
        %4774 = vmatpush1.bf16.msra.mxu0 %v4755
        %4775 = vmatprep.subr.bf16.mxu0 0
        %4776 = vmatpush1.bf16.msra.mxu0 %v4754
        %4777 = vmatprep.subr.bf16.mxu0 0
        %4778 = vmatpush1.bf16.msra.mxu0 %v4753
        %4779 = vmatprep.subr.bf16.mxu0 0
        %4780 = vmatpush1.bf16.msra.mxu0 %v4752
        %4781 = vmatprep.subr.bf16.mxu0 0
        %4782 = vmatpush1.bf16.msra.mxu0 %v4751
        %4783 = vmatprep.subr.bf16.mxu0 0
        %4784 = vmatpush2.bf16.msra.mxu0 0
        %4785 = vmatprep.subr.bf16.mxu0 0
        %4786 = vmatpush2.bf16.msra.mxu0 0
        %4787 = vmatprep.subr.bf16.mxu0 0
        %4788 = vmatpush2.bf16.msra.mxu0 0
        %4789 = vmatprep.subr.bf16.mxu0 0
        %4790 = vmatpush2.bf16.msra.mxu0 0
        %4791 = vmatprep.subr.bf16.mxu0 0
        %4792 = vmatpush2.bf16.msra.mxu0 0
        %4793 = vmatprep.subr.bf16.mxu0 0
        %4794 = vmatpush2.bf16.msra.mxu0 0
        %4795 = vmatprep.subr.bf16.mxu0 0
        %4796 = vmatpush2.bf16.msra.mxu0 0
        %4797 = vmatprep.subr.bf16.mxu0 0
        %4798 = vmatpush2.bf16.msra.mxu0 0
        %4799 = vmatprep.mubr.bf16.mxu0 0
        %4800 = vmatmul.mubr.bf16.gmra.mxu0 %v4686
        %v4801 = vpop.f32.mrf.mxu0
        %v4802 = vadd.f32 %v4717, %v4801
        %v4803 = vpop.f32.mrf.mxu0
        %v4804 = vpop.f32.mrf.mxu0
        %v4805 = vadd.f32 %v4717, %v4804
        %v4806 = vpop.f32.mrf.mxu0
        %4807 = vmatprep.mubr.bf16.mxu0 0
        %4808 = vmatmul.mubr.bf16.gmra.mxu0 %v4687
        %v4809 = vpop.f32.mrf.mxu0
        %v4810 = vadd.f32 %v4717, %v4809
        %v4811 = vpop.f32.mrf.mxu0
        %v4812 = vpop.f32.mrf.mxu0
        %v4813 = vadd.f32 %v4717, %v4812
        %v4814 = vpop.f32.mrf.mxu0
        %4815 = vmatprep.mubr.bf16.mxu0 0
        %4816 = vmatmul.mubr.bf16.gmra.mxu0 %v4688
        %v4817 = vpop.f32.mrf.mxu0
        %v4818 = vadd.f32 %v4717, %v4817
        %v4819 = vpop.f32.mrf.mxu0
        %v4820 = vpop.f32.mrf.mxu0
        %v4821 = vadd.f32 %v4717, %v4820
        %v4822 = vpop.f32.mrf.mxu0
        %4823 = vmatprep.mubr.bf16.mxu0 0
        %4824 = vmatmul.mubr.bf16.gmra.mxu0 %v4689
        %v4825 = vpop.f32.mrf.mxu0
        %v4826 = vadd.f32 %v4717, %v4825
        %v4827 = vpop.f32.mrf.mxu0
        %v4828 = vpop.f32.mrf.mxu0
        %v4829 = vadd.f32 %v4717, %v4828
        %v4830 = vpop.f32.mrf.mxu0
        %4831 = vmatprep.mubr.bf16.mxu0 0
        %4832 = vmatmul.mubr.bf16.gmra.mxu0 %v4690
        %v4833 = vpop.f32.mrf.mxu0
        %v4834 = vadd.f32 %v4717, %v4833
        %v4835 = vpop.f32.mrf.mxu0
        %v4836 = vpop.f32.mrf.mxu0
        %v4837 = vadd.f32 %v4717, %v4836
        %v4838 = vpop.f32.mrf.mxu0
        %4839 = vmatprep.mubr.bf16.mxu0 0
        %4840 = vmatmul.mubr.bf16.gmra.mxu0 %v4691
        %v4841 = vpop.f32.mrf.mxu0
        %v4842 = vadd.f32 %v4717, %v4841
        %v4843 = vpop.f32.mrf.mxu0
        %v4844 = vpop.f32.mrf.mxu0
        %v4845 = vadd.f32 %v4717, %v4844
        %v4846 = vpop.f32.mrf.mxu0
        %4847 = vmatprep.mubr.bf16.mxu0 0
        %4848 = vmatmul.mubr.bf16.gmra.mxu0 %v4692
        %v4849 = vpop.f32.mrf.mxu0
        %v4850 = vadd.f32 %v4717, %v4849
        %v4851 = vpop.f32.mrf.mxu0
        %v4852 = vpop.f32.mrf.mxu0
        %v4853 = vadd.f32 %v4717, %v4852
        %v4854 = vpop.f32.mrf.mxu0
        %4855 = vmatprep.mubr.bf16.mxu0 0
        %4856 = vmatmul.mubr.bf16.gmra.mxu0 %v4693
        %v4857 = vpop.f32.mrf.mxu0
        %v4858 = vadd.f32 %v4717, %v4857
        %v4859 = vpop.f32.mrf.mxu0
        %v4860 = vpop.f32.mrf.mxu0
        %v4861 = vadd.f32 %v4717, %v4860
        %v4862 = vpop.f32.mrf.mxu0
        %4863 = vdwg.mxu0
        %v4864 = vmax.f32 %v4802, 0.0
        %v4865 = vmax.f32 %v4805, 0.0
        %v4866 = vmax.f32 %v4810, 0.0
        %v4867 = vmax.f32 %v4813, 0.0
        %v4868 = vmax.f32 %v4818, 0.0
        %v4869 = vmax.f32 %v4821, 0.0
        %v4870 = vmax.f32 %v4826, 0.0
        %v4871 = vmax.f32 %v4829, 0.0
        %v4872 = vmax.f32 %v4834, 0.0
        %v4873 = vmax.f32 %v4837, 0.0
        %v4874 = vmax.f32 %v4842, 0.0
        %v4875 = vmax.f32 %v4845, 0.0
        %v4876 = vmax.f32 %v4850, 0.0
        %v4877 = vmax.f32 %v4853, 0.0
        %v4878 = vmax.f32 %v4858, 0.0
        %v4879 = vmax.f32 %v4861, 0.0
        %v4880 = vpack.c.bf16 %v4865, %v4864
        %v4881 = vpack.c.bf16 %v4867, %v4866
        %v4882 = vpack.c.bf16 %v4869, %v4868
        %v4883 = vpack.c.bf16 %v4871, %v4870
        %v4884 = vpack.c.bf16 %v4873, %v4872
        %v4885 = vpack.c.bf16 %v4875, %v4874
        %v4886 = vpack.c.bf16 %v4877, %v4876
        %v4887 = vpack.c.bf16 %v4879, %v4878
        %s4888 = scalar_lea.vmem [#allocation5], 1088
        %v4889 = vld [vmem:[%s4888] sm:$0xf]
        %v4890 = vld [vmem:[%s4888 + $0x4] sm:$0xf]
        %v4891 = vld [vmem:[%s4888 + $0x8] sm:$0xf]
        %v4892 = vld [vmem:[%s4888 + $0xc] sm:$0xf]
        %v4893 = vld [vmem:[%s4888 + $0x10] sm:$0xf]
        %v4894 = vld [vmem:[%s4888 + $0x14] sm:$0xf]
        %v4895 = vld [vmem:[%s4888 + $0x18] sm:$0xf]
        %v4896 = vld [vmem:[%s4888 + $0x1c] sm:$0xf]
        %v4897 = vld [vmem:[%s4888 + $0x20] sm:$0xf]
        %v4898 = vld [vmem:[%s4888 + $0x24] sm:$0xf]
        %v4899 = vld [vmem:[%s4888 + $0x28] sm:$0xf]
        %v4900 = vld [vmem:[%s4888 + $0x2c] sm:$0xf]
        %v4901 = vld [vmem:[%s4888 + $0x30] sm:$0xf]
        %v4902 = vld [vmem:[%s4888 + $0x34] sm:$0xf]
        %v4903 = vld [vmem:[%s4888 + $0x38] sm:$0xf]
        %v4904 = vld [vmem:[%s4888 + $0x3c] sm:$0xf]
        %s4905 = scalar_lea.vmem [#allocation7], 17
        %v4906 = vld [vmem:[%s4905] sm:$0x1]
        %v4908 = vlaneseq
        %v4909 = vshrl.u32 %v4908, 7
        %v4910 = vsub.s32 0, %v4909
        %v4911 = vrot.slane %v4906, %v4910
        %v4929 = vunpack.c.l.b16 %v4889
        %v4930 = vunpack.c.l.b16 %v4890
        %v4931 = vunpack.c.l.b16 %v4891
        %v4932 = vunpack.c.l.b16 %v4892
        %v4933 = vunpack.c.l.b16 %v4893
        %v4934 = vunpack.c.l.b16 %v4894
        %v4935 = vunpack.c.l.b16 %v4895
        %v4936 = vunpack.c.l.b16 %v4896
        %v4937 = vunpack.c.l.b16 %v4897
        %v4938 = vunpack.c.l.b16 %v4898
        %v4939 = vunpack.c.l.b16 %v4899
        %v4940 = vunpack.c.l.b16 %v4900
        %v4941 = vunpack.c.l.b16 %v4901
        %v4942 = vunpack.c.l.b16 %v4902
        %v4943 = vunpack.c.l.b16 %v4903
        %v4944 = vunpack.c.l.b16 %v4904
        %v4945 = vpack.c.b16 %v4930, %v4929
        %v4946 = vpack.c.b16 %v4932, %v4931
        %v4947 = vpack.c.b16 %v4934, %v4933
        %v4948 = vpack.c.b16 %v4936, %v4935
        %v4949 = vpack.c.b16 %v4938, %v4937
        %v4950 = vpack.c.b16 %v4940, %v4939
        %v4951 = vpack.c.b16 %v4942, %v4941
        %v4952 = vpack.c.b16 %v4944, %v4943
        %4961 = vmatprep.subr.bf16.mxu0 0
        %4962 = vmatpush1.bf16.msra.mxu0 %v4952
        %4963 = vmatprep.subr.bf16.mxu0 0
        %4964 = vmatpush1.bf16.msra.mxu0 %v4951
        %4965 = vmatprep.subr.bf16.mxu0 0
        %4966 = vmatpush1.bf16.msra.mxu0 %v4950
        %4967 = vmatprep.subr.bf16.mxu0 0
        %4968 = vmatpush1.bf16.msra.mxu0 %v4949
        %4969 = vmatprep.subr.bf16.mxu0 0
        %4970 = vmatpush1.bf16.msra.mxu0 %v4948
        %4971 = vmatprep.subr.bf16.mxu0 0
        %4972 = vmatpush1.bf16.msra.mxu0 %v4947
        %4973 = vmatprep.subr.bf16.mxu0 0
        %4974 = vmatpush1.bf16.msra.mxu0 %v4946
        %4975 = vmatprep.subr.bf16.mxu0 0
        %4976 = vmatpush1.bf16.msra.mxu0 %v4945
        %4977 = vmatprep.subr.bf16.mxu0 0
        %4978 = vmatpush2.bf16.msra.mxu0 0
        %4979 = vmatprep.subr.bf16.mxu0 0
        %4980 = vmatpush2.bf16.msra.mxu0 0
        %4981 = vmatprep.subr.bf16.mxu0 0
        %4982 = vmatpush2.bf16.msra.mxu0 0
        %4983 = vmatprep.subr.bf16.mxu0 0
        %4984 = vmatpush2.bf16.msra.mxu0 0
        %4985 = vmatprep.subr.bf16.mxu0 0
        %4986 = vmatpush2.bf16.msra.mxu0 0
        %4987 = vmatprep.subr.bf16.mxu0 0
        %4988 = vmatpush2.bf16.msra.mxu0 0
        %4989 = vmatprep.subr.bf16.mxu0 0
        %4990 = vmatpush2.bf16.msra.mxu0 0
        %4991 = vmatprep.subr.bf16.mxu0 0
        %4992 = vmatpush2.bf16.msra.mxu0 0
        %4993 = vmatprep.mubr.bf16.mxu0 0
        %4994 = vmatmul.mubr.bf16.gmra.mxu0 %v4880
        %v4995 = vpop.f32.mrf.mxu0
        %v4996 = vadd.f32 %v4911, %v4995
        %v4997 = vpop.f32.mrf.mxu0
        %v4998 = vpop.f32.mrf.mxu0
        %v4999 = vadd.f32 %v4911, %v4998
        %v5000 = vpop.f32.mrf.mxu0
        %5001 = vmatprep.mubr.bf16.mxu0 0
        %5002 = vmatmul.mubr.bf16.gmra.mxu0 %v4881
        %v5003 = vpop.f32.mrf.mxu0
        %v5004 = vadd.f32 %v4911, %v5003
        %v5005 = vpop.f32.mrf.mxu0
        %v5006 = vpop.f32.mrf.mxu0
        %v5007 = vadd.f32 %v4911, %v5006
        %v5008 = vpop.f32.mrf.mxu0
        %5009 = vmatprep.mubr.bf16.mxu0 0
        %5010 = vmatmul.mubr.bf16.gmra.mxu0 %v4882
        %v5011 = vpop.f32.mrf.mxu0
        %v5012 = vadd.f32 %v4911, %v5011
        %v5013 = vpop.f32.mrf.mxu0
        %v5014 = vpop.f32.mrf.mxu0
        %v5015 = vadd.f32 %v4911, %v5014
        %v5016 = vpop.f32.mrf.mxu0
        %5017 = vmatprep.mubr.bf16.mxu0 0
        %5018 = vmatmul.mubr.bf16.gmra.mxu0 %v4883
        %v5019 = vpop.f32.mrf.mxu0
        %v5020 = vadd.f32 %v4911, %v5019
        %v5021 = vpop.f32.mrf.mxu0
        %v5022 = vpop.f32.mrf.mxu0
        %v5023 = vadd.f32 %v4911, %v5022
        %v5024 = vpop.f32.mrf.mxu0
        %5025 = vmatprep.mubr.bf16.mxu0 0
        %5026 = vmatmul.mubr.bf16.gmra.mxu0 %v4884
        %v5027 = vpop.f32.mrf.mxu0
        %v5028 = vadd.f32 %v4911, %v5027
        %v5029 = vpop.f32.mrf.mxu0
        %v5030 = vpop.f32.mrf.mxu0
        %v5031 = vadd.f32 %v4911, %v5030
        %v5032 = vpop.f32.mrf.mxu0
        %5033 = vmatprep.mubr.bf16.mxu0 0
        %5034 = vmatmul.mubr.bf16.gmra.mxu0 %v4885
        %v5035 = vpop.f32.mrf.mxu0
        %v5036 = vadd.f32 %v4911, %v5035
        %v5037 = vpop.f32.mrf.mxu0
        %v5038 = vpop.f32.mrf.mxu0
        %v5039 = vadd.f32 %v4911, %v5038
        %v5040 = vpop.f32.mrf.mxu0
        %5041 = vmatprep.mubr.bf16.mxu0 0
        %5042 = vmatmul.mubr.bf16.gmra.mxu0 %v4886
        %v5043 = vpop.f32.mrf.mxu0
        %v5044 = vadd.f32 %v4911, %v5043
        %v5045 = vpop.f32.mrf.mxu0
        %v5046 = vpop.f32.mrf.mxu0
        %v5047 = vadd.f32 %v4911, %v5046
        %v5048 = vpop.f32.mrf.mxu0
        %5049 = vmatprep.mubr.bf16.mxu0 0
        %5050 = vmatmul.mubr.bf16.gmra.mxu0 %v4887
        %v5051 = vpop.f32.mrf.mxu0
        %v5052 = vadd.f32 %v4911, %v5051
        %v5053 = vpop.f32.mrf.mxu0
        %v5054 = vpop.f32.mrf.mxu0
        %v5055 = vadd.f32 %v4911, %v5054
        %v5056 = vpop.f32.mrf.mxu0
        %5057 = vdwg.mxu0
        %v5058 = vadd.f32 %v4996, %v4476
        %v5059 = vadd.f32 %v4999, %v4477
        %v5060 = vadd.f32 %v5004, %v4478
        %v5061 = vadd.f32 %v5007, %v4479
        %v5062 = vadd.f32 %v5012, %v4480
        %v5063 = vadd.f32 %v5015, %v4481
        %v5064 = vadd.f32 %v5020, %v4482
        %v5065 = vadd.f32 %v5023, %v4483
        %v5066 = vadd.f32 %v5028, %v4484
        %v5067 = vadd.f32 %v5031, %v4485
        %v5068 = vadd.f32 %v5036, %v4486
        %v5069 = vadd.f32 %v5039, %v4487
        %v5070 = vadd.f32 %v5044, %v4488
        %v5071 = vadd.f32 %v5047, %v4489
        %v5072 = vadd.f32 %v5052, %v4490
        %v5073 = vadd.f32 %v5055, %v4491
        %5074 = vst [vmem:[%s286] sm:$0xff] %v5058
        %5075 = vst [vmem:[%s286 + $0x8] sm:$0xff] %v5059
        %5076 = vst [vmem:[%s286 + $0x10] sm:$0xff] %v5060
        %5077 = vst [vmem:[%s286 + $0x18] sm:$0xff] %v5061
        %5078 = vst [vmem:[%s286 + $0x20] sm:$0xff] %v5062
        %5079 = vst [vmem:[%s286 + $0x28] sm:$0xff] %v5063
        %5080 = vst [vmem:[%s286 + $0x30] sm:$0xff] %v5064
        %5081 = vst [vmem:[%s286 + $0x38] sm:$0xff] %v5065
        %5082 = vst [vmem:[%s286 + $0x40] sm:$0xff] %v5066
        %5083 = vst [vmem:[%s286 + $0x48] sm:$0xff] %v5067
        %5084 = vst [vmem:[%s286 + $0x50] sm:$0xff] %v5068
        %5085 = vst [vmem:[%s286 + $0x58] sm:$0xff] %v5069
        %5086 = vst [vmem:[%s286 + $0x60] sm:$0xff] %v5070
        %5087 = vst [vmem:[%s286 + $0x68] sm:$0xff] %v5071
        %5088 = vst [vmem:[%s286 + $0x70] sm:$0xff] %v5072
        %5089 = vst [vmem:[%s286 + $0x78] sm:$0xff] %v5073
        %s5090 = sand.u32 %s142, 1
        %s5091 = scalar_lea.sflag [#allocation4], %s5090
        %s5092 = sand.u32 %s142, 1
        %s5093 = smul.addr %s5092, 128
        %s5094 = scalar_lea.vmem [#allocation10], %s5093
        // Predicated region
        $region57: #{qlora_bignet_forward.1} parent=39 // pred_check
          %p5095 = pneg %p152
        $region58: #{qlora_bignet_forward.1} parent=39 // pred_check_branch
          %5097 = sbr.rel (%p5095) target = $region60
        $region59: #{qlora_bignet_forward.1} parent=39 // pred_region
          %s5098 = smul.u32 16, %s24
          %s5100 = ssub.s32 2048, 2048
          %5101 = vsyncadd %s5091, %s5100
          %s5102 = smul.addr %s5098, 128
          %s5103 = scalar_lea.hbm %s5, %s5102
          %s5104 = sshll.u32 %s5094, 4
          %s5105 = int_to_ptr.vmem [resolvable:$true] %s5104
          %5110 = dma.vmem_to_hbm [thread:$0]  %s5105, 2048, %s5103, %s5091, 128, 128, 8
        $region60: #{qlora_bignet_forward.1} parent=39 // pred_fallthru
          _
      $region40: #{qlora_bignet_forward.1} parent=5 // pred_fallthru
        _
      %p5111 = scmp.le.s32.totalorder 2, %s19
      // Predicated region
      $region61: #{qlora_bignet_forward.1} parent=5 // pred_check
        %p5112 = pneg %p5111
      $region62: #{qlora_bignet_forward.1} parent=5 // pred_check_branch
        %5114 = sbr.rel (%p5112) target = $region64
      $region63: #{qlora_bignet_forward.1} parent=5 // pred_region
        %s5115 = ssub.s32 %s19, 2
        // Predicated region
        $region65: #{qlora_bignet_forward.1} parent=63 // pred_check
          %p5116 = pneg %p158
        $region66: #{qlora_bignet_forward.1} parent=63 // pred_check_branch
          %5118 = sbr.rel (%p5116) target = $region68
        $region67: #{qlora_bignet_forward.1} parent=63 // pred_region
          %s5119 = sand.u32 %s143, 1
          %s5120 = scalar_lea.sflag [#allocation4], %s5119
          %s5121 = sand.u32 %s143, 1
          %s5122 = smul.addr %s5121, 128
          %s5123 = scalar_lea.vmem [#allocation10], %s5122
          %5124 = dma.done %s5120, 2048
        $region68: #{qlora_bignet_forward.1} parent=63 // pred_fallthru
          _
      $region64: #{qlora_bignet_forward.1} parent=5 // pred_fallthru
        _
    $region6: #{qlora_bignet_forward.1} parent=1 // loop_footer
      %s23 = sadd.s32 1, %s19
    $region7: #{qlora_bignet_forward.1} parent=1 // loop_footer_branch
      %18 = sbr.rel target = $region3
    $region8: #{qlora_bignet_forward.1} parent=1 // loop_exit
      _
    %5125 = vsyncpa [#allocation3], 1
    %s5126 = scalar_lea.sflag [#allocation3], 1
    %5127 = vsyncpa %s5126, 1
    %5128 = vsyncpa [#allocation6], 1
    %5129 = vsyncpa [#allocation9], 1
    %5130 = vsyncpa [#allocation4], 1
    %s5131 = scalar_lea.sflag [#allocation4], 1
    %5132 = vsyncpa %s5131, 1

</llo_original>
